<compile_context>
chip_gen: v5e
topology: v5e:2x2
jax: 0.10.0
libtpu: 0.0.40
codegen_flags: <defaults>
</compile_context>

<pallas_src>
import math

import jax
import jax.numpy as jnp
from jax.experimental import pallas as pl
from jax.experimental.pallas import tpu as pltpu

_SQRT_HALF = 1.0 / math.sqrt(2.0)


def _round_up(x, m):
    return (x + m - 1) // m * m


def _cdiv(a, b):
    return (a + b - 1) // b


def _gelu_exact(x):
    # Exact GELU (matches torch.nn.GELU default, approximate='none'):
    #   gelu(x) = 0.5 * x * (1 + erf(x / sqrt(2)))
    return 0.5 * x * (1.0 + jax.lax.erf(x * _SQRT_HALF))


def _fc_kernel(x_ref, w_ref, b_ref, o_ref, acc_ref):
    # x_ref: (tm, tk)  w_ref: (tk, tn)  b_ref: (1, tn) f32  o_ref: (tm, tn)
    # acc_ref: (tm, tn) f32 scratch, resident across the K grid axis.
    k = pl.program_id(2)

    @pl.when(k == 0)
    def _():
        # Fold the bias into the accumulator init (saves an epilogue add).
        acc_ref[...] = jnp.broadcast_to(
            b_ref[...].astype(jnp.float32), acc_ref.shape
        )

    acc_ref[...] += jnp.dot(
        x_ref[...], w_ref[...], preferred_element_type=jnp.float32
    )

    @pl.when(k == pl.num_programs(2) - 1)
    def _():
        o_ref[...] = _gelu_exact(acc_ref[...]).astype(o_ref.dtype)


def fc_forward(x, weight_t, bias, *, tm=512, tn=1024, tk=512,
               compute_dtype=jnp.bfloat16, out_dtype=None):
    """x: (..., in_size); weight_t: (in_size, out_size); bias: (out_size,)."""
    orig_shape = x.shape
    K = orig_shape[-1]
    N = weight_t.shape[1]
    out_dtype = out_dtype if out_dtype is not None else x.dtype
    x2d = x.reshape(-1, K)
    M = x2d.shape[0]

    # Small-shape fallback: sub-tile problems are faster in fused XLA than
    # paying padding + pallas_call pipeline overhead.
    if M < 128 or N < 128 or K < 128:
        acc = jnp.dot(x2d.astype(compute_dtype), weight_t.astype(compute_dtype),
                      preferred_element_type=jnp.float32)
        acc = acc + bias.astype(jnp.float32)
        out = _gelu_exact(acc).astype(out_dtype)
        return out.reshape(*orig_shape[:-1], N)

    # Shrink tiles for small problems, keeping everything 128-aligned so the
    # last two block dims stay lane/sublane friendly.
    tm_eff = min(tm, _round_up(M, 128))
    tn_eff = min(tn, _round_up(N, 128))
    tk_eff = min(tk, _round_up(K, 128))

    # Megacore (v7x): keep at least 2 blocks across the parallel M/N axes when
    # the problem allows it, so both TensorCores get work.
    if _cdiv(M, tm_eff) * _cdiv(N, tn_eff) == 1:
        if tn_eff >= 256:
            tn_eff = _round_up(tn_eff // 2, 128)
        elif tm_eff >= 256:
            tm_eff = _round_up(tm_eff // 2, 128)

    Mp = _round_up(M, tm_eff)
    Kp = _round_up(K, tk_eff)
    Np = _round_up(N, tn_eff)

    # Cast once to the MXU-friendly compute dtype; pad only the dims that are
    # actually unaligned (zero padding is exact for matmul + bias and the
    # padded rows/cols are sliced off below).
    x_c = x2d.astype(compute_dtype)
    w_c = weight_t.astype(compute_dtype)
    b_c = bias.reshape(1, N).astype(jnp.float32)
    if (Mp, Kp) != (M, K):
        x_c = jnp.pad(x_c, ((0, Mp - M), (0, Kp - K)))
    if (Kp, Np) != (K, N):
        w_c = jnp.pad(w_c, ((0, Kp - K), (0, Np - N)))
    if Np != N:
        b_c = jnp.pad(b_c, ((0, 0), (0, Np - N)))

    grid = (Mp // tm_eff, Np // tn_eff, Kp // tk_eff)

    cbytes = jnp.dtype(compute_dtype).itemsize
    obytes = jnp.dtype(out_dtype).itemsize
    # Double-buffered x/w/out tiles + f32 accumulator + bias block.
    vmem_est = (2 * (tm_eff * tk_eff + tk_eff * tn_eff) * cbytes
                + 2 * tm_eff * tn_eff * obytes
                + tm_eff * tn_eff * 4
                + 2 * tn_eff * 4)
    vmem_limit = None
    if vmem_est > 32 * 1024 * 1024:
        # Raise the scoped limit, but stay under v7x's 64 MiB physical VMEM.
        vmem_limit = min(int(vmem_est * 1.25), 60 * 1024 * 1024)

    cost = pl.CostEstimate(
        flops=2 * Mp * Np * Kp,
        transcendentals=Mp * Np,
        bytes_accessed=(Mp * Kp + Kp * Np) * cbytes + Mp * Np * obytes,
    )

    out_p = pl.pallas_call(
        _fc_kernel,
        out_shape=jax.ShapeDtypeStruct((Mp, Np), out_dtype),
        grid_spec=pltpu.PrefetchScalarGridSpec(
            num_scalar_prefetch=0,
            grid=grid,
            in_specs=[
                pl.BlockSpec((tm_eff, tk_eff), lambda i, j, k: (i, k)),
                pl.BlockSpec((tk_eff, tn_eff), lambda i, j, k: (k, j)),
                pl.BlockSpec((1, tn_eff), lambda i, j, k: (0, j)),
            ],
            out_specs=pl.BlockSpec((tm_eff, tn_eff), lambda i, j, k: (i, j)),
            scratch_shapes=[pltpu.VMEM((tm_eff, tn_eff), jnp.float32)],
        ),
        compiler_params=pltpu.CompilerParams(
            dimension_semantics=("parallel", "parallel", "arbitrary"),
            vmem_limit_bytes=vmem_limit,
        ),
        cost_estimate=cost,
    )(x_c, w_c, b_c)

    out2d = out_p[:M, :N]
    return out2d.reshape(*orig_shape[:-1], N)


def init_fc_params(key, in_size, out_size, dtype=jnp.float32):
    """Deterministic init mimicking nn.Linear (uniform +/- 1/sqrt(in_size))."""
    kw, kb = jax.random.split(key)
    bound = 1.0 / math.sqrt(in_size)
    # Stored directly as (in_size, out_size) == transpose of PyTorch layout.
    weight_t = jax.random.uniform(kw, (in_size, out_size), dtype,
                                  minval=-bound, maxval=bound)
    bias = jax.random.uniform(kb, (out_size,), dtype,
                              minval=-bound, maxval=bound)
    return weight_t, bias


def _reference(x, weight_t, bias):
    # Same numerics as the kernel: bf16 operands, f32 accumulation, exact GELU.
    K = x.shape[-1]
    N = weight_t.shape[1]
    acc = jnp.dot(x.reshape(-1, K).astype(jnp.bfloat16),
                  weight_t.astype(jnp.bfloat16),
                  preferred_element_type=jnp.float32)
    acc = acc + bias.astype(jnp.float32)
    out = _gelu_exact(acc).astype(x.dtype)
    return out.reshape(*x.shape[:-1], N)


if __name__ == "__main__":
    key = jax.random.PRNGKey(0)
    k_x, k_p, k_xs, k_ps = jax.random.split(key, 4)

    # Main check: exercises the Pallas path (M=256, K=256, N=512).
    batch, seq, in_size, out_size = 2, 128, 256, 512
    x = jax.random.normal(k_x, (batch, seq, in_size), dtype=jnp.float32)
    weight_t, bias = init_fc_params(k_p, in_size, out_size)

    out = fc_forward(x, weight_t, bias)
    out = jax.block_until_ready(out)

    ref = _reference(x, weight_t, bias)
    assert out.shape == (batch, seq, out_size)
    assert jnp.allclose(out, ref, atol=2e-3, rtol=2e-3), float(
        jnp.max(jnp.abs(out - ref)))

    # Small-shape fallback path (sub-tile dims -> plain XLA).
    xs = jax.random.normal(k_xs, (2, 8, 32), dtype=jnp.float32)
    ws, bs = init_fc_params(k_ps, 32, 64)
    outs = jax.block_until_ready(fc_forward(xs, ws, bs))
    refs = _reference(xs, ws, bs)
    assert outs.shape == (2, 8, 64)
    assert jnp.allclose(outs, refs, atol=2e-3, rtol=2e-3)

    print("KERNEL_OK")
</pallas_src>

<mosaic_0001>
module attributes {stable_mosaic.version = 11 : i64} {
  func.func @_fc_kernel(%arg0: i32, %arg1: i32, %arg2: i32, %arg3: memref<256x256xbf16, #tpu.memory_space<vmem>>, %arg4: memref<256x256xbf16, #tpu.memory_space<vmem>>, %arg5: memref<1x256xf32, #tpu.memory_space<vmem>>, %arg6: memref<256x256xf32, #tpu.memory_space<vmem>>, %arg7: memref<256x256xf32, #tpu.memory_space<vmem>>) attributes {dimension_semantics = [#tpu.dimension_semantics<parallel>, #tpu.dimension_semantics<parallel>, #tpu.dimension_semantics<arbitrary>], iteration_bounds = array<i64: 1, 2, 1>, scalar_prefetch = 0 : i64, scratch_operands = 1 : i64, tpu.core_type = #tpu.core_type<tc>, window_params = [{transform_indices = @transform_0, window_bounds = array<i64: 256, 256>}, {transform_indices = @transform_1, window_bounds = array<i64: 256, 256>}, {transform_indices = @transform_2, window_bounds = array<i64: 1, 256>}, {transform_indices = @transform_3, window_bounds = array<i64: 256, 256>}]} {
    %c0_i32 = arith.constant 0 : i32
    %0 = arith.cmpi eq, %arg2, %c0_i32 : i32
    %1 = arith.extui %0 : i1 to i32
    %c0_i32_0 = arith.constant 0 : i32
    %2 = arith.cmpi ne, %1, %c0_i32_0 : i32
    scf.if %2 {
      %c0_10 = arith.constant 0 : index
      %c0_11 = arith.constant 0 : index
      %12 = vector.load %arg5[%c0_10, %c0_11] : memref<1x256xf32, #tpu.memory_space<vmem>>, vector<1x256xf32>
      %13 = vector.shape_cast %12 : vector<1x256xf32> to vector<1x256xf32>
      %14 = vector.broadcast %13 : vector<1x256xf32> to vector<256x256xf32>
      %c0_12 = arith.constant 0 : index
      %c0_13 = arith.constant 0 : index
      %15 = vector.load %arg7[%c0_12, %c0_13] : memref<256x256xf32, #tpu.memory_space<vmem>>, vector<256x256xf32>
      tpu.vector_store %arg7[%c0_12, %c0_13], %14 {strides = array<i32>} : memref<256x256xf32, #tpu.memory_space<vmem>>, vector<256x256xf32>,
    } else {
    }
    %c0 = arith.constant 0 : index
    %c0_1 = arith.constant 0 : index
    %3 = vector.load %arg7[%c0, %c0_1] : memref<256x256xf32, #tpu.memory_space<vmem>>, vector<256x256xf32>
    %c0_2 = arith.constant 0 : index
    %c0_3 = arith.constant 0 : index
    %4 = vector.load %arg3[%c0_2, %c0_3] : memref<256x256xbf16, #tpu.memory_space<vmem>>, vector<256x256xbf16>
    %c0_4 = arith.constant 0 : index
    %c0_5 = arith.constant 0 : index
    %5 = vector.load %arg4[%c0_4, %c0_5] : memref<256x256xbf16, #tpu.memory_space<vmem>>, vector<256x256xbf16>
    %cst = arith.constant dense<0.000000e+00> : vector<256x256xf32>
    %6 = tpu.matmul %4, %5, %cst {dimension_numbers = #tpu.dot_dimension_numbers<[1], [0], [0], [1], [0, 0, 1, 1], [], []>} : vector<256x256xbf16>, vector<256x256xbf16>, vector<256x256xf32> -> vector<256x256xf32>
    %7 = arith.addf %3, %6 : vector<256x256xf32>
    %c0_6 = arith.constant 0 : index
    %c0_7 = arith.constant 0 : index
    %8 = vector.load %arg7[%c0_6, %c0_7] : memref<256x256xf32, #tpu.memory_space<vmem>>, vector<256x256xf32>
    tpu.vector_store %arg7[%c0_6, %c0_7], %7 {strides = array<i32>} : memref<256x256xf32, #tpu.memory_space<vmem>>, vector<256x256xf32>,
    %c0_i32_8 = arith.constant 0 : i32
    %9 = arith.cmpi eq, %arg2, %c0_i32_8 : i32
    %10 = arith.extui %9 : i1 to i32
    %c0_i32_9 = arith.constant 0 : i32
    %11 = arith.cmpi ne, %10, %c0_i32_9 : i32
    scf.if %11 {
      %c0_10 = arith.constant 0 : index
      %c0_11 = arith.constant 0 : index
      %12 = vector.load %arg7[%c0_10, %c0_11] : memref<256x256xf32, #tpu.memory_space<vmem>>, vector<256x256xf32>
      %cst_12 = arith.constant 5.000000e-01 : f32
      %13 = vector.broadcast %cst_12 : f32 to vector<256x256xf32>
      %14 = arith.mulf %13, %12 : vector<256x256xf32>
      %cst_13 = arith.constant 0.707106769 : f32
      %15 = vector.broadcast %cst_13 : f32 to vector<256x256xf32>
      %16 = arith.mulf %12, %15 : vector<256x256xf32>
      %17 = math.erf %16 : vector<256x256xf32>
      %cst_14 = arith.constant 1.000000e+00 : f32
      %18 = vector.broadcast %cst_14 : f32 to vector<256x256xf32>
      %19 = arith.addf %18, %17 : vector<256x256xf32>
      %20 = arith.mulf %14, %19 : vector<256x256xf32>
      %c0_15 = arith.constant 0 : index
      %c0_16 = arith.constant 0 : index
      %21 = vector.load %arg6[%c0_15, %c0_16] : memref<256x256xf32, #tpu.memory_space<vmem>>, vector<256x256xf32>
      tpu.vector_store %arg6[%c0_15, %c0_16], %20 {strides = array<i32>} : memref<256x256xf32, #tpu.memory_space<vmem>>, vector<256x256xf32>,
    } else {
    }
    return
  }
  func.func @transform_0(%arg0: i32, %arg1: i32, %arg2: i32) -> (i32, i32) {
    %c0_i32 = arith.constant 0 : i32
    return %arg0, %arg2 : i32, i32
  }
  func.func @transform_1(%arg0: i32, %arg1: i32, %arg2: i32) -> (i32, i32) {
    %c0_i32 = arith.constant 0 : i32
    return %arg2, %arg1 : i32, i32
  }
  func.func @transform_2(%arg0: i32, %arg1: i32, %arg2: i32) -> (i32, i32) {
    %c0_i32 = arith.constant 0 : i32
    %c0_i32_0 = arith.constant 0 : i32
    return %c0_i32, %arg1 : i32, i32
  }
  func.func @transform_3(%arg0: i32, %arg1: i32, %arg2: i32) -> (i32, i32) {
    %c0_i32 = arith.constant 0 : i32
    return %arg0, %arg1 : i32, i32
  }
}

</mosaic_0001>

<llo_original>
// kernel: tpu_custom_call.1
$region0: #{tpu_custom_call.1}
  #allocation0 [shape = 'u32[]', space=smem, size = 0x4, offset = 0x4, fixed_abs, tag = 'smem constant byte address 0x4 - core index']
  #allocation1 [shape = 'u32[72,128]{1,0:T(1,128)}', space=vmem, size = 0x9000, scoped, tag = 'internal scratch']
  #allocation2 [shape = 'f32[256,256]{1,0:T(8,128)}', space=vmem, size = 0x40000, scoped, tag = 'scratch operand']
  %s0 = inlined_call_operand.hbm [shape: bf16[256,256], index: 0, kind: input, shape index: {}]
  %s1 = inlined_call_operand.hbm [shape: bf16[256,512], index: 1, kind: input, shape index: {}]
  %s2 = inlined_call_operand.hbm [shape: f32[1,512], index: 2, kind: input, shape index: {}]
  %s3 = inlined_call_operand.hbm [shape: f32[256,512], index: 3, kind: output, shape index: {}]
  %s4 = sld [smem:[#allocation0]]
  $region65: #{tpu_custom_call.1} parent=0
    _
  %s6 = ssub.s32 1, %s4
  %s7 = scalar_select 0, %s6, %s4
  $region1: #{tpu_custom_call.1} parent=0
    #allocation3 [shape = 'u8[131072]{0}', space=vmem, size = 0x20000, scoped, tag = 'input window, operand 0, single buffered']
    #allocation4 [shape = 's32[2]{0}', space=sflag, size = 0x8, scoped, tag = 'scoped memory for tpu_custom_call.1']
    #allocation5 [shape = 's32[2]{0}', space=sflag, size = 0x8, scoped, tag = 'scoped memory for tpu_custom_call.1']
    #allocation6 [shape = 'u8[262144]{0}', space=vmem, size = 0x40000, scoped, tag = 'input window, operand 1']
    #allocation7 [shape = 's32[2]{0}', space=sflag, size = 0x8, scoped, tag = 'scoped memory for tpu_custom_call.1']
    #allocation8 [shape = 'u8[2048]{0}', space=vmem, size = 0x800, scoped, tag = 'input window, operand 2']
    #allocation9 [shape = 'u8[524288]{0}', space=vmem, size = 0x80000, scoped, tag = 'output window, operand 0']
    %8 = vsyncpa [#allocation4], 0
    %9 = vsyncpa [#allocation7], 0
    %s10 = scalar_lea.sflag [#allocation7], 1
    %11 = vsyncpa %s10, 0
    %12 = vsyncpa [#allocation5], 0
    %s13 = scalar_lea.sflag [#allocation5], 1
    %14 = vsyncpa %s13, 0
    loop: start=0, step=1, limit=4
    $region2: #{tpu_custom_call.1} parent=1 // loop_pre_header
      _
    $region3: #{tpu_custom_call.1} parent=1 // loop_header
      %s16 = sphi 0, %s20
      %p17 = scmp.ge.s32.totalorder %s16, 4
      %s23 = sphi 0, %s42
      %s24 = sphi 0, %s38
      %s25 = sphi 0, %s34
      %s26 = sphi 0, %s23
      %s27 = sphi 0, %s24
      %s28 = sphi 0, %s25
      %s29 = sphi 0, %s26
      %s30 = sphi 0, %s27
      %s31 = sphi 0, %s28
      %s47 = sphi 0, %s49
      %s50 = sphi 0, %s47
      %s51 = sphi 0, %s50
      %s67 = sphi 0, %s51
      %s75 = sphi 0, %s77
      %s78 = sphi 0, %s75
      %s79 = sphi 0, %s78
      %s95 = sphi 0, %s79
      %s101 = sphi 0, %s103
      %s104 = sphi 0, %s101
      %s105 = sphi 0, %s104
      %s121 = sphi 0, %s105
      %s129 = sphi 0, %s131
      %s132 = sphi 0, %s129
      %s133 = sphi 0, %s132
      %s149 = sphi 0, %s133
    $region4: #{tpu_custom_call.1} parent=1 // loop_header_branch
      %19 = sbr.rel (%p17) target = $region8
    $region5: #{tpu_custom_call.1} parent=1 // loop_body
      %s21 = ssub.s32 %s16, 1
      %s22 = ssub.s32 %s16, 2
      %s32 = sadd.s32 1, %s25
      %p33 = scmp.ge.s32.totalorder %s32, 1
      %s34 = scalar_select %p33, 0, %s32
      %s35 = sadd.s32 1, %s24
      %s36 = scalar_select %p33, %s35, %s24
      %p37 = scmp.ge.s32.totalorder %s36, 2
      %s38 = scalar_select %p37, 0, %s36
      %s39 = sadd.s32 1, %s23
      %s40 = scalar_select %p37, %s39, %s23
      %p41 = scmp.ge.s32.totalorder %s40, 1
      %s42 = scalar_select %p41, 0, %s40
      %s43 = ssub.s32 %s23, %s42
      %s44 = ssub.s32 %s25, %s34
      %s45 = sor.u32 %s43, %s44
      %p46 = scmp.eq.s32.totalorder %s45, 0
      %s48 = sadd.s32 %s47, 1
      %s49 = scalar_select %p46, %s47, %s48
      %p52 = pneg %p46
      %p53 = scmp.eq.s32.totalorder %s16, 1
      %p54 = por %p52, %p53
      %p55 = scmp.ne.s32.totalorder %s47, %s50
      %p56 = scmp.eq.s32.totalorder %s16, 0
      %p57 = por %p55, %p56
      %p58 = scmp.ne.s32.totalorder %s47, %s50
      %p59 = scmp.eq.s32.totalorder %s21, 1
      %p60 = por %p58, %p59
      %p61 = scmp.ne.s32.totalorder %s50, %s51
      %p62 = scmp.eq.s32.totalorder %s21, 0
      %p63 = por %p61, %p62
      %p64 = scmp.ne.s32.totalorder %s50, %s51
      %p65 = scmp.eq.s32.totalorder %s22, 1
      %p66 = por %p64, %p65
      %p68 = scmp.ne.s32.totalorder %s51, %s67
      %p69 = scmp.eq.s32.totalorder %s22, 0
      %p70 = por %p68, %p69
      %s71 = ssub.s32 %s25, %s34
      %s72 = ssub.s32 %s24, %s38
      %s73 = sor.u32 %s71, %s72
      %p74 = scmp.eq.s32.totalorder %s73, 0
      %s76 = sadd.s32 %s75, 1
      %s77 = scalar_select %p74, %s75, %s76
      %p80 = pneg %p74
      %p81 = scmp.eq.s32.totalorder %s16, 1
      %p82 = por %p80, %p81
      %p83 = scmp.ne.s32.totalorder %s75, %s78
      %p84 = scmp.eq.s32.totalorder %s16, 0
      %p85 = por %p83, %p84
      %p86 = scmp.ne.s32.totalorder %s75, %s78
      %p87 = scmp.eq.s32.totalorder %s21, 1
      %p88 = por %p86, %p87
      %p89 = scmp.ne.s32.totalorder %s78, %s79
      %p90 = scmp.eq.s32.totalorder %s21, 0
      %p91 = por %p89, %p90
      %p92 = scmp.ne.s32.totalorder %s78, %s79
      %p93 = scmp.eq.s32.totalorder %s22, 1
      %p94 = por %p92, %p93
      %p96 = scmp.ne.s32.totalorder %s79, %s95
      %p97 = scmp.eq.s32.totalorder %s22, 0
      %p98 = por %p96, %p97
      %s99 = ssub.s32 %s24, %s38
      %p100 = scmp.eq.s32.totalorder %s99, 0
      %s102 = sadd.s32 %s101, 1
      %s103 = scalar_select %p100, %s101, %s102
      %p106 = pneg %p100
      %p107 = scmp.eq.s32.totalorder %s16, 1
      %p108 = por %p106, %p107
      %p109 = scmp.ne.s32.totalorder %s101, %s104
      %p110 = scmp.eq.s32.totalorder %s16, 0
      %p111 = por %p109, %p110
      %p112 = scmp.ne.s32.totalorder %s101, %s104
      %p113 = scmp.eq.s32.totalorder %s21, 1
      %p114 = por %p112, %p113
      %p115 = scmp.ne.s32.totalorder %s104, %s105
      %p116 = scmp.eq.s32.totalorder %s21, 0
      %p117 = por %p115, %p116
      %p118 = scmp.ne.s32.totalorder %s104, %s105
      %p119 = scmp.eq.s32.totalorder %s22, 1
      %p120 = por %p118, %p119
      %p122 = scmp.ne.s32.totalorder %s105, %s121
      %p123 = scmp.eq.s32.totalorder %s22, 0
      %p124 = por %p122, %p123
      %s125 = ssub.s32 %s23, %s42
      %s126 = ssub.s32 %s24, %s38
      %s127 = sor.u32 %s125, %s126
      %p128 = scmp.eq.s32.totalorder %s127, 0
      %s130 = sadd.s32 %s129, 1
      %s131 = scalar_select %p128, %s129, %s130
      %p134 = pneg %p128
      %p135 = scmp.eq.s32.totalorder %s16, 1
      %p136 = por %p134, %p135
      %p137 = scmp.ne.s32.totalorder %s129, %s132
      %p138 = scmp.eq.s32.totalorder %s16, 0
      %p139 = por %p137, %p138
      %p140 = scmp.ne.s32.totalorder %s129, %s132
      %p141 = scmp.eq.s32.totalorder %s21, 1
      %p142 = por %p140, %p141
      %p143 = scmp.ne.s32.totalorder %s132, %s133
      %p144 = scmp.eq.s32.totalorder %s21, 0
      %p145 = por %p143, %p144
      %p146 = scmp.ne.s32.totalorder %s132, %s133
      %p147 = scmp.eq.s32.totalorder %s22, 1
      %p148 = por %p146, %p147
      %p150 = scmp.ne.s32.totalorder %s133, %s149
      %p151 = scmp.eq.s32.totalorder %s22, 0
      %p152 = por %p150, %p151
      %p153 = scmp.le.s32.totalorder 1, %s16
      %p154 = scmp.lt.s32.totalorder %s16, 3
      %p155 = pnand %p153, %p154
      %p156 = pneg %p155
      // Predicated region
      $region9: #{tpu_custom_call.1} parent=5 // pred_check
        _
      $region10: #{tpu_custom_call.1} parent=5 // pred_check_branch
        %158 = sbr.rel (%p155) target = $region12
      $region11: #{tpu_custom_call.1} parent=5 // pred_region
        %s159 = ssub.s32 %s16, 1
        // Predicated region
        $region13: #{tpu_custom_call.1} parent=11 // pred_check
          %p160 = pneg %p63
        $region14: #{tpu_custom_call.1} parent=11 // pred_check_branch
          %162 = sbr.rel (%p160) target = $region16
        $region15: #{tpu_custom_call.1} parent=11 // pred_region
          %s163 = smul.u32 32, %s26
          %s164 = smul.u32 2, %s28
          %166 = vsyncadd [#allocation4], 0
          %s167 = smul.addr %s163, 2
          %s168 = sadd.s32 %s164, %s167
          %s169 = smul.addr %s168, 4
          %s170 = scalar_lea.hbm %s0, %s169
          %s171 = sshll.u32 %s170, 4
          %s172 = int_to_ptr.hbm [resolvable:$true] %s171
          %s173 = sshll.u32 [#allocation3], 4
          %s174 = int_to_ptr.vmem [resolvable:$true] %s173
          %179 = dma.hbm_to_vmem [thread:$0]  %s172, 4096, %s174, [#allocation4], 128, 128, 8
        $region16: #{tpu_custom_call.1} parent=11 // pred_fallthru
          _
      $region12: #{tpu_custom_call.1} parent=5 // pred_fallthru
        _
      %p180 = scmp.lt.s32.totalorder %s16, 2
      // Predicated region
      $region17: #{tpu_custom_call.1} parent=5 // pred_check
        %p181 = pneg %p180
      $region18: #{tpu_custom_call.1} parent=5 // pred_check_branch
        %183 = sbr.rel (%p181) target = $region20
      $region19: #{tpu_custom_call.1} parent=5 // pred_region
        // Predicated region
        $region21: #{tpu_custom_call.1} parent=19 // pred_check
          %p184 = pneg %p85
        $region22: #{tpu_custom_call.1} parent=19 // pred_check_branch
          %186 = sbr.rel (%p184) target = $region24
        $region23: #{tpu_custom_call.1} parent=19 // pred_region
          %s187 = sand.u32 %s16, 1
          %s188 = scalar_lea.sflag [#allocation7], %s187
          %s189 = sand.u32 %s75, 1
          %s190 = smul.addr %s189, 256
          %s191 = scalar_lea.vmem [#allocation6], %s190
          %s192 = smul.u32 32, %s25
          %s193 = smul.u32 2, %s24
          %195 = vsyncadd %s188, 0
          %s196 = smul.addr %s192, 4
          %s197 = sadd.s32 %s193, %s196
          %s198 = smul.addr %s197, 4
          %s199 = scalar_lea.hbm %s1, %s198
          %s200 = sshll.u32 %s199, 4
          %s201 = int_to_ptr.hbm [resolvable:$true] %s200
          %s202 = sshll.u32 %s191, 4
          %s203 = int_to_ptr.vmem [resolvable:$true] %s202
          %208 = dma.hbm_to_vmem [thread:$0]  %s201, 4096, %s203, %s188, 256, 128, 8
        $region24: #{tpu_custom_call.1} parent=19 // pred_fallthru
          _
        // Predicated region
        $region25: #{tpu_custom_call.1} parent=19 // pred_check
          %p209 = pneg %p111
        $region26: #{tpu_custom_call.1} parent=19 // pred_check_branch
          %211 = sbr.rel (%p209) target = $region28
        $region27: #{tpu_custom_call.1} parent=19 // pred_region
          %s212 = sand.u32 %s16, 1
          %s213 = scalar_lea.sflag [#allocation7], %s212
          %s214 = sand.u32 %s101, 1
          %s215 = smul.addr %s214, 2
          %s216 = scalar_lea.vmem [#allocation8], %s215
          %s217 = smul.u32 2, %s24
          %219 = vsyncadd %s213, 0
          %s220 = scalar_lea.hbm %s2, %s217
          %s222 = sshll.u32 %s220, 4
          %s223 = int_to_ptr.hbm [resolvable:$true] %s222
          %s224 = sshll.u32 %s216, 4
          %s225 = int_to_ptr.vmem [resolvable:$true] %s224
          %227 = dma.hbm_to_vmem [thread:$0]  %s223, 32, %s225, %s213
        $region28: #{tpu_custom_call.1} parent=19 // pred_fallthru
          _
      $region20: #{tpu_custom_call.1} parent=5 // pred_fallthru
        _
      %p228 = scmp.le.s32.totalorder 1, %s16
      %p229 = scmp.lt.s32.totalorder %s16, 3
      %p230 = pnand %p228, %p229
      %p231 = pneg %p230
      // Predicated region
      $region29: #{tpu_custom_call.1} parent=5 // pred_check
        _
      $region30: #{tpu_custom_call.1} parent=5 // pred_check_branch
        %233 = sbr.rel (%p230) target = $region32
      $region31: #{tpu_custom_call.1} parent=5 // pred_region
        %s234 = ssub.s32 %s16, 1
        // Predicated region
        $region33: #{tpu_custom_call.1} parent=31 // pred_check
          %p235 = pneg %p63
        $region34: #{tpu_custom_call.1} parent=31 // pred_check_branch
          %237 = sbr.rel (%p235) target = $region36
        $region35: #{tpu_custom_call.1} parent=31 // pred_region
          %239 = dma.done [#allocation4], 4096
        $region36: #{tpu_custom_call.1} parent=31 // pred_fallthru
          _
        %s240 = sand.u32 %s21, 1
        %s241 = scalar_lea.sflag [#allocation7], %s240
        %s242 = sand.u32 %s78, 1
        %s243 = smul.addr %s242, 256
        %s244 = scalar_lea.vmem [#allocation6], %s243
        // Predicated region
        $region37: #{tpu_custom_call.1} parent=31 // pred_check
          %p245 = pneg %p91
        $region38: #{tpu_custom_call.1} parent=31 // pred_check_branch
          %247 = sbr.rel (%p245) target = $region40
        $region39: #{tpu_custom_call.1} parent=31 // pred_region
          %249 = dma.done %s241, 4096
        $region40: #{tpu_custom_call.1} parent=31 // pred_fallthru
          _
        %s250 = sand.u32 %s21, 1
        %s251 = scalar_lea.sflag [#allocation7], %s250
        %s252 = sand.u32 %s104, 1
        %s253 = smul.addr %s252, 2
        %s254 = scalar_lea.vmem [#allocation8], %s253
        // Predicated region
        $region41: #{tpu_custom_call.1} parent=31 // pred_check
          %p255 = pneg %p117
        $region42: #{tpu_custom_call.1} parent=31 // pred_check_branch
          %257 = sbr.rel (%p255) target = $region44
        $region43: #{tpu_custom_call.1} parent=31 // pred_region
          %259 = dma.done %s251, 32
        $region44: #{tpu_custom_call.1} parent=31 // pred_fallthru
          _
        %p260 = pneg %p63
        %p261 = pneg %p60
        %s262 = sand.u32 %s21, 1
        %s263 = scalar_lea.sflag [#allocation7], %s262
        %s264 = sand.u32 %s78, 1
        %s265 = smul.addr %s264, 256
        %s266 = scalar_lea.vmem [#allocation6], %s265
        %p267 = pneg %p91
        %p268 = pneg %p88
        %s269 = sand.u32 %s21, 1
        %s270 = scalar_lea.sflag [#allocation7], %s269
        %s271 = sand.u32 %s104, 1
        %s272 = smul.addr %s271, 2
        %s273 = scalar_lea.vmem [#allocation8], %s272
        %p274 = pneg %p117
        %p275 = pneg %p114
        %p276 = pneg %p145
        %p277 = pneg %p142
        %s278 = sand.u32 %s132, 1
        %s279 = scalar_lea.sflag [#allocation5], %s278
        %s280 = sand.u32 %s132, 1
        %s281 = smul.addr %s280, 512
        %s282 = scalar_lea.vmem [#allocation9], %s281
        %s283 = smul.u32 32, %s26
        %s284 = smul.u32 2, %s28
        %s285 = smul.u32 32, %s28
        %s286 = smul.u32 2, %s27
        %s287 = smul.u32 2, %s27
        %s288 = smul.u32 32, %s26
        %s289 = smul.u32 2, %s27
        %p290 = scmp.eq.s32.totalorder %s28, 0
        // Predicated region
        $region45: #{tpu_custom_call.1} parent=31 // pred_check
          %p291 = pneg %p290
        $region46: #{tpu_custom_call.1} parent=31 // pred_check_branch
          %293 = sbr.rel (%p291) target = $region48
        $region47: #{tpu_custom_call.1} parent=31 // pred_region
          %v294 = vld [vmem:[%s254] sm:$0x3]
          %v296 = vperm.slane %v294, 0
          %v297 = vperm.slane %v294, 1
          %300 = vst [vmem:[#allocation2] sm:$0xff] %v296
          %301 = vst [vmem:[#allocation2 + $0x8] sm:$0xff] %v297
          %302 = vst [vmem:[#allocation2 + $0x10] sm:$0xff] %v296
          %303 = vst [vmem:[#allocation2 + $0x18] sm:$0xff] %v297
          %304 = vst [vmem:[#allocation2 + $0x20] sm:$0xff] %v296
          %305 = vst [vmem:[#allocation2 + $0x28] sm:$0xff] %v297
          %306 = vst [vmem:[#allocation2 + $0x30] sm:$0xff] %v296
          %307 = vst [vmem:[#allocation2 + $0x38] sm:$0xff] %v297
          %308 = vst [vmem:[#allocation2 + $0x40] sm:$0xff] %v296
          %309 = vst [vmem:[#allocation2 + $0x48] sm:$0xff] %v297
          %310 = vst [vmem:[#allocation2 + $0x50] sm:$0xff] %v296
          %311 = vst [vmem:[#allocation2 + $0x58] sm:$0xff] %v297
          %312 = vst [vmem:[#allocation2 + $0x60] sm:$0xff] %v296
          %313 = vst [vmem:[#allocation2 + $0x68] sm:$0xff] %v297
          %314 = vst [vmem:[#allocation2 + $0x70] sm:$0xff] %v296
          %315 = vst [vmem:[#allocation2 + $0x78] sm:$0xff] %v297
          %316 = vst [vmem:[#allocation2 + $0x80] sm:$0xff] %v296
          %317 = vst [vmem:[#allocation2 + $0x88] sm:$0xff] %v297
          %318 = vst [vmem:[#allocation2 + $0x90] sm:$0xff] %v296
          %319 = vst [vmem:[#allocation2 + $0x98] sm:$0xff] %v297
          %320 = vst [vmem:[#allocation2 + $0xa0] sm:$0xff] %v296
          %321 = vst [vmem:[#allocation2 + $0xa8] sm:$0xff] %v297
          %322 = vst [vmem:[#allocation2 + $0xb0] sm:$0xff] %v296
          %323 = vst [vmem:[#allocation2 + $0xb8] sm:$0xff] %v297
          %324 = vst [vmem:[#allocation2 + $0xc0] sm:$0xff] %v296
          %325 = vst [vmem:[#allocation2 + $0xc8] sm:$0xff] %v297
          %326 = vst [vmem:[#allocation2 + $0xd0] sm:$0xff] %v296
          %327 = vst [vmem:[#allocation2 + $0xd8] sm:$0xff] %v297
          %328 = vst [vmem:[#allocation2 + $0xe0] sm:$0xff] %v296
          %329 = vst [vmem:[#allocation2 + $0xe8] sm:$0xff] %v297
          %330 = vst [vmem:[#allocation2 + $0xf0] sm:$0xff] %v296
          %331 = vst [vmem:[#allocation2 + $0xf8] sm:$0xff] %v297
          %332 = vst [vmem:[#allocation2 + $0x100] sm:$0xff] %v296
          %333 = vst [vmem:[#allocation2 + $0x108] sm:$0xff] %v297
          %334 = vst [vmem:[#allocation2 + $0x110] sm:$0xff] %v296
          %335 = vst [vmem:[#allocation2 + $0x118] sm:$0xff] %v297
          %336 = vst [vmem:[#allocation2 + $0x120] sm:$0xff] %v296
          %337 = vst [vmem:[#allocation2 + $0x128] sm:$0xff] %v297
          %338 = vst [vmem:[#allocation2 + $0x130] sm:$0xff] %v296
          %339 = vst [vmem:[#allocation2 + $0x138] sm:$0xff] %v297
          %340 = vst [vmem:[#allocation2 + $0x140] sm:$0xff] %v296
          %341 = vst [vmem:[#allocation2 + $0x148] sm:$0xff] %v297
          %342 = vst [vmem:[#allocation2 + $0x150] sm:$0xff] %v296
          %343 = vst [vmem:[#allocation2 + $0x158] sm:$0xff] %v297
          %344 = vst [vmem:[#allocation2 + $0x160] sm:$0xff] %v296
          %345 = vst [vmem:[#allocation2 + $0x168] sm:$0xff] %v297
          %346 = vst [vmem:[#allocation2 + $0x170] sm:$0xff] %v296
          %347 = vst [vmem:[#allocation2 + $0x178] sm:$0xff] %v297
          %348 = vst [vmem:[#allocation2 + $0x180] sm:$0xff] %v296
          %349 = vst [vmem:[#allocation2 + $0x188] sm:$0xff] %v297
          %350 = vst [vmem:[#allocation2 + $0x190] sm:$0xff] %v296
          %351 = vst [vmem:[#allocation2 + $0x198] sm:$0xff] %v297
          %352 = vst [vmem:[#allocation2 + $0x1a0] sm:$0xff] %v296
          %353 = vst [vmem:[#allocation2 + $0x1a8] sm:$0xff] %v297
          %354 = vst [vmem:[#allocation2 + $0x1b0] sm:$0xff] %v296
          %355 = vst [vmem:[#allocation2 + $0x1b8] sm:$0xff] %v297
          %356 = vst [vmem:[#allocation2 + $0x1c0] sm:$0xff] %v296
          %357 = vst [vmem:[#allocation2 + $0x1c8] sm:$0xff] %v297
          %358 = vst [vmem:[#allocation2 + $0x1d0] sm:$0xff] %v296
          %359 = vst [vmem:[#allocation2 + $0x1d8] sm:$0xff] %v297
          %360 = vst [vmem:[#allocation2 + $0x1e0] sm:$0xff] %v296
          %361 = vst [vmem:[#allocation2 + $0x1e8] sm:$0xff] %v297
          %362 = vst [vmem:[#allocation2 + $0x1f0] sm:$0xff] %v296
          %363 = vst [vmem:[#allocation2 + $0x1f8] sm:$0xff] %v297
        $region48: #{tpu_custom_call.1} parent=31 // pred_fallthru
          _
        %v364 = vld [vmem:[#allocation2] sm:$0xff]
        %v365 = vld [vmem:[#allocation2 + $0x8] sm:$0xff]
        %v366 = vld [vmem:[#allocation2 + $0x10] sm:$0xff]
        %v367 = vld [vmem:[#allocation2 + $0x18] sm:$0xff]
        %v368 = vld [vmem:[#allocation2 + $0x20] sm:$0xff]
        %v369 = vld [vmem:[#allocation2 + $0x28] sm:$0xff]
        %v370 = vld [vmem:[#allocation2 + $0x30] sm:$0xff]
        %v371 = vld [vmem:[#allocation2 + $0x38] sm:$0xff]
        %v372 = vld [vmem:[#allocation2 + $0x40] sm:$0xff]
        %v373 = vld [vmem:[#allocation2 + $0x48] sm:$0xff]
        %v374 = vld [vmem:[#allocation2 + $0x50] sm:$0xff]
        %v375 = vld [vmem:[#allocation2 + $0x58] sm:$0xff]
        %v376 = vld [vmem:[#allocation2 + $0x60] sm:$0xff]
        %v377 = vld [vmem:[#allocation2 + $0x68] sm:$0xff]
        %v378 = vld [vmem:[#allocation2 + $0x70] sm:$0xff]
        %v379 = vld [vmem:[#allocation2 + $0x78] sm:$0xff]
        %v380 = vld [vmem:[#allocation2 + $0x80] sm:$0xff]
        %v381 = vld [vmem:[#allocation2 + $0x88] sm:$0xff]
        %v382 = vld [vmem:[#allocation2 + $0x90] sm:$0xff]
        %v383 = vld [vmem:[#allocation2 + $0x98] sm:$0xff]
        %v384 = vld [vmem:[#allocation2 + $0xa0] sm:$0xff]
        %v385 = vld [vmem:[#allocation2 + $0xa8] sm:$0xff]
        %v386 = vld [vmem:[#allocation2 + $0xb0] sm:$0xff]
        %v387 = vld [vmem:[#allocation2 + $0xb8] sm:$0xff]
        %v388 = vld [vmem:[#allocation2 + $0xc0] sm:$0xff]
        %v389 = vld [vmem:[#allocation2 + $0xc8] sm:$0xff]
        %v390 = vld [vmem:[#allocation2 + $0xd0] sm:$0xff]
        %v391 = vld [vmem:[#allocation2 + $0xd8] sm:$0xff]
        %v392 = vld [vmem:[#allocation2 + $0xe0] sm:$0xff]
        %v393 = vld [vmem:[#allocation2 + $0xe8] sm:$0xff]
        %v394 = vld [vmem:[#allocation2 + $0xf0] sm:$0xff]
        %v395 = vld [vmem:[#allocation2 + $0xf8] sm:$0xff]
        %v396 = vld [vmem:[#allocation2 + $0x100] sm:$0xff]
        %v397 = vld [vmem:[#allocation2 + $0x108] sm:$0xff]
        %v398 = vld [vmem:[#allocation2 + $0x110] sm:$0xff]
        %v399 = vld [vmem:[#allocation2 + $0x118] sm:$0xff]
        %v400 = vld [vmem:[#allocation2 + $0x120] sm:$0xff]
        %v401 = vld [vmem:[#allocation2 + $0x128] sm:$0xff]
        %v402 = vld [vmem:[#allocation2 + $0x130] sm:$0xff]
        %v403 = vld [vmem:[#allocation2 + $0x138] sm:$0xff]
        %v404 = vld [vmem:[#allocation2 + $0x140] sm:$0xff]
        %v405 = vld [vmem:[#allocation2 + $0x148] sm:$0xff]
        %v406 = vld [vmem:[#allocation2 + $0x150] sm:$0xff]
        %v407 = vld [vmem:[#allocation2 + $0x158] sm:$0xff]
        %v408 = vld [vmem:[#allocation2 + $0x160] sm:$0xff]
        %v409 = vld [vmem:[#allocation2 + $0x168] sm:$0xff]
        %v410 = vld [vmem:[#allocation2 + $0x170] sm:$0xff]
        %v411 = vld [vmem:[#allocation2 + $0x178] sm:$0xff]
        %v412 = vld [vmem:[#allocation2 + $0x180] sm:$0xff]
        %v413 = vld [vmem:[#allocation2 + $0x188] sm:$0xff]
        %v414 = vld [vmem:[#allocation2 + $0x190] sm:$0xff]
        %v415 = vld [vmem:[#allocation2 + $0x198] sm:$0xff]
        %v416 = vld [vmem:[#allocation2 + $0x1a0] sm:$0xff]
        %v417 = vld [vmem:[#allocation2 + $0x1a8] sm:$0xff]
        %v418 = vld [vmem:[#allocation2 + $0x1b0] sm:$0xff]
        %v419 = vld [vmem:[#allocation2 + $0x1b8] sm:$0xff]
        %v420 = vld [vmem:[#allocation2 + $0x1c0] sm:$0xff]
        %v421 = vld [vmem:[#allocation2 + $0x1c8] sm:$0xff]
        %v422 = vld [vmem:[#allocation2 + $0x1d0] sm:$0xff]
        %v423 = vld [vmem:[#allocation2 + $0x1d8] sm:$0xff]
        %v424 = vld [vmem:[#allocation2 + $0x1e0] sm:$0xff]
        %v425 = vld [vmem:[#allocation2 + $0x1e8] sm:$0xff]
        %v426 = vld [vmem:[#allocation2 + $0x1f0] sm:$0xff]
        %v427 = vld [vmem:[#allocation2 + $0x1f8] sm:$0xff]
        %v428 = vld [vmem:[#allocation3] sm:$0xff]
        %v429 = vld [vmem:[#allocation3 + $0x8] sm:$0xff]
        %v430 = vld [vmem:[#allocation3 + $0x10] sm:$0xff]
        %v431 = vld [vmem:[#allocation3 + $0x18] sm:$0xff]
        %v432 = vld [vmem:[#allocation3 + $0x20] sm:$0xff]
        %v433 = vld [vmem:[#allocation3 + $0x28] sm:$0xff]
        %v434 = vld [vmem:[#allocation3 + $0x30] sm:$0xff]
        %v435 = vld [vmem:[#allocation3 + $0x38] sm:$0xff]
        %v436 = vld [vmem:[#allocation3 + $0x40] sm:$0xff]
        %v437 = vld [vmem:[#allocation3 + $0x48] sm:$0xff]
        %v438 = vld [vmem:[#allocation3 + $0x50] sm:$0xff]
        %v439 = vld [vmem:[#allocation3 + $0x58] sm:$0xff]
        %v440 = vld [vmem:[#allocation3 + $0x60] sm:$0xff]
        %v441 = vld [vmem:[#allocation3 + $0x68] sm:$0xff]
        %v442 = vld [vmem:[#allocation3 + $0x70] sm:$0xff]
        %v443 = vld [vmem:[#allocation3 + $0x78] sm:$0xff]
        %v444 = vld [vmem:[#allocation3 + $0x80] sm:$0xff]
        %v445 = vld [vmem:[#allocation3 + $0x88] sm:$0xff]
        %v446 = vld [vmem:[#allocation3 + $0x90] sm:$0xff]
        %v447 = vld [vmem:[#allocation3 + $0x98] sm:$0xff]
        %v448 = vld [vmem:[#allocation3 + $0xa0] sm:$0xff]
        %v449 = vld [vmem:[#allocation3 + $0xa8] sm:$0xff]
        %v450 = vld [vmem:[#allocation3 + $0xb0] sm:$0xff]
        %v451 = vld [vmem:[#allocation3 + $0xb8] sm:$0xff]
        %v452 = vld [vmem:[#allocation3 + $0xc0] sm:$0xff]
        %v453 = vld [vmem:[#allocation3 + $0xc8] sm:$0xff]
        %v454 = vld [vmem:[#allocation3 + $0xd0] sm:$0xff]
        %v455 = vld [vmem:[#allocation3 + $0xd8] sm:$0xff]
        %v456 = vld [vmem:[#allocation3 + $0xe0] sm:$0xff]
        %v457 = vld [vmem:[#allocation3 + $0xe8] sm:$0xff]
        %v458 = vld [vmem:[#allocation3 + $0xf0] sm:$0xff]
        %v459 = vld [vmem:[#allocation3 + $0xf8] sm:$0xff]
        %v460 = vld [vmem:[%s244] sm:$0xff]
        %v461 = vld [vmem:[%s244 + $0x8] sm:$0xff]
        %v462 = vld [vmem:[%s244 + $0x10] sm:$0xff]
        %v463 = vld [vmem:[%s244 + $0x18] sm:$0xff]
        %v464 = vld [vmem:[%s244 + $0x20] sm:$0xff]
        %v465 = vld [vmem:[%s244 + $0x28] sm:$0xff]
        %v466 = vld [vmem:[%s244 + $0x30] sm:$0xff]
        %v467 = vld [vmem:[%s244 + $0x38] sm:$0xff]
        %v468 = vld [vmem:[%s244 + $0x40] sm:$0xff]
        %v469 = vld [vmem:[%s244 + $0x48] sm:$0xff]
        %v470 = vld [vmem:[%s244 + $0x50] sm:$0xff]
        %v471 = vld [vmem:[%s244 + $0x58] sm:$0xff]
        %v472 = vld [vmem:[%s244 + $0x60] sm:$0xff]
        %v473 = vld [vmem:[%s244 + $0x68] sm:$0xff]
        %v474 = vld [vmem:[%s244 + $0x70] sm:$0xff]
        %v475 = vld [vmem:[%s244 + $0x78] sm:$0xff]
        %v476 = vld [vmem:[%s244 + $0x80] sm:$0xff]
        %v477 = vld [vmem:[%s244 + $0x88] sm:$0xff]
        %v478 = vld [vmem:[%s244 + $0x90] sm:$0xff]
        %v479 = vld [vmem:[%s244 + $0x98] sm:$0xff]
        %v480 = vld [vmem:[%s244 + $0xa0] sm:$0xff]
        %v481 = vld [vmem:[%s244 + $0xa8] sm:$0xff]
        %v482 = vld [vmem:[%s244 + $0xb0] sm:$0xff]
        %v483 = vld [vmem:[%s244 + $0xb8] sm:$0xff]
        %v484 = vld [vmem:[%s244 + $0xc0] sm:$0xff]
        %v485 = vld [vmem:[%s244 + $0xc8] sm:$0xff]
        %v486 = vld [vmem:[%s244 + $0xd0] sm:$0xff]
        %v487 = vld [vmem:[%s244 + $0xd8] sm:$0xff]
        %v488 = vld [vmem:[%s244 + $0xe0] sm:$0xff]
        %v489 = vld [vmem:[%s244 + $0xe8] sm:$0xff]
        %v490 = vld [vmem:[%s244 + $0xf0] sm:$0xff]
        %v491 = vld [vmem:[%s244 + $0xf8] sm:$0xff]
        %v524 = vunpack.c.l.b16 %v428
        %v525 = vunpack.c.h.b16 %v428
        %v526 = vunpack.c.l.b16 %v429
        %v527 = vunpack.c.h.b16 %v429
        %v528 = vunpack.c.l.b16 %v430
        %v529 = vunpack.c.h.b16 %v430
        %v530 = vunpack.c.l.b16 %v431
        %v531 = vunpack.c.h.b16 %v431
        %v532 = vunpack.c.l.b16 %v432
        %v533 = vunpack.c.h.b16 %v432
        %v534 = vunpack.c.l.b16 %v433
        %v535 = vunpack.c.h.b16 %v433
        %v536 = vunpack.c.l.b16 %v434
        %v537 = vunpack.c.h.b16 %v434
        %v538 = vunpack.c.l.b16 %v435
        %v539 = vunpack.c.h.b16 %v435
        %v540 = vunpack.c.l.b16 %v436
        %v541 = vunpack.c.h.b16 %v436
        %v542 = vunpack.c.l.b16 %v437
        %v543 = vunpack.c.h.b16 %v437
        %v544 = vunpack.c.l.b16 %v438
        %v545 = vunpack.c.h.b16 %v438
        %v546 = vunpack.c.l.b16 %v439
        %v547 = vunpack.c.h.b16 %v439
        %v548 = vunpack.c.l.b16 %v440
        %v549 = vunpack.c.h.b16 %v440
        %v550 = vunpack.c.l.b16 %v441
        %v551 = vunpack.c.h.b16 %v441
        %v552 = vunpack.c.l.b16 %v442
        %v553 = vunpack.c.h.b16 %v442
        %v554 = vunpack.c.l.b16 %v443
        %v555 = vunpack.c.h.b16 %v443
        %v556 = vunpack.c.l.b16 %v444
        %v557 = vunpack.c.h.b16 %v444
        %v558 = vunpack.c.l.b16 %v445
        %v559 = vunpack.c.h.b16 %v445
        %v560 = vunpack.c.l.b16 %v446
        %v561 = vunpack.c.h.b16 %v446
        %v562 = vunpack.c.l.b16 %v447
        %v563 = vunpack.c.h.b16 %v447
        %v564 = vunpack.c.l.b16 %v448
        %v565 = vunpack.c.h.b16 %v448
        %v566 = vunpack.c.l.b16 %v449
        %v567 = vunpack.c.h.b16 %v449
        %v568 = vunpack.c.l.b16 %v450
        %v569 = vunpack.c.h.b16 %v450
        %v570 = vunpack.c.l.b16 %v451
        %v571 = vunpack.c.h.b16 %v451
        %v572 = vunpack.c.l.b16 %v452
        %v573 = vunpack.c.h.b16 %v452
        %v574 = vunpack.c.l.b16 %v453
        %v575 = vunpack.c.h.b16 %v453
        %v576 = vunpack.c.l.b16 %v454
        %v577 = vunpack.c.h.b16 %v454
        %v578 = vunpack.c.l.b16 %v455
        %v579 = vunpack.c.h.b16 %v455
        %v580 = vunpack.c.l.b16 %v456
        %v581 = vunpack.c.h.b16 %v456
        %v582 = vunpack.c.l.b16 %v457
        %v583 = vunpack.c.h.b16 %v457
        %v584 = vunpack.c.l.b16 %v458
        %v585 = vunpack.c.h.b16 %v458
        %v586 = vunpack.c.l.b16 %v459
        %v587 = vunpack.c.h.b16 %v459
        %v588 = vpack.c.b16 %v526, %v524
        %v589 = vpack.c.b16 %v527, %v525
        %v590 = vpack.c.b16 %v530, %v528
        %v591 = vpack.c.b16 %v531, %v529
        %v592 = vpack.c.b16 %v534, %v532
        %v593 = vpack.c.b16 %v535, %v533
        %v594 = vpack.c.b16 %v538, %v536
        %v595 = vpack.c.b16 %v539, %v537
        %v596 = vpack.c.b16 %v542, %v540
        %v597 = vpack.c.b16 %v543, %v541
        %v598 = vpack.c.b16 %v546, %v544
        %v599 = vpack.c.b16 %v547, %v545
        %v600 = vpack.c.b16 %v550, %v548
        %v601 = vpack.c.b16 %v551, %v549
        %v602 = vpack.c.b16 %v554, %v552
        %v603 = vpack.c.b16 %v555, %v553
        %v604 = vpack.c.b16 %v558, %v556
        %v605 = vpack.c.b16 %v559, %v557
        %v606 = vpack.c.b16 %v562, %v560
        %v607 = vpack.c.b16 %v563, %v561
        %v608 = vpack.c.b16 %v566, %v564
        %v609 = vpack.c.b16 %v567, %v565
        %v610 = vpack.c.b16 %v570, %v568
        %v611 = vpack.c.b16 %v571, %v569
        %v612 = vpack.c.b16 %v574, %v572
        %v613 = vpack.c.b16 %v575, %v573
        %v614 = vpack.c.b16 %v578, %v576
        %v615 = vpack.c.b16 %v579, %v577
        %v616 = vpack.c.b16 %v582, %v580
        %v617 = vpack.c.b16 %v583, %v581
        %v618 = vpack.c.b16 %v586, %v584
        %v619 = vpack.c.b16 %v587, %v585
        %v684 = vunpack.c.l.b16 %v460
        %v685 = vunpack.c.h.b16 %v460
        %v686 = vunpack.c.l.b16 %v461
        %v687 = vunpack.c.h.b16 %v461
        %v688 = vunpack.c.l.b16 %v462
        %v689 = vunpack.c.h.b16 %v462
        %v690 = vunpack.c.l.b16 %v463
        %v691 = vunpack.c.h.b16 %v463
        %v692 = vunpack.c.l.b16 %v464
        %v693 = vunpack.c.h.b16 %v464
        %v694 = vunpack.c.l.b16 %v465
        %v695 = vunpack.c.h.b16 %v465
        %v696 = vunpack.c.l.b16 %v466
        %v697 = vunpack.c.h.b16 %v466
        %v698 = vunpack.c.l.b16 %v467
        %v699 = vunpack.c.h.b16 %v467
        %v700 = vunpack.c.l.b16 %v468
        %v701 = vunpack.c.h.b16 %v468
        %v702 = vunpack.c.l.b16 %v469
        %v703 = vunpack.c.h.b16 %v469
        %v704 = vunpack.c.l.b16 %v470
        %v705 = vunpack.c.h.b16 %v470
        %v706 = vunpack.c.l.b16 %v471
        %v707 = vunpack.c.h.b16 %v471
        %v708 = vunpack.c.l.b16 %v472
        %v709 = vunpack.c.h.b16 %v472
        %v710 = vunpack.c.l.b16 %v473
        %v711 = vunpack.c.h.b16 %v473
        %v712 = vunpack.c.l.b16 %v474
        %v713 = vunpack.c.h.b16 %v474
        %v714 = vunpack.c.l.b16 %v475
        %v715 = vunpack.c.h.b16 %v475
        %v716 = vunpack.c.l.b16 %v476
        %v717 = vunpack.c.h.b16 %v476
        %v718 = vunpack.c.l.b16 %v477
        %v719 = vunpack.c.h.b16 %v477
        %v720 = vunpack.c.l.b16 %v478
        %v721 = vunpack.c.h.b16 %v478
        %v722 = vunpack.c.l.b16 %v479
        %v723 = vunpack.c.h.b16 %v479
        %v724 = vunpack.c.l.b16 %v480
        %v725 = vunpack.c.h.b16 %v480
        %v726 = vunpack.c.l.b16 %v481
        %v727 = vunpack.c.h.b16 %v481
        %v728 = vunpack.c.l.b16 %v482
        %v729 = vunpack.c.h.b16 %v482
        %v730 = vunpack.c.l.b16 %v483
        %v731 = vunpack.c.h.b16 %v483
        %v732 = vunpack.c.l.b16 %v484
        %v733 = vunpack.c.h.b16 %v484
        %v734 = vunpack.c.l.b16 %v485
        %v735 = vunpack.c.h.b16 %v485
        %v736 = vunpack.c.l.b16 %v486
        %v737 = vunpack.c.h.b16 %v486
        %v738 = vunpack.c.l.b16 %v487
        %v739 = vunpack.c.h.b16 %v487
        %v740 = vunpack.c.l.b16 %v488
        %v741 = vunpack.c.h.b16 %v488
        %v742 = vunpack.c.l.b16 %v489
        %v743 = vunpack.c.h.b16 %v489
        %v744 = vunpack.c.l.b16 %v490
        %v745 = vunpack.c.h.b16 %v490
        %v746 = vunpack.c.l.b16 %v491
        %v747 = vunpack.c.h.b16 %v491
        %v748 = vpack.c.b16 %v686, %v684
        %v749 = vpack.c.b16 %v687, %v685
        %v750 = vpack.c.b16 %v690, %v688
        %v751 = vpack.c.b16 %v691, %v689
        %v752 = vpack.c.b16 %v694, %v692
        %v753 = vpack.c.b16 %v695, %v693
        %v754 = vpack.c.b16 %v698, %v696
        %v755 = vpack.c.b16 %v699, %v697
        %v756 = vpack.c.b16 %v702, %v700
        %v757 = vpack.c.b16 %v703, %v701
        %v758 = vpack.c.b16 %v706, %v704
        %v759 = vpack.c.b16 %v707, %v705
        %v760 = vpack.c.b16 %v710, %v708
        %v761 = vpack.c.b16 %v711, %v709
        %v762 = vpack.c.b16 %v714, %v712
        %v763 = vpack.c.b16 %v715, %v713
        %v764 = vpack.c.b16 %v718, %v716
        %v765 = vpack.c.b16 %v719, %v717
        %v766 = vpack.c.b16 %v722, %v720
        %v767 = vpack.c.b16 %v723, %v721
        %v768 = vpack.c.b16 %v726, %v724
        %v769 = vpack.c.b16 %v727, %v725
        %v770 = vpack.c.b16 %v730, %v728
        %v771 = vpack.c.b16 %v731, %v729
        %v772 = vpack.c.b16 %v734, %v732
        %v773 = vpack.c.b16 %v735, %v733
        %v774 = vpack.c.b16 %v738, %v736
        %v775 = vpack.c.b16 %v739, %v737
        %v776 = vpack.c.b16 %v742, %v740
        %v777 = vpack.c.b16 %v743, %v741
        %v778 = vpack.c.b16 %v746, %v744
        %v779 = vpack.c.b16 %v747, %v745
        %812 = vmatpush.bf16.msra.mxu0 %v762
        %813 = vmatpush.bf16.msra.mxu0 %v760
        %814 = vmatpush.bf16.msra.mxu0 %v758
        %815 = vmatpush.bf16.msra.mxu0 %v756
        %816 = vmatpush.bf16.msra.mxu0 %v754
        %817 = vmatpush.bf16.msra.mxu0 %v752
        %818 = vmatpush.bf16.msra.mxu0 %v750
        %819 = vmatpush.bf16.msra.mxu0 %v748
        %820 = vmatmul.bf16.gmra.mxu0 %v588
        %v821 = vpop.f32.mrf.mxu0
        %v822 = vadd.f32 0.0, %v821
        %v823 = vpop.f32.mrf.mxu0
        %v824 = vadd.f32 0.0, %v823
        %825 = vmatmul.bf16.gmra.mxu0 %v590
        %v826 = vpop.f32.mrf.mxu0
        %v827 = vadd.f32 0.0, %v826
        %v828 = vpop.f32.mrf.mxu0
        %v829 = vadd.f32 0.0, %v828
        %830 = vmatmul.bf16.gmra.mxu0 %v592
        %v831 = vpop.f32.mrf.mxu0
        %v832 = vadd.f32 0.0, %v831
        %v833 = vpop.f32.mrf.mxu0
        %v834 = vadd.f32 0.0, %v833
        %835 = vmatmul.bf16.gmra.mxu0 %v594
        %v836 = vpop.f32.mrf.mxu0
        %v837 = vadd.f32 0.0, %v836
        %v838 = vpop.f32.mrf.mxu0
        %v839 = vadd.f32 0.0, %v838
        %840 = vmatmul.bf16.gmra.mxu0 %v596
        %v841 = vpop.f32.mrf.mxu0
        %v842 = vadd.f32 0.0, %v841
        %v843 = vpop.f32.mrf.mxu0
        %v844 = vadd.f32 0.0, %v843
        %845 = vmatmul.bf16.gmra.mxu0 %v598
        %v846 = vpop.f32.mrf.mxu0
        %v847 = vadd.f32 0.0, %v846
        %v848 = vpop.f32.mrf.mxu0
        %v849 = vadd.f32 0.0, %v848
        %850 = vmatmul.bf16.gmra.mxu0 %v600
        %v851 = vpop.f32.mrf.mxu0
        %v852 = vadd.f32 0.0, %v851
        %v853 = vpop.f32.mrf.mxu0
        %v854 = vadd.f32 0.0, %v853
        %855 = vmatmul.bf16.gmra.mxu0 %v602
        %v856 = vpop.f32.mrf.mxu0
        %v857 = vadd.f32 0.0, %v856
        %v858 = vpop.f32.mrf.mxu0
        %v859 = vadd.f32 0.0, %v858
        %860 = vmatmul.bf16.gmra.mxu0 %v604
        %v861 = vpop.f32.mrf.mxu0
        %v862 = vadd.f32 0.0, %v861
        %v863 = vpop.f32.mrf.mxu0
        %v864 = vadd.f32 0.0, %v863
        %865 = vmatmul.bf16.gmra.mxu0 %v606
        %v866 = vpop.f32.mrf.mxu0
        %v867 = vadd.f32 0.0, %v866
        %v868 = vpop.f32.mrf.mxu0
        %v869 = vadd.f32 0.0, %v868
        %870 = vmatmul.bf16.gmra.mxu0 %v608
        %v871 = vpop.f32.mrf.mxu0
        %v872 = vadd.f32 0.0, %v871
        %v873 = vpop.f32.mrf.mxu0
        %v874 = vadd.f32 0.0, %v873
        %875 = vmatmul.bf16.gmra.mxu0 %v610
        %v876 = vpop.f32.mrf.mxu0
        %v877 = vadd.f32 0.0, %v876
        %v878 = vpop.f32.mrf.mxu0
        %v879 = vadd.f32 0.0, %v878
        %880 = vmatmul.bf16.gmra.mxu0 %v612
        %v881 = vpop.f32.mrf.mxu0
        %v882 = vadd.f32 0.0, %v881
        %v883 = vpop.f32.mrf.mxu0
        %v884 = vadd.f32 0.0, %v883
        %885 = vmatmul.bf16.gmra.mxu0 %v614
        %v886 = vpop.f32.mrf.mxu0
        %v887 = vadd.f32 0.0, %v886
        %v888 = vpop.f32.mrf.mxu0
        %v889 = vadd.f32 0.0, %v888
        %890 = vmatmul.bf16.gmra.mxu0 %v616
        %v891 = vpop.f32.mrf.mxu0
        %v892 = vadd.f32 0.0, %v891
        %v893 = vpop.f32.mrf.mxu0
        %v894 = vadd.f32 0.0, %v893
        %895 = vmatmul.bf16.gmra.mxu0 %v618
        %v896 = vpop.f32.mrf.mxu0
        %v897 = vadd.f32 0.0, %v896
        %v898 = vpop.f32.mrf.mxu0
        %v899 = vadd.f32 0.0, %v898
        %900 = vdwg.mxu0
        %901 = vmatpush.bf16.msra.mxu0 %v778
        %902 = vmatpush.bf16.msra.mxu0 %v776
        %903 = vmatpush.bf16.msra.mxu0 %v774
        %904 = vmatpush.bf16.msra.mxu0 %v772
        %905 = vmatpush.bf16.msra.mxu0 %v770
        %906 = vmatpush.bf16.msra.mxu0 %v768
        %907 = vmatpush.bf16.msra.mxu0 %v766
        %908 = vmatpush.bf16.msra.mxu0 %v764
        %909 = vmatmul.bf16.gmra.mxu0 %v589
        %v910 = vpop.f32.mrf.mxu0
        %v911 = vadd.f32 %v822, %v910
        %v912 = vpop.f32.mrf.mxu0
        %v913 = vadd.f32 %v824, %v912
        %914 = vmatmul.bf16.gmra.mxu0 %v591
        %v915 = vpop.f32.mrf.mxu0
        %v916 = vadd.f32 %v827, %v915
        %v917 = vpop.f32.mrf.mxu0
        %v918 = vadd.f32 %v829, %v917
        %919 = vmatmul.bf16.gmra.mxu0 %v593
        %v920 = vpop.f32.mrf.mxu0
        %v921 = vadd.f32 %v832, %v920
        %v922 = vpop.f32.mrf.mxu0
        %v923 = vadd.f32 %v834, %v922
        %924 = vmatmul.bf16.gmra.mxu0 %v595
        %v925 = vpop.f32.mrf.mxu0
        %v926 = vadd.f32 %v837, %v925
        %v927 = vpop.f32.mrf.mxu0
        %v928 = vadd.f32 %v839, %v927
        %929 = vmatmul.bf16.gmra.mxu0 %v597
        %v930 = vpop.f32.mrf.mxu0
        %v931 = vadd.f32 %v842, %v930
        %v932 = vpop.f32.mrf.mxu0
        %v933 = vadd.f32 %v844, %v932
        %934 = vmatmul.bf16.gmra.mxu0 %v599
        %v935 = vpop.f32.mrf.mxu0
        %v936 = vadd.f32 %v847, %v935
        %v937 = vpop.f32.mrf.mxu0
        %v938 = vadd.f32 %v849, %v937
        %939 = vmatmul.bf16.gmra.mxu0 %v601
        %v940 = vpop.f32.mrf.mxu0
        %v941 = vadd.f32 %v852, %v940
        %v942 = vpop.f32.mrf.mxu0
        %v943 = vadd.f32 %v854, %v942
        %944 = vmatmul.bf16.gmra.mxu0 %v603
        %v945 = vpop.f32.mrf.mxu0
        %v946 = vadd.f32 %v857, %v945
        %v947 = vpop.f32.mrf.mxu0
        %v948 = vadd.f32 %v859, %v947
        %949 = vmatmul.bf16.gmra.mxu0 %v605
        %v950 = vpop.f32.mrf.mxu0
        %v951 = vadd.f32 %v862, %v950
        %v952 = vpop.f32.mrf.mxu0
        %v953 = vadd.f32 %v864, %v952
        %954 = vmatmul.bf16.gmra.mxu0 %v607
        %v955 = vpop.f32.mrf.mxu0
        %v956 = vadd.f32 %v867, %v955
        %v957 = vpop.f32.mrf.mxu0
        %v958 = vadd.f32 %v869, %v957
        %959 = vmatmul.bf16.gmra.mxu0 %v609
        %v960 = vpop.f32.mrf.mxu0
        %v961 = vadd.f32 %v872, %v960
        %v962 = vpop.f32.mrf.mxu0
        %v963 = vadd.f32 %v874, %v962
        %964 = vmatmul.bf16.gmra.mxu0 %v611
        %v965 = vpop.f32.mrf.mxu0
        %v966 = vadd.f32 %v877, %v965
        %v967 = vpop.f32.mrf.mxu0
        %v968 = vadd.f32 %v879, %v967
        %969 = vmatmul.bf16.gmra.mxu0 %v613
        %v970 = vpop.f32.mrf.mxu0
        %v971 = vadd.f32 %v882, %v970
        %v972 = vpop.f32.mrf.mxu0
        %v973 = vadd.f32 %v884, %v972
        %974 = vmatmul.bf16.gmra.mxu0 %v615
        %v975 = vpop.f32.mrf.mxu0
        %v976 = vadd.f32 %v887, %v975
        %v977 = vpop.f32.mrf.mxu0
        %v978 = vadd.f32 %v889, %v977
        %979 = vmatmul.bf16.gmra.mxu0 %v617
        %v980 = vpop.f32.mrf.mxu0
        %v981 = vadd.f32 %v892, %v980
        %v982 = vpop.f32.mrf.mxu0
        %v983 = vadd.f32 %v894, %v982
        %984 = vmatmul.bf16.gmra.mxu0 %v619
        %v985 = vpop.f32.mrf.mxu0
        %v986 = vadd.f32 %v897, %v985
        %v987 = vpop.f32.mrf.mxu0
        %v988 = vadd.f32 %v899, %v987
        %989 = vdwg.mxu0
        %990 = vmatpush.bf16.msra.mxu0 %v763
        %991 = vmatpush.bf16.msra.mxu0 %v761
        %992 = vmatpush.bf16.msra.mxu0 %v759
        %993 = vmatpush.bf16.msra.mxu0 %v757
        %994 = vmatpush.bf16.msra.mxu0 %v755
        %995 = vmatpush.bf16.msra.mxu0 %v753
        %996 = vmatpush.bf16.msra.mxu0 %v751
        %997 = vmatpush.bf16.msra.mxu0 %v749
        %998 = vmatmul.bf16.gmra.mxu0 %v588
        %v999 = vpop.f32.mrf.mxu0
        %v1000 = vadd.f32 0.0, %v999
        %v1001 = vpop.f32.mrf.mxu0
        %v1002 = vadd.f32 0.0, %v1001
        %1003 = vmatmul.bf16.gmra.mxu0 %v590
        %v1004 = vpop.f32.mrf.mxu0
        %v1005 = vadd.f32 0.0, %v1004
        %v1006 = vpop.f32.mrf.mxu0
        %v1007 = vadd.f32 0.0, %v1006
        %1008 = vmatmul.bf16.gmra.mxu0 %v592
        %v1009 = vpop.f32.mrf.mxu0
        %v1010 = vadd.f32 0.0, %v1009
        %v1011 = vpop.f32.mrf.mxu0
        %v1012 = vadd.f32 0.0, %v1011
        %1013 = vmatmul.bf16.gmra.mxu0 %v594
        %v1014 = vpop.f32.mrf.mxu0
        %v1015 = vadd.f32 0.0, %v1014
        %v1016 = vpop.f32.mrf.mxu0
        %v1017 = vadd.f32 0.0, %v1016
        %1018 = vmatmul.bf16.gmra.mxu0 %v596
        %v1019 = vpop.f32.mrf.mxu0
        %v1020 = vadd.f32 0.0, %v1019
        %v1021 = vpop.f32.mrf.mxu0
        %v1022 = vadd.f32 0.0, %v1021
        %1023 = vmatmul.bf16.gmra.mxu0 %v598
        %v1024 = vpop.f32.mrf.mxu0
        %v1025 = vadd.f32 0.0, %v1024
        %v1026 = vpop.f32.mrf.mxu0
        %v1027 = vadd.f32 0.0, %v1026
        %1028 = vmatmul.bf16.gmra.mxu0 %v600
        %v1029 = vpop.f32.mrf.mxu0
        %v1030 = vadd.f32 0.0, %v1029
        %v1031 = vpop.f32.mrf.mxu0
        %v1032 = vadd.f32 0.0, %v1031
        %1033 = vmatmul.bf16.gmra.mxu0 %v602
        %v1034 = vpop.f32.mrf.mxu0
        %v1035 = vadd.f32 0.0, %v1034
        %v1036 = vpop.f32.mrf.mxu0
        %v1037 = vadd.f32 0.0, %v1036
        %1038 = vmatmul.bf16.gmra.mxu0 %v604
        %v1039 = vpop.f32.mrf.mxu0
        %v1040 = vadd.f32 0.0, %v1039
        %v1041 = vpop.f32.mrf.mxu0
        %v1042 = vadd.f32 0.0, %v1041
        %1043 = vmatmul.bf16.gmra.mxu0 %v606
        %v1044 = vpop.f32.mrf.mxu0
        %v1045 = vadd.f32 0.0, %v1044
        %v1046 = vpop.f32.mrf.mxu0
        %v1047 = vadd.f32 0.0, %v1046
        %1048 = vmatmul.bf16.gmra.mxu0 %v608
        %v1049 = vpop.f32.mrf.mxu0
        %v1050 = vadd.f32 0.0, %v1049
        %v1051 = vpop.f32.mrf.mxu0
        %v1052 = vadd.f32 0.0, %v1051
        %1053 = vmatmul.bf16.gmra.mxu0 %v610
        %v1054 = vpop.f32.mrf.mxu0
        %v1055 = vadd.f32 0.0, %v1054
        %v1056 = vpop.f32.mrf.mxu0
        %v1057 = vadd.f32 0.0, %v1056
        %1058 = vmatmul.bf16.gmra.mxu0 %v612
        %v1059 = vpop.f32.mrf.mxu0
        %v1060 = vadd.f32 0.0, %v1059
        %v1061 = vpop.f32.mrf.mxu0
        %v1062 = vadd.f32 0.0, %v1061
        %1063 = vmatmul.bf16.gmra.mxu0 %v614
        %v1064 = vpop.f32.mrf.mxu0
        %v1065 = vadd.f32 0.0, %v1064
        %v1066 = vpop.f32.mrf.mxu0
        %v1067 = vadd.f32 0.0, %v1066
        %1068 = vmatmul.bf16.gmra.mxu0 %v616
        %v1069 = vpop.f32.mrf.mxu0
        %v1070 = vadd.f32 0.0, %v1069
        %v1071 = vpop.f32.mrf.mxu0
        %v1072 = vadd.f32 0.0, %v1071
        %1073 = vmatmul.bf16.gmra.mxu0 %v618
        %v1074 = vpop.f32.mrf.mxu0
        %v1075 = vadd.f32 0.0, %v1074
        %v1076 = vpop.f32.mrf.mxu0
        %v1077 = vadd.f32 0.0, %v1076
        %1078 = vdwg.mxu0
        %1079 = vmatpush.bf16.msra.mxu0 %v779
        %1080 = vmatpush.bf16.msra.mxu0 %v777
        %1081 = vmatpush.bf16.msra.mxu0 %v775
        %1082 = vmatpush.bf16.msra.mxu0 %v773
        %1083 = vmatpush.bf16.msra.mxu0 %v771
        %1084 = vmatpush.bf16.msra.mxu0 %v769
        %1085 = vmatpush.bf16.msra.mxu0 %v767
        %1086 = vmatpush.bf16.msra.mxu0 %v765
        %1087 = vmatmul.bf16.gmra.mxu0 %v589
        %v1088 = vpop.f32.mrf.mxu0
        %v1089 = vadd.f32 %v1000, %v1088
        %v1090 = vpop.f32.mrf.mxu0
        %v1091 = vadd.f32 %v1002, %v1090
        %1092 = vmatmul.bf16.gmra.mxu0 %v591
        %v1093 = vpop.f32.mrf.mxu0
        %v1094 = vadd.f32 %v1005, %v1093
        %v1095 = vpop.f32.mrf.mxu0
        %v1096 = vadd.f32 %v1007, %v1095
        %1097 = vmatmul.bf16.gmra.mxu0 %v593
        %v1098 = vpop.f32.mrf.mxu0
        %v1099 = vadd.f32 %v1010, %v1098
        %v1100 = vpop.f32.mrf.mxu0
        %v1101 = vadd.f32 %v1012, %v1100
        %1102 = vmatmul.bf16.gmra.mxu0 %v595
        %v1103 = vpop.f32.mrf.mxu0
        %v1104 = vadd.f32 %v1015, %v1103
        %v1105 = vpop.f32.mrf.mxu0
        %v1106 = vadd.f32 %v1017, %v1105
        %1107 = vmatmul.bf16.gmra.mxu0 %v597
        %v1108 = vpop.f32.mrf.mxu0
        %v1109 = vadd.f32 %v1020, %v1108
        %v1110 = vpop.f32.mrf.mxu0
        %v1111 = vadd.f32 %v1022, %v1110
        %1112 = vmatmul.bf16.gmra.mxu0 %v599
        %v1113 = vpop.f32.mrf.mxu0
        %v1114 = vadd.f32 %v1025, %v1113
        %v1115 = vpop.f32.mrf.mxu0
        %v1116 = vadd.f32 %v1027, %v1115
        %1117 = vmatmul.bf16.gmra.mxu0 %v601
        %v1118 = vpop.f32.mrf.mxu0
        %v1119 = vadd.f32 %v1030, %v1118
        %v1120 = vpop.f32.mrf.mxu0
        %v1121 = vadd.f32 %v1032, %v1120
        %1122 = vmatmul.bf16.gmra.mxu0 %v603
        %v1123 = vpop.f32.mrf.mxu0
        %v1124 = vadd.f32 %v1035, %v1123
        %v1125 = vpop.f32.mrf.mxu0
        %v1126 = vadd.f32 %v1037, %v1125
        %1127 = vmatmul.bf16.gmra.mxu0 %v605
        %v1128 = vpop.f32.mrf.mxu0
        %v1129 = vadd.f32 %v1040, %v1128
        %v1130 = vpop.f32.mrf.mxu0
        %v1131 = vadd.f32 %v1042, %v1130
        %1132 = vmatmul.bf16.gmra.mxu0 %v607
        %v1133 = vpop.f32.mrf.mxu0
        %v1134 = vadd.f32 %v1045, %v1133
        %v1135 = vpop.f32.mrf.mxu0
        %v1136 = vadd.f32 %v1047, %v1135
        %1137 = vmatmul.bf16.gmra.mxu0 %v609
        %v1138 = vpop.f32.mrf.mxu0
        %v1139 = vadd.f32 %v1050, %v1138
        %v1140 = vpop.f32.mrf.mxu0
        %v1141 = vadd.f32 %v1052, %v1140
        %1142 = vmatmul.bf16.gmra.mxu0 %v611
        %v1143 = vpop.f32.mrf.mxu0
        %v1144 = vadd.f32 %v1055, %v1143
        %v1145 = vpop.f32.mrf.mxu0
        %v1146 = vadd.f32 %v1057, %v1145
        %1147 = vmatmul.bf16.gmra.mxu0 %v613
        %v1148 = vpop.f32.mrf.mxu0
        %v1149 = vadd.f32 %v1060, %v1148
        %v1150 = vpop.f32.mrf.mxu0
        %v1151 = vadd.f32 %v1062, %v1150
        %1152 = vmatmul.bf16.gmra.mxu0 %v615
        %v1153 = vpop.f32.mrf.mxu0
        %v1154 = vadd.f32 %v1065, %v1153
        %v1155 = vpop.f32.mrf.mxu0
        %v1156 = vadd.f32 %v1067, %v1155
        %1157 = vmatmul.bf16.gmra.mxu0 %v617
        %v1158 = vpop.f32.mrf.mxu0
        %v1159 = vadd.f32 %v1070, %v1158
        %v1160 = vpop.f32.mrf.mxu0
        %v1161 = vadd.f32 %v1072, %v1160
        %1162 = vmatmul.bf16.gmra.mxu0 %v619
        %v1163 = vpop.f32.mrf.mxu0
        %v1164 = vadd.f32 %v1075, %v1163
        %v1165 = vpop.f32.mrf.mxu0
        %v1166 = vadd.f32 %v1077, %v1165
        %1167 = vdwg.mxu0
        %v1168 = vadd.f32 %v364, %v911
        %v1169 = vadd.f32 %v365, %v1089
        %v1170 = vadd.f32 %v366, %v913
        %v1171 = vadd.f32 %v367, %v1091
        %v1172 = vadd.f32 %v368, %v916
        %v1173 = vadd.f32 %v369, %v1094
        %v1174 = vadd.f32 %v370, %v918
        %v1175 = vadd.f32 %v371, %v1096
        %v1176 = vadd.f32 %v372, %v921
        %v1177 = vadd.f32 %v373, %v1099
        %v1178 = vadd.f32 %v374, %v923
        %v1179 = vadd.f32 %v375, %v1101
        %v1180 = vadd.f32 %v376, %v926
        %v1181 = vadd.f32 %v377, %v1104
        %v1182 = vadd.f32 %v378, %v928
        %v1183 = vadd.f32 %v379, %v1106
        %v1184 = vadd.f32 %v380, %v931
        %v1185 = vadd.f32 %v381, %v1109
        %v1186 = vadd.f32 %v382, %v933
        %v1187 = vadd.f32 %v383, %v1111
        %v1188 = vadd.f32 %v384, %v936
        %v1189 = vadd.f32 %v385, %v1114
        %v1190 = vadd.f32 %v386, %v938
        %v1191 = vadd.f32 %v387, %v1116
        %v1192 = vadd.f32 %v388, %v941
        %v1193 = vadd.f32 %v389, %v1119
        %v1194 = vadd.f32 %v390, %v943
        %v1195 = vadd.f32 %v391, %v1121
        %v1196 = vadd.f32 %v392, %v946
        %v1197 = vadd.f32 %v393, %v1124
        %v1198 = vadd.f32 %v394, %v948
        %v1199 = vadd.f32 %v395, %v1126
        %v1200 = vadd.f32 %v396, %v951
        %v1201 = vadd.f32 %v397, %v1129
        %v1202 = vadd.f32 %v398, %v953
        %v1203 = vadd.f32 %v399, %v1131
        %v1204 = vadd.f32 %v400, %v956
        %v1205 = vadd.f32 %v401, %v1134
        %v1206 = vadd.f32 %v402, %v958
        %v1207 = vadd.f32 %v403, %v1136
        %v1208 = vadd.f32 %v404, %v961
        %v1209 = vadd.f32 %v405, %v1139
        %v1210 = vadd.f32 %v406, %v963
        %v1211 = vadd.f32 %v407, %v1141
        %v1212 = vadd.f32 %v408, %v966
        %v1213 = vadd.f32 %v409, %v1144
        %v1214 = vadd.f32 %v410, %v968
        %v1215 = vadd.f32 %v411, %v1146
        %v1216 = vadd.f32 %v412, %v971
        %v1217 = vadd.f32 %v413, %v1149
        %v1218 = vadd.f32 %v414, %v973
        %v1219 = vadd.f32 %v415, %v1151
        %v1220 = vadd.f32 %v416, %v976
        %v1221 = vadd.f32 %v417, %v1154
        %v1222 = vadd.f32 %v418, %v978
        %v1223 = vadd.f32 %v419, %v1156
        %v1224 = vadd.f32 %v420, %v981
        %v1225 = vadd.f32 %v421, %v1159
        %v1226 = vadd.f32 %v422, %v983
        %v1227 = vadd.f32 %v423, %v1161
        %v1228 = vadd.f32 %v424, %v986
        %v1229 = vadd.f32 %v425, %v1164
        %v1230 = vadd.f32 %v426, %v988
        %v1231 = vadd.f32 %v427, %v1166
        %1232 = vst [vmem:[#allocation2] sm:$0xff] %v1168
        %1233 = vst [vmem:[#allocation2 + $0x8] sm:$0xff] %v1169
        %1234 = vst [vmem:[#allocation2 + $0x10] sm:$0xff] %v1170
        %1235 = vst [vmem:[#allocation2 + $0x18] sm:$0xff] %v1171
        %1236 = vst [vmem:[#allocation2 + $0x20] sm:$0xff] %v1172
        %1237 = vst [vmem:[#allocation2 + $0x28] sm:$0xff] %v1173
        %1238 = vst [vmem:[#allocation2 + $0x30] sm:$0xff] %v1174
        %1239 = vst [vmem:[#allocation2 + $0x38] sm:$0xff] %v1175
        %1240 = vst [vmem:[#allocation2 + $0x40] sm:$0xff] %v1176
        %1241 = vst [vmem:[#allocation2 + $0x48] sm:$0xff] %v1177
        %1242 = vst [vmem:[#allocation2 + $0x50] sm:$0xff] %v1178
        %1243 = vst [vmem:[#allocation2 + $0x58] sm:$0xff] %v1179
        %1244 = vst [vmem:[#allocation2 + $0x60] sm:$0xff] %v1180
        %1245 = vst [vmem:[#allocation2 + $0x68] sm:$0xff] %v1181
        %1246 = vst [vmem:[#allocation2 + $0x70] sm:$0xff] %v1182
        %1247 = vst [vmem:[#allocation2 + $0x78] sm:$0xff] %v1183
        %1248 = vst [vmem:[#allocation2 + $0x80] sm:$0xff] %v1184
        %1249 = vst [vmem:[#allocation2 + $0x88] sm:$0xff] %v1185
        %1250 = vst [vmem:[#allocation2 + $0x90] sm:$0xff] %v1186
        %1251 = vst [vmem:[#allocation2 + $0x98] sm:$0xff] %v1187
        %1252 = vst [vmem:[#allocation2 + $0xa0] sm:$0xff] %v1188
        %1253 = vst [vmem:[#allocation2 + $0xa8] sm:$0xff] %v1189
        %1254 = vst [vmem:[#allocation2 + $0xb0] sm:$0xff] %v1190
        %1255 = vst [vmem:[#allocation2 + $0xb8] sm:$0xff] %v1191
        %1256 = vst [vmem:[#allocation2 + $0xc0] sm:$0xff] %v1192
        %1257 = vst [vmem:[#allocation2 + $0xc8] sm:$0xff] %v1193
        %1258 = vst [vmem:[#allocation2 + $0xd0] sm:$0xff] %v1194
        %1259 = vst [vmem:[#allocation2 + $0xd8] sm:$0xff] %v1195
        %1260 = vst [vmem:[#allocation2 + $0xe0] sm:$0xff] %v1196
        %1261 = vst [vmem:[#allocation2 + $0xe8] sm:$0xff] %v1197
        %1262 = vst [vmem:[#allocation2 + $0xf0] sm:$0xff] %v1198
        %1263 = vst [vmem:[#allocation2 + $0xf8] sm:$0xff] %v1199
        %1264 = vst [vmem:[#allocation2 + $0x100] sm:$0xff] %v1200
        %1265 = vst [vmem:[#allocation2 + $0x108] sm:$0xff] %v1201
        %1266 = vst [vmem:[#allocation2 + $0x110] sm:$0xff] %v1202
        %1267 = vst [vmem:[#allocation2 + $0x118] sm:$0xff] %v1203
        %1268 = vst [vmem:[#allocation2 + $0x120] sm:$0xff] %v1204
        %1269 = vst [vmem:[#allocation2 + $0x128] sm:$0xff] %v1205
        %1270 = vst [vmem:[#allocation2 + $0x130] sm:$0xff] %v1206
        %1271 = vst [vmem:[#allocation2 + $0x138] sm:$0xff] %v1207
        %1272 = vst [vmem:[#allocation2 + $0x140] sm:$0xff] %v1208
        %1273 = vst [vmem:[#allocation2 + $0x148] sm:$0xff] %v1209
        %1274 = vst [vmem:[#allocation2 + $0x150] sm:$0xff] %v1210
        %1275 = vst [vmem:[#allocation2 + $0x158] sm:$0xff] %v1211
        %1276 = vst [vmem:[#allocation2 + $0x160] sm:$0xff] %v1212
        %1277 = vst [vmem:[#allocation2 + $0x168] sm:$0xff] %v1213
        %1278 = vst [vmem:[#allocation2 + $0x170] sm:$0xff] %v1214
        %1279 = vst [vmem:[#allocation2 + $0x178] sm:$0xff] %v1215
        %1280 = vst [vmem:[#allocation2 + $0x180] sm:$0xff] %v1216
        %1281 = vst [vmem:[#allocation2 + $0x188] sm:$0xff] %v1217
        %1282 = vst [vmem:[#allocation2 + $0x190] sm:$0xff] %v1218
        %1283 = vst [vmem:[#allocation2 + $0x198] sm:$0xff] %v1219
        %1284 = vst [vmem:[#allocation2 + $0x1a0] sm:$0xff] %v1220
        %1285 = vst [vmem:[#allocation2 + $0x1a8] sm:$0xff] %v1221
        %1286 = vst [vmem:[#allocation2 + $0x1b0] sm:$0xff] %v1222
        %1287 = vst [vmem:[#allocation2 + $0x1b8] sm:$0xff] %v1223
        %1288 = vst [vmem:[#allocation2 + $0x1c0] sm:$0xff] %v1224
        %1289 = vst [vmem:[#allocation2 + $0x1c8] sm:$0xff] %v1225
        %1290 = vst [vmem:[#allocation2 + $0x1d0] sm:$0xff] %v1226
        %1291 = vst [vmem:[#allocation2 + $0x1d8] sm:$0xff] %v1227
        %1292 = vst [vmem:[#allocation2 + $0x1e0] sm:$0xff] %v1228
        %1293 = vst [vmem:[#allocation2 + $0x1e8] sm:$0xff] %v1229
        %1294 = vst [vmem:[#allocation2 + $0x1f0] sm:$0xff] %v1230
        %1295 = vst [vmem:[#allocation2 + $0x1f8] sm:$0xff] %v1231
        // Predicated region
        $region49: #{tpu_custom_call.1} parent=31 // pred_check
          %p1296 = pneg %p290
        $region50: #{tpu_custom_call.1} parent=31 // pred_check_branch
          %1298 = sbr.rel (%p1296) target = $region52
        $region51: #{tpu_custom_call.1} parent=31 // pred_region
          %v1299 = vld [vmem:[#allocation2] sm:$0xff]
          %v1300 = vld [vmem:[#allocation2 + $0x8] sm:$0xff]
          %v1301 = vld [vmem:[#allocation2 + $0x10] sm:$0xff]
          %v1302 = vld [vmem:[#allocation2 + $0x18] sm:$0xff]
          %v1303 = vld [vmem:[#allocation2 + $0x20] sm:$0xff]
          %v1304 = vld [vmem:[#allocation2 + $0x28] sm:$0xff]
          %v1305 = vld [vmem:[#allocation2 + $0x30] sm:$0xff]
          %v1306 = vld [vmem:[#allocation2 + $0x38] sm:$0xff]
          %v1307 = vld [vmem:[#allocation2 + $0x40] sm:$0xff]
          %v1308 = vld [vmem:[#allocation2 + $0x48] sm:$0xff]
          %v1309 = vld [vmem:[#allocation2 + $0x50] sm:$0xff]
          %v1310 = vld [vmem:[#allocation2 + $0x58] sm:$0xff]
          %v1311 = vld [vmem:[#allocation2 + $0x60] sm:$0xff]
          %v1312 = vld [vmem:[#allocation2 + $0x68] sm:$0xff]
          %v1313 = vld [vmem:[#allocation2 + $0x70] sm:$0xff]
          %v1314 = vld [vmem:[#allocation2 + $0x78] sm:$0xff]
          %v1315 = vld [vmem:[#allocation2 + $0x80] sm:$0xff]
          %v1316 = vld [vmem:[#allocation2 + $0x88] sm:$0xff]
          %v1317 = vld [vmem:[#allocation2 + $0x90] sm:$0xff]
          %v1318 = vld [vmem:[#allocation2 + $0x98] sm:$0xff]
          %v1319 = vld [vmem:[#allocation2 + $0xa0] sm:$0xff]
          %v1320 = vld [vmem:[#allocation2 + $0xa8] sm:$0xff]
          %v1321 = vld [vmem:[#allocation2 + $0xb0] sm:$0xff]
          %v1322 = vld [vmem:[#allocation2 + $0xb8] sm:$0xff]
          %v1323 = vld [vmem:[#allocation2 + $0xc0] sm:$0xff]
          %v1324 = vld [vmem:[#allocation2 + $0xc8] sm:$0xff]
          %v1325 = vld [vmem:[#allocation2 + $0xd0] sm:$0xff]
          %v1326 = vld [vmem:[#allocation2 + $0xd8] sm:$0xff]
          %v1327 = vld [vmem:[#allocation2 + $0xe0] sm:$0xff]
          %v1328 = vld [vmem:[#allocation2 + $0xe8] sm:$0xff]
          %v1329 = vld [vmem:[#allocation2 + $0xf0] sm:$0xff]
          %v1330 = vld [vmem:[#allocation2 + $0xf8] sm:$0xff]
          %v1331 = vld [vmem:[#allocation2 + $0x100] sm:$0xff]
          %v1332 = vld [vmem:[#allocation2 + $0x108] sm:$0xff]
          %v1333 = vld [vmem:[#allocation2 + $0x110] sm:$0xff]
          %v1334 = vld [vmem:[#allocation2 + $0x118] sm:$0xff]
          %v1335 = vld [vmem:[#allocation2 + $0x120] sm:$0xff]
          %v1336 = vld [vmem:[#allocation2 + $0x128] sm:$0xff]
          %v1337 = vld [vmem:[#allocation2 + $0x130] sm:$0xff]
          %v1338 = vld [vmem:[#allocation2 + $0x138] sm:$0xff]
          %v1339 = vld [vmem:[#allocation2 + $0x140] sm:$0xff]
          %v1340 = vld [vmem:[#allocation2 + $0x148] sm:$0xff]
          %v1341 = vld [vmem:[#allocation2 + $0x150] sm:$0xff]
          %v1342 = vld [vmem:[#allocation2 + $0x158] sm:$0xff]
          %v1343 = vld [vmem:[#allocation2 + $0x160] sm:$0xff]
          %v1344 = vld [vmem:[#allocation2 + $0x168] sm:$0xff]
          %v1345 = vld [vmem:[#allocation2 + $0x170] sm:$0xff]
          %v1346 = vld [vmem:[#allocation2 + $0x178] sm:$0xff]
          %v1347 = vld [vmem:[#allocation2 + $0x180] sm:$0xff]
          %v1348 = vld [vmem:[#allocation2 + $0x188] sm:$0xff]
          %v1349 = vld [vmem:[#allocation2 + $0x190] sm:$0xff]
          %v1350 = vld [vmem:[#allocation2 + $0x198] sm:$0xff]
          %v1351 = vld [vmem:[#allocation2 + $0x1a0] sm:$0xff]
          %v1352 = vld [vmem:[#allocation2 + $0x1a8] sm:$0xff]
          %v1353 = vld [vmem:[#allocation2 + $0x1b0] sm:$0xff]
          %v1354 = vld [vmem:[#allocation2 + $0x1b8] sm:$0xff]
          %v1355 = vld [vmem:[#allocation2 + $0x1c0] sm:$0xff]
          %v1356 = vld [vmem:[#allocation2 + $0x1c8] sm:$0xff]
          %v1357 = vld [vmem:[#allocation2 + $0x1d0] sm:$0xff]
          %v1358 = vld [vmem:[#allocation2 + $0x1d8] sm:$0xff]
          %v1359 = vld [vmem:[#allocation2 + $0x1e0] sm:$0xff]
          %v1360 = vld [vmem:[#allocation2 + $0x1e8] sm:$0xff]
          %v1361 = vld [vmem:[#allocation2 + $0x1f0] sm:$0xff]
          %v1362 = vld [vmem:[#allocation2 + $0x1f8] sm:$0xff]
          %v1363 = vmul.f32 %v1299, 0.5
          %v1364 = vmul.f32 %v1300, 0.5
          %v1365 = vmul.f32 %v1301, 0.5
          %v1366 = vmul.f32 %v1302, 0.5
          %v1367 = vmul.f32 %v1303, 0.5
          %v1368 = vmul.f32 %v1304, 0.5
          %v1369 = vmul.f32 %v1305, 0.5
          %v1370 = vmul.f32 %v1306, 0.5
          %v1371 = vmul.f32 %v1307, 0.5
          %v1372 = vmul.f32 %v1308, 0.5
          %v1373 = vmul.f32 %v1309, 0.5
          %v1374 = vmul.f32 %v1310, 0.5
          %v1375 = vmul.f32 %v1311, 0.5
          %v1376 = vmul.f32 %v1312, 0.5
          %v1377 = vmul.f32 %v1313, 0.5
          %v1378 = vmul.f32 %v1314, 0.5
          %v1379 = vmul.f32 %v1315, 0.5
          %v1380 = vmul.f32 %v1316, 0.5
          %v1381 = vmul.f32 %v1317, 0.5
          %v1382 = vmul.f32 %v1318, 0.5
          %v1383 = vmul.f32 %v1319, 0.5
          %v1384 = vmul.f32 %v1320, 0.5
          %v1385 = vmul.f32 %v1321, 0.5
          %v1386 = vmul.f32 %v1322, 0.5
          %v1387 = vmul.f32 %v1323, 0.5
          %v1388 = vmul.f32 %v1324, 0.5
          %v1389 = vmul.f32 %v1325, 0.5
          %v1390 = vmul.f32 %v1326, 0.5
          %v1391 = vmul.f32 %v1327, 0.5
          %v1392 = vmul.f32 %v1328, 0.5
          %v1393 = vmul.f32 %v1329, 0.5
          %v1394 = vmul.f32 %v1330, 0.5
          %v1395 = vmul.f32 %v1331, 0.5
          %v1396 = vmul.f32 %v1332, 0.5
          %v1397 = vmul.f32 %v1333, 0.5
          %v1398 = vmul.f32 %v1334, 0.5
          %v1399 = vmul.f32 %v1335, 0.5
          %v1400 = vmul.f32 %v1336, 0.5
          %v1401 = vmul.f32 %v1337, 0.5
          %v1402 = vmul.f32 %v1338, 0.5
          %v1403 = vmul.f32 %v1339, 0.5
          %v1404 = vmul.f32 %v1340, 0.5
          %v1405 = vmul.f32 %v1341, 0.5
          %v1406 = vmul.f32 %v1342, 0.5
          %v1407 = vmul.f32 %v1343, 0.5
          %v1408 = vmul.f32 %v1344, 0.5
          %v1409 = vmul.f32 %v1345, 0.5
          %v1410 = vmul.f32 %v1346, 0.5
          %v1411 = vmul.f32 %v1347, 0.5
          %v1412 = vmul.f32 %v1348, 0.5
          %v1413 = vmul.f32 %v1349, 0.5
          %v1414 = vmul.f32 %v1350, 0.5
          %v1415 = vmul.f32 %v1351, 0.5
          %v1416 = vmul.f32 %v1352, 0.5
          %v1417 = vmul.f32 %v1353, 0.5
          %v1418 = vmul.f32 %v1354, 0.5
          %v1419 = vmul.f32 %v1355, 0.5
          %v1420 = vmul.f32 %v1356, 0.5
          %v1421 = vmul.f32 %v1357, 0.5
          %v1422 = vmul.f32 %v1358, 0.5
          %v1423 = vmul.f32 %v1359, 0.5
          %v1424 = vmul.f32 %v1360, 0.5
          %v1425 = vmul.f32 %v1361, 0.5
          %v1426 = vmul.f32 %v1362, 0.5
          %v1427 = vmul.f32 %v1299, 0.70710677
          %v1428 = vmul.f32 %v1300, 0.70710677
          %v1429 = vmul.f32 %v1301, 0.70710677
          %v1430 = vmul.f32 %v1302, 0.70710677
          %v1431 = vmul.f32 %v1303, 0.70710677
          %v1432 = vmul.f32 %v1304, 0.70710677
          %v1433 = vmul.f32 %v1305, 0.70710677
          %v1434 = vmul.f32 %v1306, 0.70710677
          %v1435 = vmul.f32 %v1307, 0.70710677
          %v1436 = vmul.f32 %v1308, 0.70710677
          %v1437 = vmul.f32 %v1309, 0.70710677
          %v1438 = vmul.f32 %v1310, 0.70710677
          %v1439 = vmul.f32 %v1311, 0.70710677
          %v1440 = vmul.f32 %v1312, 0.70710677
          %v1441 = vmul.f32 %v1313, 0.70710677
          %v1442 = vmul.f32 %v1314, 0.70710677
          %v1443 = vmul.f32 %v1315, 0.70710677
          %v1444 = vmul.f32 %v1316, 0.70710677
          %v1445 = vmul.f32 %v1317, 0.70710677
          %v1446 = vmul.f32 %v1318, 0.70710677
          %v1447 = vmul.f32 %v1319, 0.70710677
          %v1448 = vmul.f32 %v1320, 0.70710677
          %v1449 = vmul.f32 %v1321, 0.70710677
          %v1450 = vmul.f32 %v1322, 0.70710677
          %v1451 = vmul.f32 %v1323, 0.70710677
          %v1452 = vmul.f32 %v1324, 0.70710677
          %v1453 = vmul.f32 %v1325, 0.70710677
          %v1454 = vmul.f32 %v1326, 0.70710677
          %v1455 = vmul.f32 %v1327, 0.70710677
          %v1456 = vmul.f32 %v1328, 0.70710677
          %v1457 = vmul.f32 %v1329, 0.70710677
          %v1458 = vmul.f32 %v1330, 0.70710677
          %v1459 = vmul.f32 %v1331, 0.70710677
          %v1460 = vmul.f32 %v1332, 0.70710677
          %v1461 = vmul.f32 %v1333, 0.70710677
          %v1462 = vmul.f32 %v1334, 0.70710677
          %v1463 = vmul.f32 %v1335, 0.70710677
          %v1464 = vmul.f32 %v1336, 0.70710677
          %v1465 = vmul.f32 %v1337, 0.70710677
          %v1466 = vmul.f32 %v1338, 0.70710677
          %v1467 = vmul.f32 %v1339, 0.70710677
          %v1468 = vmul.f32 %v1340, 0.70710677
          %v1469 = vmul.f32 %v1341, 0.70710677
          %v1470 = vmul.f32 %v1342, 0.70710677
          %v1471 = vmul.f32 %v1343, 0.70710677
          %v1472 = vmul.f32 %v1344, 0.70710677
          %v1473 = vmul.f32 %v1345, 0.70710677
          %v1474 = vmul.f32 %v1346, 0.70710677
          %v1475 = vmul.f32 %v1347, 0.70710677
          %v1476 = vmul.f32 %v1348, 0.70710677
          %v1477 = vmul.f32 %v1349, 0.70710677
          %v1478 = vmul.f32 %v1350, 0.70710677
          %v1479 = vmul.f32 %v1351, 0.70710677
          %v1480 = vmul.f32 %v1352, 0.70710677
          %v1481 = vmul.f32 %v1353, 0.70710677
          %v1482 = vmul.f32 %v1354, 0.70710677
          %v1483 = vmul.f32 %v1355, 0.70710677
          %v1484 = vmul.f32 %v1356, 0.70710677
          %v1485 = vmul.f32 %v1357, 0.70710677
          %v1486 = vmul.f32 %v1358, 0.70710677
          %v1487 = vmul.f32 %v1359, 0.70710677
          %v1488 = vmul.f32 %v1360, 0.70710677
          %v1489 = vmul.f32 %v1361, 0.70710677
          %v1490 = vmul.f32 %v1362, 0.70710677
          %v1491 = vmul.f32 %v1427, %v1427
          %v1492 = vmin.f32 16.0, %v1491
          %v1493 = vmul.f32 %v1492, 2.1237322e-06
          %v1494 = vadd.f32 %v1493, 0.00028619796
          %v1495 = vmul.f32 %v1492, %v1494
          %v1496 = vadd.f32 %v1495, 0.0036580483
          %v1497 = vmul.f32 %v1492, %v1496
          %v1498 = vadd.f32 %v1497, 0.05243302
          %v1499 = vmul.f32 %v1492, %v1498
          %v1500 = vadd.f32 %v1499, 0.18741608
          %v1501 = vmul.f32 %v1492, %v1500
          %v1502 = vadd.f32 %v1501, 1.1283791
          %v1503 = vmul.f32 %v1427, %v1502
          %v1504 = vmul.f32 %v1492, 3.8918573e-05
          %v1505 = vadd.f32 %v1504, 0.001143296
          %v1506 = vmul.f32 %v1492, %v1505
          %v1507 = vadd.f32 %v1506, 0.014752088
          %v1508 = vmul.f32 %v1492, %v1507
          %v1509 = vadd.f32 %v1508, 0.112945676
          %v1510 = vmul.f32 %v1492, %v1509
          %v1511 = vadd.f32 %v1510, 0.4994258
          %v1512 = vmul.f32 %v1492, %v1511
          %v1513 = vadd.f32 %v1512, 1.0
          %v1514 = vrcp.pop %v1513
          %v1515 = vmul.f32 %v1513, %v1514
          %v1516 = vsub.f32 1.0, %v1515
          %v1517 = vmul.f32 %v1514, %v1516
          %v1518 = vadd.f32 %v1514, %v1517
          %vm1519 = vweird.f32 %v1513
          %vm1520 = vweird.f32 %v1514
          %vm1521 = vmor %vm1519, %vm1520
          %v1522 = vsel %vm1521, %v1514, %v1518
          %v1523 = vand.u32 2147483647, %v1513
          %vm1524 = vcmp.eq.f32.partialorder %v1523, 8.507059e+37
          %v1525 = vand.u32 %v1513, 2147483648
          %v1526 = vor.u32 1.1754944e-38, %v1525
          %v1527 = vsel %vm1524, %v1526, %v1522
          %v1528 = vmul.f32 %v1503, %v1527
          %v1529 = vmin.f32 %v1528, 1.0
          %v1530 = vmax.f32 %v1529, -1.0
          %v1531 = vmul.f32 %v1428, %v1428
          %v1532 = vmin.f32 16.0, %v1531
          %v1533 = vmul.f32 %v1532, 2.1237322e-06
          %v1534 = vadd.f32 %v1533, 0.00028619796
          %v1535 = vmul.f32 %v1532, %v1534
          %v1536 = vadd.f32 %v1535, 0.0036580483
          %v1537 = vmul.f32 %v1532, %v1536
          %v1538 = vadd.f32 %v1537, 0.05243302
          %v1539 = vmul.f32 %v1532, %v1538
          %v1540 = vadd.f32 %v1539, 0.18741608
          %v1541 = vmul.f32 %v1532, %v1540
          %v1542 = vadd.f32 %v1541, 1.1283791
          %v1543 = vmul.f32 %v1428, %v1542
          %v1544 = vmul.f32 %v1532, 3.8918573e-05
          %v1545 = vadd.f32 %v1544, 0.001143296
          %v1546 = vmul.f32 %v1532, %v1545
          %v1547 = vadd.f32 %v1546, 0.014752088
          %v1548 = vmul.f32 %v1532, %v1547
          %v1549 = vadd.f32 %v1548, 0.112945676
          %v1550 = vmul.f32 %v1532, %v1549
          %v1551 = vadd.f32 %v1550, 0.4994258
          %v1552 = vmul.f32 %v1532, %v1551
          %v1553 = vadd.f32 %v1552, 1.0
          %v1554 = vrcp.pop %v1553
          %v1555 = vmul.f32 %v1553, %v1554
          %v1556 = vsub.f32 1.0, %v1555
          %v1557 = vmul.f32 %v1554, %v1556
          %v1558 = vadd.f32 %v1554, %v1557
          %vm1559 = vweird.f32 %v1553
          %vm1560 = vweird.f32 %v1554
          %vm1561 = vmor %vm1559, %vm1560
          %v1562 = vsel %vm1561, %v1554, %v1558
          %v1563 = vand.u32 2147483647, %v1553
          %vm1564 = vcmp.eq.f32.partialorder %v1563, 8.507059e+37
          %v1565 = vand.u32 %v1553, 2147483648
          %v1566 = vor.u32 1.1754944e-38, %v1565
          %v1567 = vsel %vm1564, %v1566, %v1562
          %v1568 = vmul.f32 %v1543, %v1567
          %v1569 = vmin.f32 %v1568, 1.0
          %v1570 = vmax.f32 %v1569, -1.0
          %v1571 = vmul.f32 %v1429, %v1429
          %v1572 = vmin.f32 16.0, %v1571
          %v1573 = vmul.f32 %v1572, 2.1237322e-06
          %v1574 = vadd.f32 %v1573, 0.00028619796
          %v1575 = vmul.f32 %v1572, %v1574
          %v1576 = vadd.f32 %v1575, 0.0036580483
          %v1577 = vmul.f32 %v1572, %v1576
          %v1578 = vadd.f32 %v1577, 0.05243302
          %v1579 = vmul.f32 %v1572, %v1578
          %v1580 = vadd.f32 %v1579, 0.18741608
          %v1581 = vmul.f32 %v1572, %v1580
          %v1582 = vadd.f32 %v1581, 1.1283791
          %v1583 = vmul.f32 %v1429, %v1582
          %v1584 = vmul.f32 %v1572, 3.8918573e-05
          %v1585 = vadd.f32 %v1584, 0.001143296
          %v1586 = vmul.f32 %v1572, %v1585
          %v1587 = vadd.f32 %v1586, 0.014752088
          %v1588 = vmul.f32 %v1572, %v1587
          %v1589 = vadd.f32 %v1588, 0.112945676
          %v1590 = vmul.f32 %v1572, %v1589
          %v1591 = vadd.f32 %v1590, 0.4994258
          %v1592 = vmul.f32 %v1572, %v1591
          %v1593 = vadd.f32 %v1592, 1.0
          %v1594 = vrcp.pop %v1593
          %v1595 = vmul.f32 %v1593, %v1594
          %v1596 = vsub.f32 1.0, %v1595
          %v1597 = vmul.f32 %v1594, %v1596
          %v1598 = vadd.f32 %v1594, %v1597
          %vm1599 = vweird.f32 %v1593
          %vm1600 = vweird.f32 %v1594
          %vm1601 = vmor %vm1599, %vm1600
          %v1602 = vsel %vm1601, %v1594, %v1598
          %v1603 = vand.u32 2147483647, %v1593
          %vm1604 = vcmp.eq.f32.partialorder %v1603, 8.507059e+37
          %v1605 = vand.u32 %v1593, 2147483648
          %v1606 = vor.u32 1.1754944e-38, %v1605
          %v1607 = vsel %vm1604, %v1606, %v1602
          %v1608 = vmul.f32 %v1583, %v1607
          %v1609 = vmin.f32 %v1608, 1.0
          %v1610 = vmax.f32 %v1609, -1.0
          %v1611 = vmul.f32 %v1430, %v1430
          %v1612 = vmin.f32 16.0, %v1611
          %v1613 = vmul.f32 %v1612, 2.1237322e-06
          %v1614 = vadd.f32 %v1613, 0.00028619796
          %v1615 = vmul.f32 %v1612, %v1614
          %v1616 = vadd.f32 %v1615, 0.0036580483
          %v1617 = vmul.f32 %v1612, %v1616
          %v1618 = vadd.f32 %v1617, 0.05243302
          %v1619 = vmul.f32 %v1612, %v1618
          %v1620 = vadd.f32 %v1619, 0.18741608
          %v1621 = vmul.f32 %v1612, %v1620
          %v1622 = vadd.f32 %v1621, 1.1283791
          %v1623 = vmul.f32 %v1430, %v1622
          %v1624 = vmul.f32 %v1612, 3.8918573e-05
          %v1625 = vadd.f32 %v1624, 0.001143296
          %v1626 = vmul.f32 %v1612, %v1625
          %v1627 = vadd.f32 %v1626, 0.014752088
          %v1628 = vmul.f32 %v1612, %v1627
          %v1629 = vadd.f32 %v1628, 0.112945676
          %v1630 = vmul.f32 %v1612, %v1629
          %v1631 = vadd.f32 %v1630, 0.4994258
          %v1632 = vmul.f32 %v1612, %v1631
          %v1633 = vadd.f32 %v1632, 1.0
          %v1634 = vrcp.pop %v1633
          %v1635 = vmul.f32 %v1633, %v1634
          %v1636 = vsub.f32 1.0, %v1635
          %v1637 = vmul.f32 %v1634, %v1636
          %v1638 = vadd.f32 %v1634, %v1637
          %vm1639 = vweird.f32 %v1633
          %vm1640 = vweird.f32 %v1634
          %vm1641 = vmor %vm1639, %vm1640
          %v1642 = vsel %vm1641, %v1634, %v1638
          %v1643 = vand.u32 2147483647, %v1633
          %vm1644 = vcmp.eq.f32.partialorder %v1643, 8.507059e+37
          %v1645 = vand.u32 %v1633, 2147483648
          %v1646 = vor.u32 1.1754944e-38, %v1645
          %v1647 = vsel %vm1644, %v1646, %v1642
          %v1648 = vmul.f32 %v1623, %v1647
          %v1649 = vmin.f32 %v1648, 1.0
          %v1650 = vmax.f32 %v1649, -1.0
          %v1651 = vmul.f32 %v1431, %v1431
          %v1652 = vmin.f32 16.0, %v1651
          %v1653 = vmul.f32 %v1652, 2.1237322e-06
          %v1654 = vadd.f32 %v1653, 0.00028619796
          %v1655 = vmul.f32 %v1652, %v1654
          %v1656 = vadd.f32 %v1655, 0.0036580483
          %v1657 = vmul.f32 %v1652, %v1656
          %v1658 = vadd.f32 %v1657, 0.05243302
          %v1659 = vmul.f32 %v1652, %v1658
          %v1660 = vadd.f32 %v1659, 0.18741608
          %v1661 = vmul.f32 %v1652, %v1660
          %v1662 = vadd.f32 %v1661, 1.1283791
          %v1663 = vmul.f32 %v1431, %v1662
          %v1664 = vmul.f32 %v1652, 3.8918573e-05
          %v1665 = vadd.f32 %v1664, 0.001143296
          %v1666 = vmul.f32 %v1652, %v1665
          %v1667 = vadd.f32 %v1666, 0.014752088
          %v1668 = vmul.f32 %v1652, %v1667
          %v1669 = vadd.f32 %v1668, 0.112945676
          %v1670 = vmul.f32 %v1652, %v1669
          %v1671 = vadd.f32 %v1670, 0.4994258
          %v1672 = vmul.f32 %v1652, %v1671
          %v1673 = vadd.f32 %v1672, 1.0
          %v1674 = vrcp.pop %v1673
          %v1675 = vmul.f32 %v1673, %v1674
          %v1676 = vsub.f32 1.0, %v1675
          %v1677 = vmul.f32 %v1674, %v1676
          %v1678 = vadd.f32 %v1674, %v1677
          %vm1679 = vweird.f32 %v1673
          %vm1680 = vweird.f32 %v1674
          %vm1681 = vmor %vm1679, %vm1680
          %v1682 = vsel %vm1681, %v1674, %v1678
          %v1683 = vand.u32 2147483647, %v1673
          %vm1684 = vcmp.eq.f32.partialorder %v1683, 8.507059e+37
          %v1685 = vand.u32 %v1673, 2147483648
          %v1686 = vor.u32 1.1754944e-38, %v1685
          %v1687 = vsel %vm1684, %v1686, %v1682
          %v1688 = vmul.f32 %v1663, %v1687
          %v1689 = vmin.f32 %v1688, 1.0
          %v1690 = vmax.f32 %v1689, -1.0
          %v1691 = vmul.f32 %v1432, %v1432
          %v1692 = vmin.f32 16.0, %v1691
          %v1693 = vmul.f32 %v1692, 2.1237322e-06
          %v1694 = vadd.f32 %v1693, 0.00028619796
          %v1695 = vmul.f32 %v1692, %v1694
          %v1696 = vadd.f32 %v1695, 0.0036580483
          %v1697 = vmul.f32 %v1692, %v1696
          %v1698 = vadd.f32 %v1697, 0.05243302
          %v1699 = vmul.f32 %v1692, %v1698
          %v1700 = vadd.f32 %v1699, 0.18741608
          %v1701 = vmul.f32 %v1692, %v1700
          %v1702 = vadd.f32 %v1701, 1.1283791
          %v1703 = vmul.f32 %v1432, %v1702
          %v1704 = vmul.f32 %v1692, 3.8918573e-05
          %v1705 = vadd.f32 %v1704, 0.001143296
          %v1706 = vmul.f32 %v1692, %v1705
          %v1707 = vadd.f32 %v1706, 0.014752088
          %v1708 = vmul.f32 %v1692, %v1707
          %v1709 = vadd.f32 %v1708, 0.112945676
          %v1710 = vmul.f32 %v1692, %v1709
          %v1711 = vadd.f32 %v1710, 0.4994258
          %v1712 = vmul.f32 %v1692, %v1711
          %v1713 = vadd.f32 %v1712, 1.0
          %v1714 = vrcp.pop %v1713
          %v1715 = vmul.f32 %v1713, %v1714
          %v1716 = vsub.f32 1.0, %v1715
          %v1717 = vmul.f32 %v1714, %v1716
          %v1718 = vadd.f32 %v1714, %v1717
          %vm1719 = vweird.f32 %v1713
          %vm1720 = vweird.f32 %v1714
          %vm1721 = vmor %vm1719, %vm1720
          %v1722 = vsel %vm1721, %v1714, %v1718
          %v1723 = vand.u32 2147483647, %v1713
          %vm1724 = vcmp.eq.f32.partialorder %v1723, 8.507059e+37
          %v1725 = vand.u32 %v1713, 2147483648
          %v1726 = vor.u32 1.1754944e-38, %v1725
          %v1727 = vsel %vm1724, %v1726, %v1722
          %v1728 = vmul.f32 %v1703, %v1727
          %v1729 = vmin.f32 %v1728, 1.0
          %v1730 = vmax.f32 %v1729, -1.0
          %v1731 = vmul.f32 %v1433, %v1433
          %v1732 = vmin.f32 16.0, %v1731
          %v1733 = vmul.f32 %v1732, 2.1237322e-06
          %v1734 = vadd.f32 %v1733, 0.00028619796
          %v1735 = vmul.f32 %v1732, %v1734
          %v1736 = vadd.f32 %v1735, 0.0036580483
          %v1737 = vmul.f32 %v1732, %v1736
          %v1738 = vadd.f32 %v1737, 0.05243302
          %v1739 = vmul.f32 %v1732, %v1738
          %v1740 = vadd.f32 %v1739, 0.18741608
          %v1741 = vmul.f32 %v1732, %v1740
          %v1742 = vadd.f32 %v1741, 1.1283791
          %v1743 = vmul.f32 %v1433, %v1742
          %v1744 = vmul.f32 %v1732, 3.8918573e-05
          %v1745 = vadd.f32 %v1744, 0.001143296
          %v1746 = vmul.f32 %v1732, %v1745
          %v1747 = vadd.f32 %v1746, 0.014752088
          %v1748 = vmul.f32 %v1732, %v1747
          %v1749 = vadd.f32 %v1748, 0.112945676
          %v1750 = vmul.f32 %v1732, %v1749
          %v1751 = vadd.f32 %v1750, 0.4994258
          %v1752 = vmul.f32 %v1732, %v1751
          %v1753 = vadd.f32 %v1752, 1.0
          %v1754 = vrcp.pop %v1753
          %v1755 = vmul.f32 %v1753, %v1754
          %v1756 = vsub.f32 1.0, %v1755
          %v1757 = vmul.f32 %v1754, %v1756
          %v1758 = vadd.f32 %v1754, %v1757
          %vm1759 = vweird.f32 %v1753
          %vm1760 = vweird.f32 %v1754
          %vm1761 = vmor %vm1759, %vm1760
          %v1762 = vsel %vm1761, %v1754, %v1758
          %v1763 = vand.u32 2147483647, %v1753
          %vm1764 = vcmp.eq.f32.partialorder %v1763, 8.507059e+37
          %v1765 = vand.u32 %v1753, 2147483648
          %v1766 = vor.u32 1.1754944e-38, %v1765
          %v1767 = vsel %vm1764, %v1766, %v1762
          %v1768 = vmul.f32 %v1743, %v1767
          %v1769 = vmin.f32 %v1768, 1.0
          %v1770 = vmax.f32 %v1769, -1.0
          %v1771 = vmul.f32 %v1434, %v1434
          %v1772 = vmin.f32 16.0, %v1771
          %v1773 = vmul.f32 %v1772, 2.1237322e-06
          %v1774 = vadd.f32 %v1773, 0.00028619796
          %v1775 = vmul.f32 %v1772, %v1774
          %v1776 = vadd.f32 %v1775, 0.0036580483
          %v1777 = vmul.f32 %v1772, %v1776
          %v1778 = vadd.f32 %v1777, 0.05243302
          %v1779 = vmul.f32 %v1772, %v1778
          %v1780 = vadd.f32 %v1779, 0.18741608
          %v1781 = vmul.f32 %v1772, %v1780
          %v1782 = vadd.f32 %v1781, 1.1283791
          %v1783 = vmul.f32 %v1434, %v1782
          %v1784 = vmul.f32 %v1772, 3.8918573e-05
          %v1785 = vadd.f32 %v1784, 0.001143296
          %v1786 = vmul.f32 %v1772, %v1785
          %v1787 = vadd.f32 %v1786, 0.014752088
          %v1788 = vmul.f32 %v1772, %v1787
          %v1789 = vadd.f32 %v1788, 0.112945676
          %v1790 = vmul.f32 %v1772, %v1789
          %v1791 = vadd.f32 %v1790, 0.4994258
          %v1792 = vmul.f32 %v1772, %v1791
          %v1793 = vadd.f32 %v1792, 1.0
          %v1794 = vrcp.pop %v1793
          %v1795 = vmul.f32 %v1793, %v1794
          %v1796 = vsub.f32 1.0, %v1795
          %v1797 = vmul.f32 %v1794, %v1796
          %v1798 = vadd.f32 %v1794, %v1797
          %vm1799 = vweird.f32 %v1793
          %vm1800 = vweird.f32 %v1794
          %vm1801 = vmor %vm1799, %vm1800
          %v1802 = vsel %vm1801, %v1794, %v1798
          %v1803 = vand.u32 2147483647, %v1793
          %vm1804 = vcmp.eq.f32.partialorder %v1803, 8.507059e+37
          %v1805 = vand.u32 %v1793, 2147483648
          %v1806 = vor.u32 1.1754944e-38, %v1805
          %v1807 = vsel %vm1804, %v1806, %v1802
          %v1808 = vmul.f32 %v1783, %v1807
          %v1809 = vmin.f32 %v1808, 1.0
          %v1810 = vmax.f32 %v1809, -1.0
          %v1811 = vmul.f32 %v1435, %v1435
          %v1812 = vmin.f32 16.0, %v1811
          %v1813 = vmul.f32 %v1812, 2.1237322e-06
          %v1814 = vadd.f32 %v1813, 0.00028619796
          %v1815 = vmul.f32 %v1812, %v1814
          %v1816 = vadd.f32 %v1815, 0.0036580483
          %v1817 = vmul.f32 %v1812, %v1816
          %v1818 = vadd.f32 %v1817, 0.05243302
          %v1819 = vmul.f32 %v1812, %v1818
          %v1820 = vadd.f32 %v1819, 0.18741608
          %v1821 = vmul.f32 %v1812, %v1820
          %v1822 = vadd.f32 %v1821, 1.1283791
          %v1823 = vmul.f32 %v1435, %v1822
          %v1824 = vmul.f32 %v1812, 3.8918573e-05
          %v1825 = vadd.f32 %v1824, 0.001143296
          %v1826 = vmul.f32 %v1812, %v1825
          %v1827 = vadd.f32 %v1826, 0.014752088
          %v1828 = vmul.f32 %v1812, %v1827
          %v1829 = vadd.f32 %v1828, 0.112945676
          %v1830 = vmul.f32 %v1812, %v1829
          %v1831 = vadd.f32 %v1830, 0.4994258
          %v1832 = vmul.f32 %v1812, %v1831
          %v1833 = vadd.f32 %v1832, 1.0
          %v1834 = vrcp.pop %v1833
          %v1835 = vmul.f32 %v1833, %v1834
          %v1836 = vsub.f32 1.0, %v1835
          %v1837 = vmul.f32 %v1834, %v1836
          %v1838 = vadd.f32 %v1834, %v1837
          %vm1839 = vweird.f32 %v1833
          %vm1840 = vweird.f32 %v1834
          %vm1841 = vmor %vm1839, %vm1840
          %v1842 = vsel %vm1841, %v1834, %v1838
          %v1843 = vand.u32 2147483647, %v1833
          %vm1844 = vcmp.eq.f32.partialorder %v1843, 8.507059e+37
          %v1845 = vand.u32 %v1833, 2147483648
          %v1846 = vor.u32 1.1754944e-38, %v1845
          %v1847 = vsel %vm1844, %v1846, %v1842
          %v1848 = vmul.f32 %v1823, %v1847
          %v1849 = vmin.f32 %v1848, 1.0
          %v1850 = vmax.f32 %v1849, -1.0
          %v1851 = vmul.f32 %v1436, %v1436
          %v1852 = vmin.f32 16.0, %v1851
          %v1853 = vmul.f32 %v1852, 2.1237322e-06
          %v1854 = vadd.f32 %v1853, 0.00028619796
          %v1855 = vmul.f32 %v1852, %v1854
          %v1856 = vadd.f32 %v1855, 0.0036580483
          %v1857 = vmul.f32 %v1852, %v1856
          %v1858 = vadd.f32 %v1857, 0.05243302
          %v1859 = vmul.f32 %v1852, %v1858
          %v1860 = vadd.f32 %v1859, 0.18741608
          %v1861 = vmul.f32 %v1852, %v1860
          %v1862 = vadd.f32 %v1861, 1.1283791
          %v1863 = vmul.f32 %v1436, %v1862
          %v1864 = vmul.f32 %v1852, 3.8918573e-05
          %v1865 = vadd.f32 %v1864, 0.001143296
          %v1866 = vmul.f32 %v1852, %v1865
          %v1867 = vadd.f32 %v1866, 0.014752088
          %v1868 = vmul.f32 %v1852, %v1867
          %v1869 = vadd.f32 %v1868, 0.112945676
          %v1870 = vmul.f32 %v1852, %v1869
          %v1871 = vadd.f32 %v1870, 0.4994258
          %v1872 = vmul.f32 %v1852, %v1871
          %v1873 = vadd.f32 %v1872, 1.0
          %v1874 = vrcp.pop %v1873
          %v1875 = vmul.f32 %v1873, %v1874
          %v1876 = vsub.f32 1.0, %v1875
          %v1877 = vmul.f32 %v1874, %v1876
          %v1878 = vadd.f32 %v1874, %v1877
          %vm1879 = vweird.f32 %v1873
          %vm1880 = vweird.f32 %v1874
          %vm1881 = vmor %vm1879, %vm1880
          %v1882 = vsel %vm1881, %v1874, %v1878
          %v1883 = vand.u32 2147483647, %v1873
          %vm1884 = vcmp.eq.f32.partialorder %v1883, 8.507059e+37
          %v1885 = vand.u32 %v1873, 2147483648
          %v1886 = vor.u32 1.1754944e-38, %v1885
          %v1887 = vsel %vm1884, %v1886, %v1882
          %v1888 = vmul.f32 %v1863, %v1887
          %v1889 = vmin.f32 %v1888, 1.0
          %v1890 = vmax.f32 %v1889, -1.0
          %v1891 = vmul.f32 %v1437, %v1437
          %v1892 = vmin.f32 16.0, %v1891
          %v1893 = vmul.f32 %v1892, 2.1237322e-06
          %v1894 = vadd.f32 %v1893, 0.00028619796
          %v1895 = vmul.f32 %v1892, %v1894
          %v1896 = vadd.f32 %v1895, 0.0036580483
          %v1897 = vmul.f32 %v1892, %v1896
          %v1898 = vadd.f32 %v1897, 0.05243302
          %v1899 = vmul.f32 %v1892, %v1898
          %v1900 = vadd.f32 %v1899, 0.18741608
          %v1901 = vmul.f32 %v1892, %v1900
          %v1902 = vadd.f32 %v1901, 1.1283791
          %v1903 = vmul.f32 %v1437, %v1902
          %v1904 = vmul.f32 %v1892, 3.8918573e-05
          %v1905 = vadd.f32 %v1904, 0.001143296
          %v1906 = vmul.f32 %v1892, %v1905
          %v1907 = vadd.f32 %v1906, 0.014752088
          %v1908 = vmul.f32 %v1892, %v1907
          %v1909 = vadd.f32 %v1908, 0.112945676
          %v1910 = vmul.f32 %v1892, %v1909
          %v1911 = vadd.f32 %v1910, 0.4994258
          %v1912 = vmul.f32 %v1892, %v1911
          %v1913 = vadd.f32 %v1912, 1.0
          %v1914 = vrcp.pop %v1913
          %v1915 = vmul.f32 %v1913, %v1914
          %v1916 = vsub.f32 1.0, %v1915
          %v1917 = vmul.f32 %v1914, %v1916
          %v1918 = vadd.f32 %v1914, %v1917
          %vm1919 = vweird.f32 %v1913
          %vm1920 = vweird.f32 %v1914
          %vm1921 = vmor %vm1919, %vm1920
          %v1922 = vsel %vm1921, %v1914, %v1918
          %v1923 = vand.u32 2147483647, %v1913
          %vm1924 = vcmp.eq.f32.partialorder %v1923, 8.507059e+37
          %v1925 = vand.u32 %v1913, 2147483648
          %v1926 = vor.u32 1.1754944e-38, %v1925
          %v1927 = vsel %vm1924, %v1926, %v1922
          %v1928 = vmul.f32 %v1903, %v1927
          %v1929 = vmin.f32 %v1928, 1.0
          %v1930 = vmax.f32 %v1929, -1.0
          %v1931 = vmul.f32 %v1438, %v1438
          %v1932 = vmin.f32 16.0, %v1931
          %v1933 = vmul.f32 %v1932, 2.1237322e-06
          %v1934 = vadd.f32 %v1933, 0.00028619796
          %v1935 = vmul.f32 %v1932, %v1934
          %v1936 = vadd.f32 %v1935, 0.0036580483
          %v1937 = vmul.f32 %v1932, %v1936
          %v1938 = vadd.f32 %v1937, 0.05243302
          %v1939 = vmul.f32 %v1932, %v1938
          %v1940 = vadd.f32 %v1939, 0.18741608
          %v1941 = vmul.f32 %v1932, %v1940
          %v1942 = vadd.f32 %v1941, 1.1283791
          %v1943 = vmul.f32 %v1438, %v1942
          %v1944 = vmul.f32 %v1932, 3.8918573e-05
          %v1945 = vadd.f32 %v1944, 0.001143296
          %v1946 = vmul.f32 %v1932, %v1945
          %v1947 = vadd.f32 %v1946, 0.014752088
          %v1948 = vmul.f32 %v1932, %v1947
          %v1949 = vadd.f32 %v1948, 0.112945676
          %v1950 = vmul.f32 %v1932, %v1949
          %v1951 = vadd.f32 %v1950, 0.4994258
          %v1952 = vmul.f32 %v1932, %v1951
          %v1953 = vadd.f32 %v1952, 1.0
          %v1954 = vrcp.pop %v1953
          %v1955 = vmul.f32 %v1953, %v1954
          %v1956 = vsub.f32 1.0, %v1955
          %v1957 = vmul.f32 %v1954, %v1956
          %v1958 = vadd.f32 %v1954, %v1957
          %vm1959 = vweird.f32 %v1953
          %vm1960 = vweird.f32 %v1954
          %vm1961 = vmor %vm1959, %vm1960
          %v1962 = vsel %vm1961, %v1954, %v1958
          %v1963 = vand.u32 2147483647, %v1953
          %vm1964 = vcmp.eq.f32.partialorder %v1963, 8.507059e+37
          %v1965 = vand.u32 %v1953, 2147483648
          %v1966 = vor.u32 1.1754944e-38, %v1965
          %v1967 = vsel %vm1964, %v1966, %v1962
          %v1968 = vmul.f32 %v1943, %v1967
          %v1969 = vmin.f32 %v1968, 1.0
          %v1970 = vmax.f32 %v1969, -1.0
          %v1971 = vmul.f32 %v1439, %v1439
          %v1972 = vmin.f32 16.0, %v1971
          %v1973 = vmul.f32 %v1972, 2.1237322e-06
          %v1974 = vadd.f32 %v1973, 0.00028619796
          %v1975 = vmul.f32 %v1972, %v1974
          %v1976 = vadd.f32 %v1975, 0.0036580483
          %v1977 = vmul.f32 %v1972, %v1976
          %v1978 = vadd.f32 %v1977, 0.05243302
          %v1979 = vmul.f32 %v1972, %v1978
          %v1980 = vadd.f32 %v1979, 0.18741608
          %v1981 = vmul.f32 %v1972, %v1980
          %v1982 = vadd.f32 %v1981, 1.1283791
          %v1983 = vmul.f32 %v1439, %v1982
          %v1984 = vmul.f32 %v1972, 3.8918573e-05
          %v1985 = vadd.f32 %v1984, 0.001143296
          %v1986 = vmul.f32 %v1972, %v1985
          %v1987 = vadd.f32 %v1986, 0.014752088
          %v1988 = vmul.f32 %v1972, %v1987
          %v1989 = vadd.f32 %v1988, 0.112945676
          %v1990 = vmul.f32 %v1972, %v1989
          %v1991 = vadd.f32 %v1990, 0.4994258
          %v1992 = vmul.f32 %v1972, %v1991
          %v1993 = vadd.f32 %v1992, 1.0
          %v1994 = vrcp.pop %v1993
          %v1995 = vmul.f32 %v1993, %v1994
          %v1996 = vsub.f32 1.0, %v1995
          %v1997 = vmul.f32 %v1994, %v1996
          %v1998 = vadd.f32 %v1994, %v1997
          %vm1999 = vweird.f32 %v1993
          %vm2000 = vweird.f32 %v1994
          %vm2001 = vmor %vm1999, %vm2000
          %v2002 = vsel %vm2001, %v1994, %v1998
          %v2003 = vand.u32 2147483647, %v1993
          %vm2004 = vcmp.eq.f32.partialorder %v2003, 8.507059e+37
          %v2005 = vand.u32 %v1993, 2147483648
          %v2006 = vor.u32 1.1754944e-38, %v2005
          %v2007 = vsel %vm2004, %v2006, %v2002
          %v2008 = vmul.f32 %v1983, %v2007
          %v2009 = vmin.f32 %v2008, 1.0
          %v2010 = vmax.f32 %v2009, -1.0
          %v2011 = vmul.f32 %v1440, %v1440
          %v2012 = vmin.f32 16.0, %v2011
          %v2013 = vmul.f32 %v2012, 2.1237322e-06
          %v2014 = vadd.f32 %v2013, 0.00028619796
          %v2015 = vmul.f32 %v2012, %v2014
          %v2016 = vadd.f32 %v2015, 0.0036580483
          %v2017 = vmul.f32 %v2012, %v2016
          %v2018 = vadd.f32 %v2017, 0.05243302
          %v2019 = vmul.f32 %v2012, %v2018
          %v2020 = vadd.f32 %v2019, 0.18741608
          %v2021 = vmul.f32 %v2012, %v2020
          %v2022 = vadd.f32 %v2021, 1.1283791
          %v2023 = vmul.f32 %v1440, %v2022
          %v2024 = vmul.f32 %v2012, 3.8918573e-05
          %v2025 = vadd.f32 %v2024, 0.001143296
          %v2026 = vmul.f32 %v2012, %v2025
          %v2027 = vadd.f32 %v2026, 0.014752088
          %v2028 = vmul.f32 %v2012, %v2027
          %v2029 = vadd.f32 %v2028, 0.112945676
          %v2030 = vmul.f32 %v2012, %v2029
          %v2031 = vadd.f32 %v2030, 0.4994258
          %v2032 = vmul.f32 %v2012, %v2031
          %v2033 = vadd.f32 %v2032, 1.0
          %v2034 = vrcp.pop %v2033
          %v2035 = vmul.f32 %v2033, %v2034
          %v2036 = vsub.f32 1.0, %v2035
          %v2037 = vmul.f32 %v2034, %v2036
          %v2038 = vadd.f32 %v2034, %v2037
          %vm2039 = vweird.f32 %v2033
          %vm2040 = vweird.f32 %v2034
          %vm2041 = vmor %vm2039, %vm2040
          %v2042 = vsel %vm2041, %v2034, %v2038
          %v2043 = vand.u32 2147483647, %v2033
          %vm2044 = vcmp.eq.f32.partialorder %v2043, 8.507059e+37
          %v2045 = vand.u32 %v2033, 2147483648
          %v2046 = vor.u32 1.1754944e-38, %v2045
          %v2047 = vsel %vm2044, %v2046, %v2042
          %v2048 = vmul.f32 %v2023, %v2047
          %v2049 = vmin.f32 %v2048, 1.0
          %v2050 = vmax.f32 %v2049, -1.0
          %v2051 = vmul.f32 %v1441, %v1441
          %v2052 = vmin.f32 16.0, %v2051
          %v2053 = vmul.f32 %v2052, 2.1237322e-06
          %v2054 = vadd.f32 %v2053, 0.00028619796
          %v2055 = vmul.f32 %v2052, %v2054
          %v2056 = vadd.f32 %v2055, 0.0036580483
          %v2057 = vmul.f32 %v2052, %v2056
          %v2058 = vadd.f32 %v2057, 0.05243302
          %v2059 = vmul.f32 %v2052, %v2058
          %v2060 = vadd.f32 %v2059, 0.18741608
          %v2061 = vmul.f32 %v2052, %v2060
          %v2062 = vadd.f32 %v2061, 1.1283791
          %v2063 = vmul.f32 %v1441, %v2062
          %v2064 = vmul.f32 %v2052, 3.8918573e-05
          %v2065 = vadd.f32 %v2064, 0.001143296
          %v2066 = vmul.f32 %v2052, %v2065
          %v2067 = vadd.f32 %v2066, 0.014752088
          %v2068 = vmul.f32 %v2052, %v2067
          %v2069 = vadd.f32 %v2068, 0.112945676
          %v2070 = vmul.f32 %v2052, %v2069
          %v2071 = vadd.f32 %v2070, 0.4994258
          %v2072 = vmul.f32 %v2052, %v2071
          %v2073 = vadd.f32 %v2072, 1.0
          %v2074 = vrcp.pop %v2073
          %v2075 = vmul.f32 %v2073, %v2074
          %v2076 = vsub.f32 1.0, %v2075
          %v2077 = vmul.f32 %v2074, %v2076
          %v2078 = vadd.f32 %v2074, %v2077
          %vm2079 = vweird.f32 %v2073
          %vm2080 = vweird.f32 %v2074
          %vm2081 = vmor %vm2079, %vm2080
          %v2082 = vsel %vm2081, %v2074, %v2078
          %v2083 = vand.u32 2147483647, %v2073
          %vm2084 = vcmp.eq.f32.partialorder %v2083, 8.507059e+37
          %v2085 = vand.u32 %v2073, 2147483648
          %v2086 = vor.u32 1.1754944e-38, %v2085
          %v2087 = vsel %vm2084, %v2086, %v2082
          %v2088 = vmul.f32 %v2063, %v2087
          %v2089 = vmin.f32 %v2088, 1.0
          %v2090 = vmax.f32 %v2089, -1.0
          %v2091 = vmul.f32 %v1442, %v1442
          %v2092 = vmin.f32 16.0, %v2091
          %v2093 = vmul.f32 %v2092, 2.1237322e-06
          %v2094 = vadd.f32 %v2093, 0.00028619796
          %v2095 = vmul.f32 %v2092, %v2094
          %v2096 = vadd.f32 %v2095, 0.0036580483
          %v2097 = vmul.f32 %v2092, %v2096
          %v2098 = vadd.f32 %v2097, 0.05243302
          %v2099 = vmul.f32 %v2092, %v2098
          %v2100 = vadd.f32 %v2099, 0.18741608
          %v2101 = vmul.f32 %v2092, %v2100
          %v2102 = vadd.f32 %v2101, 1.1283791
          %v2103 = vmul.f32 %v1442, %v2102
          %v2104 = vmul.f32 %v2092, 3.8918573e-05
          %v2105 = vadd.f32 %v2104, 0.001143296
          %v2106 = vmul.f32 %v2092, %v2105
          %v2107 = vadd.f32 %v2106, 0.014752088
          %v2108 = vmul.f32 %v2092, %v2107
          %v2109 = vadd.f32 %v2108, 0.112945676
          %v2110 = vmul.f32 %v2092, %v2109
          %v2111 = vadd.f32 %v2110, 0.4994258
          %v2112 = vmul.f32 %v2092, %v2111
          %v2113 = vadd.f32 %v2112, 1.0
          %v2114 = vrcp.pop %v2113
          %v2115 = vmul.f32 %v2113, %v2114
          %v2116 = vsub.f32 1.0, %v2115
          %v2117 = vmul.f32 %v2114, %v2116
          %v2118 = vadd.f32 %v2114, %v2117
          %vm2119 = vweird.f32 %v2113
          %vm2120 = vweird.f32 %v2114
          %vm2121 = vmor %vm2119, %vm2120
          %v2122 = vsel %vm2121, %v2114, %v2118
          %v2123 = vand.u32 2147483647, %v2113
          %vm2124 = vcmp.eq.f32.partialorder %v2123, 8.507059e+37
          %v2125 = vand.u32 %v2113, 2147483648
          %v2126 = vor.u32 1.1754944e-38, %v2125
          %v2127 = vsel %vm2124, %v2126, %v2122
          %v2128 = vmul.f32 %v2103, %v2127
          %v2129 = vmin.f32 %v2128, 1.0
          %v2130 = vmax.f32 %v2129, -1.0
          %v2131 = vmul.f32 %v1443, %v1443
          %v2132 = vmin.f32 16.0, %v2131
          %v2133 = vmul.f32 %v2132, 2.1237322e-06
          %v2134 = vadd.f32 %v2133, 0.00028619796
          %v2135 = vmul.f32 %v2132, %v2134
          %v2136 = vadd.f32 %v2135, 0.0036580483
          %v2137 = vmul.f32 %v2132, %v2136
          %v2138 = vadd.f32 %v2137, 0.05243302
          %v2139 = vmul.f32 %v2132, %v2138
          %v2140 = vadd.f32 %v2139, 0.18741608
          %v2141 = vmul.f32 %v2132, %v2140
          %v2142 = vadd.f32 %v2141, 1.1283791
          %v2143 = vmul.f32 %v1443, %v2142
          %v2144 = vmul.f32 %v2132, 3.8918573e-05
          %v2145 = vadd.f32 %v2144, 0.001143296
          %v2146 = vmul.f32 %v2132, %v2145
          %v2147 = vadd.f32 %v2146, 0.014752088
          %v2148 = vmul.f32 %v2132, %v2147
          %v2149 = vadd.f32 %v2148, 0.112945676
          %v2150 = vmul.f32 %v2132, %v2149
          %v2151 = vadd.f32 %v2150, 0.4994258
          %v2152 = vmul.f32 %v2132, %v2151
          %v2153 = vadd.f32 %v2152, 1.0
          %v2154 = vrcp.pop %v2153
          %v2155 = vmul.f32 %v2153, %v2154
          %v2156 = vsub.f32 1.0, %v2155
          %v2157 = vmul.f32 %v2154, %v2156
          %v2158 = vadd.f32 %v2154, %v2157
          %vm2159 = vweird.f32 %v2153
          %vm2160 = vweird.f32 %v2154
          %vm2161 = vmor %vm2159, %vm2160
          %v2162 = vsel %vm2161, %v2154, %v2158
          %v2163 = vand.u32 2147483647, %v2153
          %vm2164 = vcmp.eq.f32.partialorder %v2163, 8.507059e+37
          %v2165 = vand.u32 %v2153, 2147483648
          %v2166 = vor.u32 1.1754944e-38, %v2165
          %v2167 = vsel %vm2164, %v2166, %v2162
          %v2168 = vmul.f32 %v2143, %v2167
          %v2169 = vmin.f32 %v2168, 1.0
          %v2170 = vmax.f32 %v2169, -1.0
          %v2171 = vmul.f32 %v1444, %v1444
          %v2172 = vmin.f32 16.0, %v2171
          %v2173 = vmul.f32 %v2172, 2.1237322e-06
          %v2174 = vadd.f32 %v2173, 0.00028619796
          %v2175 = vmul.f32 %v2172, %v2174
          %v2176 = vadd.f32 %v2175, 0.0036580483
          %v2177 = vmul.f32 %v2172, %v2176
          %v2178 = vadd.f32 %v2177, 0.05243302
          %v2179 = vmul.f32 %v2172, %v2178
          %v2180 = vadd.f32 %v2179, 0.18741608
          %v2181 = vmul.f32 %v2172, %v2180
          %v2182 = vadd.f32 %v2181, 1.1283791
          %v2183 = vmul.f32 %v1444, %v2182
          %v2184 = vmul.f32 %v2172, 3.8918573e-05
          %v2185 = vadd.f32 %v2184, 0.001143296
          %v2186 = vmul.f32 %v2172, %v2185
          %v2187 = vadd.f32 %v2186, 0.014752088
          %v2188 = vmul.f32 %v2172, %v2187
          %v2189 = vadd.f32 %v2188, 0.112945676
          %v2190 = vmul.f32 %v2172, %v2189
          %v2191 = vadd.f32 %v2190, 0.4994258
          %v2192 = vmul.f32 %v2172, %v2191
          %v2193 = vadd.f32 %v2192, 1.0
          %v2194 = vrcp.pop %v2193
          %v2195 = vmul.f32 %v2193, %v2194
          %v2196 = vsub.f32 1.0, %v2195
          %v2197 = vmul.f32 %v2194, %v2196
          %v2198 = vadd.f32 %v2194, %v2197
          %vm2199 = vweird.f32 %v2193
          %vm2200 = vweird.f32 %v2194
          %vm2201 = vmor %vm2199, %vm2200
          %v2202 = vsel %vm2201, %v2194, %v2198
          %v2203 = vand.u32 2147483647, %v2193
          %vm2204 = vcmp.eq.f32.partialorder %v2203, 8.507059e+37
          %v2205 = vand.u32 %v2193, 2147483648
          %v2206 = vor.u32 1.1754944e-38, %v2205
          %v2207 = vsel %vm2204, %v2206, %v2202
          %v2208 = vmul.f32 %v2183, %v2207
          %v2209 = vmin.f32 %v2208, 1.0
          %v2210 = vmax.f32 %v2209, -1.0
          %v2211 = vmul.f32 %v1445, %v1445
          %v2212 = vmin.f32 16.0, %v2211
          %v2213 = vmul.f32 %v2212, 2.1237322e-06
          %v2214 = vadd.f32 %v2213, 0.00028619796
          %v2215 = vmul.f32 %v2212, %v2214
          %v2216 = vadd.f32 %v2215, 0.0036580483
          %v2217 = vmul.f32 %v2212, %v2216
          %v2218 = vadd.f32 %v2217, 0.05243302
          %v2219 = vmul.f32 %v2212, %v2218
          %v2220 = vadd.f32 %v2219, 0.18741608
          %v2221 = vmul.f32 %v2212, %v2220
          %v2222 = vadd.f32 %v2221, 1.1283791
          %v2223 = vmul.f32 %v1445, %v2222
          %v2224 = vmul.f32 %v2212, 3.8918573e-05
          %v2225 = vadd.f32 %v2224, 0.001143296
          %v2226 = vmul.f32 %v2212, %v2225
          %v2227 = vadd.f32 %v2226, 0.014752088
          %v2228 = vmul.f32 %v2212, %v2227
          %v2229 = vadd.f32 %v2228, 0.112945676
          %v2230 = vmul.f32 %v2212, %v2229
          %v2231 = vadd.f32 %v2230, 0.4994258
          %v2232 = vmul.f32 %v2212, %v2231
          %v2233 = vadd.f32 %v2232, 1.0
          %v2234 = vrcp.pop %v2233
          %v2235 = vmul.f32 %v2233, %v2234
          %v2236 = vsub.f32 1.0, %v2235
          %v2237 = vmul.f32 %v2234, %v2236
          %v2238 = vadd.f32 %v2234, %v2237
          %vm2239 = vweird.f32 %v2233
          %vm2240 = vweird.f32 %v2234
          %vm2241 = vmor %vm2239, %vm2240
          %v2242 = vsel %vm2241, %v2234, %v2238
          %v2243 = vand.u32 2147483647, %v2233
          %vm2244 = vcmp.eq.f32.partialorder %v2243, 8.507059e+37
          %v2245 = vand.u32 %v2233, 2147483648
          %v2246 = vor.u32 1.1754944e-38, %v2245
          %v2247 = vsel %vm2244, %v2246, %v2242
          %v2248 = vmul.f32 %v2223, %v2247
          %v2249 = vmin.f32 %v2248, 1.0
          %v2250 = vmax.f32 %v2249, -1.0
          %v2251 = vmul.f32 %v1446, %v1446
          %v2252 = vmin.f32 16.0, %v2251
          %v2253 = vmul.f32 %v2252, 2.1237322e-06
          %v2254 = vadd.f32 %v2253, 0.00028619796
          %v2255 = vmul.f32 %v2252, %v2254
          %v2256 = vadd.f32 %v2255, 0.0036580483
          %v2257 = vmul.f32 %v2252, %v2256
          %v2258 = vadd.f32 %v2257, 0.05243302
          %v2259 = vmul.f32 %v2252, %v2258
          %v2260 = vadd.f32 %v2259, 0.18741608
          %v2261 = vmul.f32 %v2252, %v2260
          %v2262 = vadd.f32 %v2261, 1.1283791
          %v2263 = vmul.f32 %v1446, %v2262
          %v2264 = vmul.f32 %v2252, 3.8918573e-05
          %v2265 = vadd.f32 %v2264, 0.001143296
          %v2266 = vmul.f32 %v2252, %v2265
          %v2267 = vadd.f32 %v2266, 0.014752088
          %v2268 = vmul.f32 %v2252, %v2267
          %v2269 = vadd.f32 %v2268, 0.112945676
          %v2270 = vmul.f32 %v2252, %v2269
          %v2271 = vadd.f32 %v2270, 0.4994258
          %v2272 = vmul.f32 %v2252, %v2271
          %v2273 = vadd.f32 %v2272, 1.0
          %v2274 = vrcp.pop %v2273
          %v2275 = vmul.f32 %v2273, %v2274
          %v2276 = vsub.f32 1.0, %v2275
          %v2277 = vmul.f32 %v2274, %v2276
          %v2278 = vadd.f32 %v2274, %v2277
          %vm2279 = vweird.f32 %v2273
          %vm2280 = vweird.f32 %v2274
          %vm2281 = vmor %vm2279, %vm2280
          %v2282 = vsel %vm2281, %v2274, %v2278
          %v2283 = vand.u32 2147483647, %v2273
          %vm2284 = vcmp.eq.f32.partialorder %v2283, 8.507059e+37
          %v2285 = vand.u32 %v2273, 2147483648
          %v2286 = vor.u32 1.1754944e-38, %v2285
          %v2287 = vsel %vm2284, %v2286, %v2282
          %v2288 = vmul.f32 %v2263, %v2287
          %v2289 = vmin.f32 %v2288, 1.0
          %v2290 = vmax.f32 %v2289, -1.0
          %v2291 = vmul.f32 %v1447, %v1447
          %v2292 = vmin.f32 16.0, %v2291
          %v2293 = vmul.f32 %v2292, 2.1237322e-06
          %v2294 = vadd.f32 %v2293, 0.00028619796
          %v2295 = vmul.f32 %v2292, %v2294
          %v2296 = vadd.f32 %v2295, 0.0036580483
          %v2297 = vmul.f32 %v2292, %v2296
          %v2298 = vadd.f32 %v2297, 0.05243302
          %v2299 = vmul.f32 %v2292, %v2298
          %v2300 = vadd.f32 %v2299, 0.18741608
          %v2301 = vmul.f32 %v2292, %v2300
          %v2302 = vadd.f32 %v2301, 1.1283791
          %v2303 = vmul.f32 %v1447, %v2302
          %v2304 = vmul.f32 %v2292, 3.8918573e-05
          %v2305 = vadd.f32 %v2304, 0.001143296
          %v2306 = vmul.f32 %v2292, %v2305
          %v2307 = vadd.f32 %v2306, 0.014752088
          %v2308 = vmul.f32 %v2292, %v2307
          %v2309 = vadd.f32 %v2308, 0.112945676
          %v2310 = vmul.f32 %v2292, %v2309
          %v2311 = vadd.f32 %v2310, 0.4994258
          %v2312 = vmul.f32 %v2292, %v2311
          %v2313 = vadd.f32 %v2312, 1.0
          %v2314 = vrcp.pop %v2313
          %v2315 = vmul.f32 %v2313, %v2314
          %v2316 = vsub.f32 1.0, %v2315
          %v2317 = vmul.f32 %v2314, %v2316
          %v2318 = vadd.f32 %v2314, %v2317
          %vm2319 = vweird.f32 %v2313
          %vm2320 = vweird.f32 %v2314
          %vm2321 = vmor %vm2319, %vm2320
          %v2322 = vsel %vm2321, %v2314, %v2318
          %v2323 = vand.u32 2147483647, %v2313
          %vm2324 = vcmp.eq.f32.partialorder %v2323, 8.507059e+37
          %v2325 = vand.u32 %v2313, 2147483648
          %v2326 = vor.u32 1.1754944e-38, %v2325
          %v2327 = vsel %vm2324, %v2326, %v2322
          %v2328 = vmul.f32 %v2303, %v2327
          %v2329 = vmin.f32 %v2328, 1.0
          %v2330 = vmax.f32 %v2329, -1.0
          %v2331 = vmul.f32 %v1448, %v1448
          %v2332 = vmin.f32 16.0, %v2331
          %v2333 = vmul.f32 %v2332, 2.1237322e-06
          %v2334 = vadd.f32 %v2333, 0.00028619796
          %v2335 = vmul.f32 %v2332, %v2334
          %v2336 = vadd.f32 %v2335, 0.0036580483
          %v2337 = vmul.f32 %v2332, %v2336
          %v2338 = vadd.f32 %v2337, 0.05243302
          %v2339 = vmul.f32 %v2332, %v2338
          %v2340 = vadd.f32 %v2339, 0.18741608
          %v2341 = vmul.f32 %v2332, %v2340
          %v2342 = vadd.f32 %v2341, 1.1283791
          %v2343 = vmul.f32 %v1448, %v2342
          %v2344 = vmul.f32 %v2332, 3.8918573e-05
          %v2345 = vadd.f32 %v2344, 0.001143296
          %v2346 = vmul.f32 %v2332, %v2345
          %v2347 = vadd.f32 %v2346, 0.014752088
          %v2348 = vmul.f32 %v2332, %v2347
          %v2349 = vadd.f32 %v2348, 0.112945676
          %v2350 = vmul.f32 %v2332, %v2349
          %v2351 = vadd.f32 %v2350, 0.4994258
          %v2352 = vmul.f32 %v2332, %v2351
          %v2353 = vadd.f32 %v2352, 1.0
          %v2354 = vrcp.pop %v2353
          %v2355 = vmul.f32 %v2353, %v2354
          %v2356 = vsub.f32 1.0, %v2355
          %v2357 = vmul.f32 %v2354, %v2356
          %v2358 = vadd.f32 %v2354, %v2357
          %vm2359 = vweird.f32 %v2353
          %vm2360 = vweird.f32 %v2354
          %vm2361 = vmor %vm2359, %vm2360
          %v2362 = vsel %vm2361, %v2354, %v2358
          %v2363 = vand.u32 2147483647, %v2353
          %vm2364 = vcmp.eq.f32.partialorder %v2363, 8.507059e+37
          %v2365 = vand.u32 %v2353, 2147483648
          %v2366 = vor.u32 1.1754944e-38, %v2365
          %v2367 = vsel %vm2364, %v2366, %v2362
          %v2368 = vmul.f32 %v2343, %v2367
          %v2369 = vmin.f32 %v2368, 1.0
          %v2370 = vmax.f32 %v2369, -1.0
          %v2371 = vmul.f32 %v1449, %v1449
          %v2372 = vmin.f32 16.0, %v2371
          %v2373 = vmul.f32 %v2372, 2.1237322e-06
          %v2374 = vadd.f32 %v2373, 0.00028619796
          %v2375 = vmul.f32 %v2372, %v2374
          %v2376 = vadd.f32 %v2375, 0.0036580483
          %v2377 = vmul.f32 %v2372, %v2376
          %v2378 = vadd.f32 %v2377, 0.05243302
          %v2379 = vmul.f32 %v2372, %v2378
          %v2380 = vadd.f32 %v2379, 0.18741608
          %v2381 = vmul.f32 %v2372, %v2380
          %v2382 = vadd.f32 %v2381, 1.1283791
          %v2383 = vmul.f32 %v1449, %v2382
          %v2384 = vmul.f32 %v2372, 3.8918573e-05
          %v2385 = vadd.f32 %v2384, 0.001143296
          %v2386 = vmul.f32 %v2372, %v2385
          %v2387 = vadd.f32 %v2386, 0.014752088
          %v2388 = vmul.f32 %v2372, %v2387
          %v2389 = vadd.f32 %v2388, 0.112945676
          %v2390 = vmul.f32 %v2372, %v2389
          %v2391 = vadd.f32 %v2390, 0.4994258
          %v2392 = vmul.f32 %v2372, %v2391
          %v2393 = vadd.f32 %v2392, 1.0
          %v2394 = vrcp.pop %v2393
          %v2395 = vmul.f32 %v2393, %v2394
          %v2396 = vsub.f32 1.0, %v2395
          %v2397 = vmul.f32 %v2394, %v2396
          %v2398 = vadd.f32 %v2394, %v2397
          %vm2399 = vweird.f32 %v2393
          %vm2400 = vweird.f32 %v2394
          %vm2401 = vmor %vm2399, %vm2400
          %v2402 = vsel %vm2401, %v2394, %v2398
          %v2403 = vand.u32 2147483647, %v2393
          %vm2404 = vcmp.eq.f32.partialorder %v2403, 8.507059e+37
          %v2405 = vand.u32 %v2393, 2147483648
          %v2406 = vor.u32 1.1754944e-38, %v2405
          %v2407 = vsel %vm2404, %v2406, %v2402
          %v2408 = vmul.f32 %v2383, %v2407
          %v2409 = vmin.f32 %v2408, 1.0
          %v2410 = vmax.f32 %v2409, -1.0
          %v2411 = vmul.f32 %v1450, %v1450
          %v2412 = vmin.f32 16.0, %v2411
          %v2413 = vmul.f32 %v2412, 2.1237322e-06
          %v2414 = vadd.f32 %v2413, 0.00028619796
          %v2415 = vmul.f32 %v2412, %v2414
          %v2416 = vadd.f32 %v2415, 0.0036580483
          %v2417 = vmul.f32 %v2412, %v2416
          %v2418 = vadd.f32 %v2417, 0.05243302
          %v2419 = vmul.f32 %v2412, %v2418
          %v2420 = vadd.f32 %v2419, 0.18741608
          %v2421 = vmul.f32 %v2412, %v2420
          %v2422 = vadd.f32 %v2421, 1.1283791
          %v2423 = vmul.f32 %v1450, %v2422
          %v2424 = vmul.f32 %v2412, 3.8918573e-05
          %v2425 = vadd.f32 %v2424, 0.001143296
          %v2426 = vmul.f32 %v2412, %v2425
          %v2427 = vadd.f32 %v2426, 0.014752088
          %v2428 = vmul.f32 %v2412, %v2427
          %v2429 = vadd.f32 %v2428, 0.112945676
          %v2430 = vmul.f32 %v2412, %v2429
          %v2431 = vadd.f32 %v2430, 0.4994258
          %v2432 = vmul.f32 %v2412, %v2431
          %v2433 = vadd.f32 %v2432, 1.0
          %v2434 = vrcp.pop %v2433
          %v2435 = vmul.f32 %v2433, %v2434
          %v2436 = vsub.f32 1.0, %v2435
          %v2437 = vmul.f32 %v2434, %v2436
          %v2438 = vadd.f32 %v2434, %v2437
          %vm2439 = vweird.f32 %v2433
          %vm2440 = vweird.f32 %v2434
          %vm2441 = vmor %vm2439, %vm2440
          %v2442 = vsel %vm2441, %v2434, %v2438
          %v2443 = vand.u32 2147483647, %v2433
          %vm2444 = vcmp.eq.f32.partialorder %v2443, 8.507059e+37
          %v2445 = vand.u32 %v2433, 2147483648
          %v2446 = vor.u32 1.1754944e-38, %v2445
          %v2447 = vsel %vm2444, %v2446, %v2442
          %v2448 = vmul.f32 %v2423, %v2447
          %v2449 = vmin.f32 %v2448, 1.0
          %v2450 = vmax.f32 %v2449, -1.0
          %v2451 = vmul.f32 %v1451, %v1451
          %v2452 = vmin.f32 16.0, %v2451
          %v2453 = vmul.f32 %v2452, 2.1237322e-06
          %v2454 = vadd.f32 %v2453, 0.00028619796
          %v2455 = vmul.f32 %v2452, %v2454
          %v2456 = vadd.f32 %v2455, 0.0036580483
          %v2457 = vmul.f32 %v2452, %v2456
          %v2458 = vadd.f32 %v2457, 0.05243302
          %v2459 = vmul.f32 %v2452, %v2458
          %v2460 = vadd.f32 %v2459, 0.18741608
          %v2461 = vmul.f32 %v2452, %v2460
          %v2462 = vadd.f32 %v2461, 1.1283791
          %v2463 = vmul.f32 %v1451, %v2462
          %v2464 = vmul.f32 %v2452, 3.8918573e-05
          %v2465 = vadd.f32 %v2464, 0.001143296
          %v2466 = vmul.f32 %v2452, %v2465
          %v2467 = vadd.f32 %v2466, 0.014752088
          %v2468 = vmul.f32 %v2452, %v2467
          %v2469 = vadd.f32 %v2468, 0.112945676
          %v2470 = vmul.f32 %v2452, %v2469
          %v2471 = vadd.f32 %v2470, 0.4994258
          %v2472 = vmul.f32 %v2452, %v2471
          %v2473 = vadd.f32 %v2472, 1.0
          %v2474 = vrcp.pop %v2473
          %v2475 = vmul.f32 %v2473, %v2474
          %v2476 = vsub.f32 1.0, %v2475
          %v2477 = vmul.f32 %v2474, %v2476
          %v2478 = vadd.f32 %v2474, %v2477
          %vm2479 = vweird.f32 %v2473
          %vm2480 = vweird.f32 %v2474
          %vm2481 = vmor %vm2479, %vm2480
          %v2482 = vsel %vm2481, %v2474, %v2478
          %v2483 = vand.u32 2147483647, %v2473
          %vm2484 = vcmp.eq.f32.partialorder %v2483, 8.507059e+37
          %v2485 = vand.u32 %v2473, 2147483648
          %v2486 = vor.u32 1.1754944e-38, %v2485
          %v2487 = vsel %vm2484, %v2486, %v2482
          %v2488 = vmul.f32 %v2463, %v2487
          %v2489 = vmin.f32 %v2488, 1.0
          %v2490 = vmax.f32 %v2489, -1.0
          %v2491 = vmul.f32 %v1452, %v1452
          %v2492 = vmin.f32 16.0, %v2491
          %v2493 = vmul.f32 %v2492, 2.1237322e-06
          %v2494 = vadd.f32 %v2493, 0.00028619796
          %v2495 = vmul.f32 %v2492, %v2494
          %v2496 = vadd.f32 %v2495, 0.0036580483
          %v2497 = vmul.f32 %v2492, %v2496
          %v2498 = vadd.f32 %v2497, 0.05243302
          %v2499 = vmul.f32 %v2492, %v2498
          %v2500 = vadd.f32 %v2499, 0.18741608
          %v2501 = vmul.f32 %v2492, %v2500
          %v2502 = vadd.f32 %v2501, 1.1283791
          %v2503 = vmul.f32 %v1452, %v2502
          %v2504 = vmul.f32 %v2492, 3.8918573e-05
          %v2505 = vadd.f32 %v2504, 0.001143296
          %v2506 = vmul.f32 %v2492, %v2505
          %v2507 = vadd.f32 %v2506, 0.014752088
          %v2508 = vmul.f32 %v2492, %v2507
          %v2509 = vadd.f32 %v2508, 0.112945676
          %v2510 = vmul.f32 %v2492, %v2509
          %v2511 = vadd.f32 %v2510, 0.4994258
          %v2512 = vmul.f32 %v2492, %v2511
          %v2513 = vadd.f32 %v2512, 1.0
          %v2514 = vrcp.pop %v2513
          %v2515 = vmul.f32 %v2513, %v2514
          %v2516 = vsub.f32 1.0, %v2515
          %v2517 = vmul.f32 %v2514, %v2516
          %v2518 = vadd.f32 %v2514, %v2517
          %vm2519 = vweird.f32 %v2513
          %vm2520 = vweird.f32 %v2514
          %vm2521 = vmor %vm2519, %vm2520
          %v2522 = vsel %vm2521, %v2514, %v2518
          %v2523 = vand.u32 2147483647, %v2513
          %vm2524 = vcmp.eq.f32.partialorder %v2523, 8.507059e+37
          %v2525 = vand.u32 %v2513, 2147483648
          %v2526 = vor.u32 1.1754944e-38, %v2525
          %v2527 = vsel %vm2524, %v2526, %v2522
          %v2528 = vmul.f32 %v2503, %v2527
          %v2529 = vmin.f32 %v2528, 1.0
          %v2530 = vmax.f32 %v2529, -1.0
          %v2531 = vmul.f32 %v1453, %v1453
          %v2532 = vmin.f32 16.0, %v2531
          %v2533 = vmul.f32 %v2532, 2.1237322e-06
          %v2534 = vadd.f32 %v2533, 0.00028619796
          %v2535 = vmul.f32 %v2532, %v2534
          %v2536 = vadd.f32 %v2535, 0.0036580483
          %v2537 = vmul.f32 %v2532, %v2536
          %v2538 = vadd.f32 %v2537, 0.05243302
          %v2539 = vmul.f32 %v2532, %v2538
          %v2540 = vadd.f32 %v2539, 0.18741608
          %v2541 = vmul.f32 %v2532, %v2540
          %v2542 = vadd.f32 %v2541, 1.1283791
          %v2543 = vmul.f32 %v1453, %v2542
          %v2544 = vmul.f32 %v2532, 3.8918573e-05
          %v2545 = vadd.f32 %v2544, 0.001143296
          %v2546 = vmul.f32 %v2532, %v2545
          %v2547 = vadd.f32 %v2546, 0.014752088
          %v2548 = vmul.f32 %v2532, %v2547
          %v2549 = vadd.f32 %v2548, 0.112945676
          %v2550 = vmul.f32 %v2532, %v2549
          %v2551 = vadd.f32 %v2550, 0.4994258
          %v2552 = vmul.f32 %v2532, %v2551
          %v2553 = vadd.f32 %v2552, 1.0
          %v2554 = vrcp.pop %v2553
          %v2555 = vmul.f32 %v2553, %v2554
          %v2556 = vsub.f32 1.0, %v2555
          %v2557 = vmul.f32 %v2554, %v2556
          %v2558 = vadd.f32 %v2554, %v2557
          %vm2559 = vweird.f32 %v2553
          %vm2560 = vweird.f32 %v2554
          %vm2561 = vmor %vm2559, %vm2560
          %v2562 = vsel %vm2561, %v2554, %v2558
          %v2563 = vand.u32 2147483647, %v2553
          %vm2564 = vcmp.eq.f32.partialorder %v2563, 8.507059e+37
          %v2565 = vand.u32 %v2553, 2147483648
          %v2566 = vor.u32 1.1754944e-38, %v2565
          %v2567 = vsel %vm2564, %v2566, %v2562
          %v2568 = vmul.f32 %v2543, %v2567
          %v2569 = vmin.f32 %v2568, 1.0
          %v2570 = vmax.f32 %v2569, -1.0
          %v2571 = vmul.f32 %v1454, %v1454
          %v2572 = vmin.f32 16.0, %v2571
          %v2573 = vmul.f32 %v2572, 2.1237322e-06
          %v2574 = vadd.f32 %v2573, 0.00028619796
          %v2575 = vmul.f32 %v2572, %v2574
          %v2576 = vadd.f32 %v2575, 0.0036580483
          %v2577 = vmul.f32 %v2572, %v2576
          %v2578 = vadd.f32 %v2577, 0.05243302
          %v2579 = vmul.f32 %v2572, %v2578
          %v2580 = vadd.f32 %v2579, 0.18741608
          %v2581 = vmul.f32 %v2572, %v2580
          %v2582 = vadd.f32 %v2581, 1.1283791
          %v2583 = vmul.f32 %v1454, %v2582
          %v2584 = vmul.f32 %v2572, 3.8918573e-05
          %v2585 = vadd.f32 %v2584, 0.001143296
          %v2586 = vmul.f32 %v2572, %v2585
          %v2587 = vadd.f32 %v2586, 0.014752088
          %v2588 = vmul.f32 %v2572, %v2587
          %v2589 = vadd.f32 %v2588, 0.112945676
          %v2590 = vmul.f32 %v2572, %v2589
          %v2591 = vadd.f32 %v2590, 0.4994258
          %v2592 = vmul.f32 %v2572, %v2591
          %v2593 = vadd.f32 %v2592, 1.0
          %v2594 = vrcp.pop %v2593
          %v2595 = vmul.f32 %v2593, %v2594
          %v2596 = vsub.f32 1.0, %v2595
          %v2597 = vmul.f32 %v2594, %v2596
          %v2598 = vadd.f32 %v2594, %v2597
          %vm2599 = vweird.f32 %v2593
          %vm2600 = vweird.f32 %v2594
          %vm2601 = vmor %vm2599, %vm2600
          %v2602 = vsel %vm2601, %v2594, %v2598
          %v2603 = vand.u32 2147483647, %v2593
          %vm2604 = vcmp.eq.f32.partialorder %v2603, 8.507059e+37
          %v2605 = vand.u32 %v2593, 2147483648
          %v2606 = vor.u32 1.1754944e-38, %v2605
          %v2607 = vsel %vm2604, %v2606, %v2602
          %v2608 = vmul.f32 %v2583, %v2607
          %v2609 = vmin.f32 %v2608, 1.0
          %v2610 = vmax.f32 %v2609, -1.0
          %v2611 = vmul.f32 %v1455, %v1455
          %v2612 = vmin.f32 16.0, %v2611
          %v2613 = vmul.f32 %v2612, 2.1237322e-06
          %v2614 = vadd.f32 %v2613, 0.00028619796
          %v2615 = vmul.f32 %v2612, %v2614
          %v2616 = vadd.f32 %v2615, 0.0036580483
          %v2617 = vmul.f32 %v2612, %v2616
          %v2618 = vadd.f32 %v2617, 0.05243302
          %v2619 = vmul.f32 %v2612, %v2618
          %v2620 = vadd.f32 %v2619, 0.18741608
          %v2621 = vmul.f32 %v2612, %v2620
          %v2622 = vadd.f32 %v2621, 1.1283791
          %v2623 = vmul.f32 %v1455, %v2622
          %v2624 = vmul.f32 %v2612, 3.8918573e-05
          %v2625 = vadd.f32 %v2624, 0.001143296
          %v2626 = vmul.f32 %v2612, %v2625
          %v2627 = vadd.f32 %v2626, 0.014752088
          %v2628 = vmul.f32 %v2612, %v2627
          %v2629 = vadd.f32 %v2628, 0.112945676
          %v2630 = vmul.f32 %v2612, %v2629
          %v2631 = vadd.f32 %v2630, 0.4994258
          %v2632 = vmul.f32 %v2612, %v2631
          %v2633 = vadd.f32 %v2632, 1.0
          %v2634 = vrcp.pop %v2633
          %v2635 = vmul.f32 %v2633, %v2634
          %v2636 = vsub.f32 1.0, %v2635
          %v2637 = vmul.f32 %v2634, %v2636
          %v2638 = vadd.f32 %v2634, %v2637
          %vm2639 = vweird.f32 %v2633
          %vm2640 = vweird.f32 %v2634
          %vm2641 = vmor %vm2639, %vm2640
          %v2642 = vsel %vm2641, %v2634, %v2638
          %v2643 = vand.u32 2147483647, %v2633
          %vm2644 = vcmp.eq.f32.partialorder %v2643, 8.507059e+37
          %v2645 = vand.u32 %v2633, 2147483648
          %v2646 = vor.u32 1.1754944e-38, %v2645
          %v2647 = vsel %vm2644, %v2646, %v2642
          %v2648 = vmul.f32 %v2623, %v2647
          %v2649 = vmin.f32 %v2648, 1.0
          %v2650 = vmax.f32 %v2649, -1.0
          %v2651 = vmul.f32 %v1456, %v1456
          %v2652 = vmin.f32 16.0, %v2651
          %v2653 = vmul.f32 %v2652, 2.1237322e-06
          %v2654 = vadd.f32 %v2653, 0.00028619796
          %v2655 = vmul.f32 %v2652, %v2654
          %v2656 = vadd.f32 %v2655, 0.0036580483
          %v2657 = vmul.f32 %v2652, %v2656
          %v2658 = vadd.f32 %v2657, 0.05243302
          %v2659 = vmul.f32 %v2652, %v2658
          %v2660 = vadd.f32 %v2659, 0.18741608
          %v2661 = vmul.f32 %v2652, %v2660
          %v2662 = vadd.f32 %v2661, 1.1283791
          %v2663 = vmul.f32 %v1456, %v2662
          %v2664 = vmul.f32 %v2652, 3.8918573e-05
          %v2665 = vadd.f32 %v2664, 0.001143296
          %v2666 = vmul.f32 %v2652, %v2665
          %v2667 = vadd.f32 %v2666, 0.014752088
          %v2668 = vmul.f32 %v2652, %v2667
          %v2669 = vadd.f32 %v2668, 0.112945676
          %v2670 = vmul.f32 %v2652, %v2669
          %v2671 = vadd.f32 %v2670, 0.4994258
          %v2672 = vmul.f32 %v2652, %v2671
          %v2673 = vadd.f32 %v2672, 1.0
          %v2674 = vrcp.pop %v2673
          %v2675 = vmul.f32 %v2673, %v2674
          %v2676 = vsub.f32 1.0, %v2675
          %v2677 = vmul.f32 %v2674, %v2676
          %v2678 = vadd.f32 %v2674, %v2677
          %vm2679 = vweird.f32 %v2673
          %vm2680 = vweird.f32 %v2674
          %vm2681 = vmor %vm2679, %vm2680
          %v2682 = vsel %vm2681, %v2674, %v2678
          %v2683 = vand.u32 2147483647, %v2673
          %vm2684 = vcmp.eq.f32.partialorder %v2683, 8.507059e+37
          %v2685 = vand.u32 %v2673, 2147483648
          %v2686 = vor.u32 1.1754944e-38, %v2685
          %v2687 = vsel %vm2684, %v2686, %v2682
          %v2688 = vmul.f32 %v2663, %v2687
          %v2689 = vmin.f32 %v2688, 1.0
          %v2690 = vmax.f32 %v2689, -1.0
          %v2691 = vmul.f32 %v1457, %v1457
          %v2692 = vmin.f32 16.0, %v2691
          %v2693 = vmul.f32 %v2692, 2.1237322e-06
          %v2694 = vadd.f32 %v2693, 0.00028619796
          %v2695 = vmul.f32 %v2692, %v2694
          %v2696 = vadd.f32 %v2695, 0.0036580483
          %v2697 = vmul.f32 %v2692, %v2696
          %v2698 = vadd.f32 %v2697, 0.05243302
          %v2699 = vmul.f32 %v2692, %v2698
          %v2700 = vadd.f32 %v2699, 0.18741608
          %v2701 = vmul.f32 %v2692, %v2700
          %v2702 = vadd.f32 %v2701, 1.1283791
          %v2703 = vmul.f32 %v1457, %v2702
          %v2704 = vmul.f32 %v2692, 3.8918573e-05
          %v2705 = vadd.f32 %v2704, 0.001143296
          %v2706 = vmul.f32 %v2692, %v2705
          %v2707 = vadd.f32 %v2706, 0.014752088
          %v2708 = vmul.f32 %v2692, %v2707
          %v2709 = vadd.f32 %v2708, 0.112945676
          %v2710 = vmul.f32 %v2692, %v2709
          %v2711 = vadd.f32 %v2710, 0.4994258
          %v2712 = vmul.f32 %v2692, %v2711
          %v2713 = vadd.f32 %v2712, 1.0
          %v2714 = vrcp.pop %v2713
          %v2715 = vmul.f32 %v2713, %v2714
          %v2716 = vsub.f32 1.0, %v2715
          %v2717 = vmul.f32 %v2714, %v2716
          %v2718 = vadd.f32 %v2714, %v2717
          %vm2719 = vweird.f32 %v2713
          %vm2720 = vweird.f32 %v2714
          %vm2721 = vmor %vm2719, %vm2720
          %v2722 = vsel %vm2721, %v2714, %v2718
          %v2723 = vand.u32 2147483647, %v2713
          %vm2724 = vcmp.eq.f32.partialorder %v2723, 8.507059e+37
          %v2725 = vand.u32 %v2713, 2147483648
          %v2726 = vor.u32 1.1754944e-38, %v2725
          %v2727 = vsel %vm2724, %v2726, %v2722
          %v2728 = vmul.f32 %v2703, %v2727
          %v2729 = vmin.f32 %v2728, 1.0
          %v2730 = vmax.f32 %v2729, -1.0
          %v2731 = vmul.f32 %v1458, %v1458
          %v2732 = vmin.f32 16.0, %v2731
          %v2733 = vmul.f32 %v2732, 2.1237322e-06
          %v2734 = vadd.f32 %v2733, 0.00028619796
          %v2735 = vmul.f32 %v2732, %v2734
          %v2736 = vadd.f32 %v2735, 0.0036580483
          %v2737 = vmul.f32 %v2732, %v2736
          %v2738 = vadd.f32 %v2737, 0.05243302
          %v2739 = vmul.f32 %v2732, %v2738
          %v2740 = vadd.f32 %v2739, 0.18741608
          %v2741 = vmul.f32 %v2732, %v2740
          %v2742 = vadd.f32 %v2741, 1.1283791
          %v2743 = vmul.f32 %v1458, %v2742
          %v2744 = vmul.f32 %v2732, 3.8918573e-05
          %v2745 = vadd.f32 %v2744, 0.001143296
          %v2746 = vmul.f32 %v2732, %v2745
          %v2747 = vadd.f32 %v2746, 0.014752088
          %v2748 = vmul.f32 %v2732, %v2747
          %v2749 = vadd.f32 %v2748, 0.112945676
          %v2750 = vmul.f32 %v2732, %v2749
          %v2751 = vadd.f32 %v2750, 0.4994258
          %v2752 = vmul.f32 %v2732, %v2751
          %v2753 = vadd.f32 %v2752, 1.0
          %v2754 = vrcp.pop %v2753
          %v2755 = vmul.f32 %v2753, %v2754
          %v2756 = vsub.f32 1.0, %v2755
          %v2757 = vmul.f32 %v2754, %v2756
          %v2758 = vadd.f32 %v2754, %v2757
          %vm2759 = vweird.f32 %v2753
          %vm2760 = vweird.f32 %v2754
          %vm2761 = vmor %vm2759, %vm2760
          %v2762 = vsel %vm2761, %v2754, %v2758
          %v2763 = vand.u32 2147483647, %v2753
          %vm2764 = vcmp.eq.f32.partialorder %v2763, 8.507059e+37
          %v2765 = vand.u32 %v2753, 2147483648
          %v2766 = vor.u32 1.1754944e-38, %v2765
          %v2767 = vsel %vm2764, %v2766, %v2762
          %v2768 = vmul.f32 %v2743, %v2767
          %v2769 = vmin.f32 %v2768, 1.0
          %v2770 = vmax.f32 %v2769, -1.0
          %v2771 = vmul.f32 %v1459, %v1459
          %v2772 = vmin.f32 16.0, %v2771
          %v2773 = vmul.f32 %v2772, 2.1237322e-06
          %v2774 = vadd.f32 %v2773, 0.00028619796
          %v2775 = vmul.f32 %v2772, %v2774
          %v2776 = vadd.f32 %v2775, 0.0036580483
          %v2777 = vmul.f32 %v2772, %v2776
          %v2778 = vadd.f32 %v2777, 0.05243302
          %v2779 = vmul.f32 %v2772, %v2778
          %v2780 = vadd.f32 %v2779, 0.18741608
          %v2781 = vmul.f32 %v2772, %v2780
          %v2782 = vadd.f32 %v2781, 1.1283791
          %v2783 = vmul.f32 %v1459, %v2782
          %v2784 = vmul.f32 %v2772, 3.8918573e-05
          %v2785 = vadd.f32 %v2784, 0.001143296
          %v2786 = vmul.f32 %v2772, %v2785
          %v2787 = vadd.f32 %v2786, 0.014752088
          %v2788 = vmul.f32 %v2772, %v2787
          %v2789 = vadd.f32 %v2788, 0.112945676
          %v2790 = vmul.f32 %v2772, %v2789
          %v2791 = vadd.f32 %v2790, 0.4994258
          %v2792 = vmul.f32 %v2772, %v2791
          %v2793 = vadd.f32 %v2792, 1.0
          %v2794 = vrcp.pop %v2793
          %v2795 = vmul.f32 %v2793, %v2794
          %v2796 = vsub.f32 1.0, %v2795
          %v2797 = vmul.f32 %v2794, %v2796
          %v2798 = vadd.f32 %v2794, %v2797
          %vm2799 = vweird.f32 %v2793
          %vm2800 = vweird.f32 %v2794
          %vm2801 = vmor %vm2799, %vm2800
          %v2802 = vsel %vm2801, %v2794, %v2798
          %v2803 = vand.u32 2147483647, %v2793
          %vm2804 = vcmp.eq.f32.partialorder %v2803, 8.507059e+37
          %v2805 = vand.u32 %v2793, 2147483648
          %v2806 = vor.u32 1.1754944e-38, %v2805
          %v2807 = vsel %vm2804, %v2806, %v2802
          %v2808 = vmul.f32 %v2783, %v2807
          %v2809 = vmin.f32 %v2808, 1.0
          %v2810 = vmax.f32 %v2809, -1.0
          %v2811 = vmul.f32 %v1460, %v1460
          %v2812 = vmin.f32 16.0, %v2811
          %v2813 = vmul.f32 %v2812, 2.1237322e-06
          %v2814 = vadd.f32 %v2813, 0.00028619796
          %v2815 = vmul.f32 %v2812, %v2814
          %v2816 = vadd.f32 %v2815, 0.0036580483
          %v2817 = vmul.f32 %v2812, %v2816
          %v2818 = vadd.f32 %v2817, 0.05243302
          %v2819 = vmul.f32 %v2812, %v2818
          %v2820 = vadd.f32 %v2819, 0.18741608
          %v2821 = vmul.f32 %v2812, %v2820
          %v2822 = vadd.f32 %v2821, 1.1283791
          %v2823 = vmul.f32 %v1460, %v2822
          %v2824 = vmul.f32 %v2812, 3.8918573e-05
          %v2825 = vadd.f32 %v2824, 0.001143296
          %v2826 = vmul.f32 %v2812, %v2825
          %v2827 = vadd.f32 %v2826, 0.014752088
          %v2828 = vmul.f32 %v2812, %v2827
          %v2829 = vadd.f32 %v2828, 0.112945676
          %v2830 = vmul.f32 %v2812, %v2829
          %v2831 = vadd.f32 %v2830, 0.4994258
          %v2832 = vmul.f32 %v2812, %v2831
          %v2833 = vadd.f32 %v2832, 1.0
          %v2834 = vrcp.pop %v2833
          %v2835 = vmul.f32 %v2833, %v2834
          %v2836 = vsub.f32 1.0, %v2835
          %v2837 = vmul.f32 %v2834, %v2836
          %v2838 = vadd.f32 %v2834, %v2837
          %vm2839 = vweird.f32 %v2833
          %vm2840 = vweird.f32 %v2834
          %vm2841 = vmor %vm2839, %vm2840
          %v2842 = vsel %vm2841, %v2834, %v2838
          %v2843 = vand.u32 2147483647, %v2833
          %vm2844 = vcmp.eq.f32.partialorder %v2843, 8.507059e+37
          %v2845 = vand.u32 %v2833, 2147483648
          %v2846 = vor.u32 1.1754944e-38, %v2845
          %v2847 = vsel %vm2844, %v2846, %v2842
          %v2848 = vmul.f32 %v2823, %v2847
          %v2849 = vmin.f32 %v2848, 1.0
          %v2850 = vmax.f32 %v2849, -1.0
          %v2851 = vmul.f32 %v1461, %v1461
          %v2852 = vmin.f32 16.0, %v2851
          %v2853 = vmul.f32 %v2852, 2.1237322e-06
          %v2854 = vadd.f32 %v2853, 0.00028619796
          %v2855 = vmul.f32 %v2852, %v2854
          %v2856 = vadd.f32 %v2855, 0.0036580483
          %v2857 = vmul.f32 %v2852, %v2856
          %v2858 = vadd.f32 %v2857, 0.05243302
          %v2859 = vmul.f32 %v2852, %v2858
          %v2860 = vadd.f32 %v2859, 0.18741608
          %v2861 = vmul.f32 %v2852, %v2860
          %v2862 = vadd.f32 %v2861, 1.1283791
          %v2863 = vmul.f32 %v1461, %v2862
          %v2864 = vmul.f32 %v2852, 3.8918573e-05
          %v2865 = vadd.f32 %v2864, 0.001143296
          %v2866 = vmul.f32 %v2852, %v2865
          %v2867 = vadd.f32 %v2866, 0.014752088
          %v2868 = vmul.f32 %v2852, %v2867
          %v2869 = vadd.f32 %v2868, 0.112945676
          %v2870 = vmul.f32 %v2852, %v2869
          %v2871 = vadd.f32 %v2870, 0.4994258
          %v2872 = vmul.f32 %v2852, %v2871
          %v2873 = vadd.f32 %v2872, 1.0
          %v2874 = vrcp.pop %v2873
          %v2875 = vmul.f32 %v2873, %v2874
          %v2876 = vsub.f32 1.0, %v2875
          %v2877 = vmul.f32 %v2874, %v2876
          %v2878 = vadd.f32 %v2874, %v2877
          %vm2879 = vweird.f32 %v2873
          %vm2880 = vweird.f32 %v2874
          %vm2881 = vmor %vm2879, %vm2880
          %v2882 = vsel %vm2881, %v2874, %v2878
          %v2883 = vand.u32 2147483647, %v2873
          %vm2884 = vcmp.eq.f32.partialorder %v2883, 8.507059e+37
          %v2885 = vand.u32 %v2873, 2147483648
          %v2886 = vor.u32 1.1754944e-38, %v2885
          %v2887 = vsel %vm2884, %v2886, %v2882
          %v2888 = vmul.f32 %v2863, %v2887
          %v2889 = vmin.f32 %v2888, 1.0
          %v2890 = vmax.f32 %v2889, -1.0
          %v2891 = vmul.f32 %v1462, %v1462
          %v2892 = vmin.f32 16.0, %v2891
          %v2893 = vmul.f32 %v2892, 2.1237322e-06
          %v2894 = vadd.f32 %v2893, 0.00028619796
          %v2895 = vmul.f32 %v2892, %v2894
          %v2896 = vadd.f32 %v2895, 0.0036580483
          %v2897 = vmul.f32 %v2892, %v2896
          %v2898 = vadd.f32 %v2897, 0.05243302
          %v2899 = vmul.f32 %v2892, %v2898
          %v2900 = vadd.f32 %v2899, 0.18741608
          %v2901 = vmul.f32 %v2892, %v2900
          %v2902 = vadd.f32 %v2901, 1.1283791
          %v2903 = vmul.f32 %v1462, %v2902
          %v2904 = vmul.f32 %v2892, 3.8918573e-05
          %v2905 = vadd.f32 %v2904, 0.001143296
          %v2906 = vmul.f32 %v2892, %v2905
          %v2907 = vadd.f32 %v2906, 0.014752088
          %v2908 = vmul.f32 %v2892, %v2907
          %v2909 = vadd.f32 %v2908, 0.112945676
          %v2910 = vmul.f32 %v2892, %v2909
          %v2911 = vadd.f32 %v2910, 0.4994258
          %v2912 = vmul.f32 %v2892, %v2911
          %v2913 = vadd.f32 %v2912, 1.0
          %v2914 = vrcp.pop %v2913
          %v2915 = vmul.f32 %v2913, %v2914
          %v2916 = vsub.f32 1.0, %v2915
          %v2917 = vmul.f32 %v2914, %v2916
          %v2918 = vadd.f32 %v2914, %v2917
          %vm2919 = vweird.f32 %v2913
          %vm2920 = vweird.f32 %v2914
          %vm2921 = vmor %vm2919, %vm2920
          %v2922 = vsel %vm2921, %v2914, %v2918
          %v2923 = vand.u32 2147483647, %v2913
          %vm2924 = vcmp.eq.f32.partialorder %v2923, 8.507059e+37
          %v2925 = vand.u32 %v2913, 2147483648
          %v2926 = vor.u32 1.1754944e-38, %v2925
          %v2927 = vsel %vm2924, %v2926, %v2922
          %v2928 = vmul.f32 %v2903, %v2927
          %v2929 = vmin.f32 %v2928, 1.0
          %v2930 = vmax.f32 %v2929, -1.0
          %v2931 = vmul.f32 %v1463, %v1463
          %v2932 = vmin.f32 16.0, %v2931
          %v2933 = vmul.f32 %v2932, 2.1237322e-06
          %v2934 = vadd.f32 %v2933, 0.00028619796
          %v2935 = vmul.f32 %v2932, %v2934
          %v2936 = vadd.f32 %v2935, 0.0036580483
          %v2937 = vmul.f32 %v2932, %v2936
          %v2938 = vadd.f32 %v2937, 0.05243302
          %v2939 = vmul.f32 %v2932, %v2938
          %v2940 = vadd.f32 %v2939, 0.18741608
          %v2941 = vmul.f32 %v2932, %v2940
          %v2942 = vadd.f32 %v2941, 1.1283791
          %v2943 = vmul.f32 %v1463, %v2942
          %v2944 = vmul.f32 %v2932, 3.8918573e-05
          %v2945 = vadd.f32 %v2944, 0.001143296
          %v2946 = vmul.f32 %v2932, %v2945
          %v2947 = vadd.f32 %v2946, 0.014752088
          %v2948 = vmul.f32 %v2932, %v2947
          %v2949 = vadd.f32 %v2948, 0.112945676
          %v2950 = vmul.f32 %v2932, %v2949
          %v2951 = vadd.f32 %v2950, 0.4994258
          %v2952 = vmul.f32 %v2932, %v2951
          %v2953 = vadd.f32 %v2952, 1.0
          %v2954 = vrcp.pop %v2953
          %v2955 = vmul.f32 %v2953, %v2954
          %v2956 = vsub.f32 1.0, %v2955
          %v2957 = vmul.f32 %v2954, %v2956
          %v2958 = vadd.f32 %v2954, %v2957
          %vm2959 = vweird.f32 %v2953
          %vm2960 = vweird.f32 %v2954
          %vm2961 = vmor %vm2959, %vm2960
          %v2962 = vsel %vm2961, %v2954, %v2958
          %v2963 = vand.u32 2147483647, %v2953
          %vm2964 = vcmp.eq.f32.partialorder %v2963, 8.507059e+37
          %v2965 = vand.u32 %v2953, 2147483648
          %v2966 = vor.u32 1.1754944e-38, %v2965
          %v2967 = vsel %vm2964, %v2966, %v2962
          %v2968 = vmul.f32 %v2943, %v2967
          %v2969 = vmin.f32 %v2968, 1.0
          %v2970 = vmax.f32 %v2969, -1.0
          %v2971 = vmul.f32 %v1464, %v1464
          %v2972 = vmin.f32 16.0, %v2971
          %v2973 = vmul.f32 %v2972, 2.1237322e-06
          %v2974 = vadd.f32 %v2973, 0.00028619796
          %v2975 = vmul.f32 %v2972, %v2974
          %v2976 = vadd.f32 %v2975, 0.0036580483
          %v2977 = vmul.f32 %v2972, %v2976
          %v2978 = vadd.f32 %v2977, 0.05243302
          %v2979 = vmul.f32 %v2972, %v2978
          %v2980 = vadd.f32 %v2979, 0.18741608
          %v2981 = vmul.f32 %v2972, %v2980
          %v2982 = vadd.f32 %v2981, 1.1283791
          %v2983 = vmul.f32 %v1464, %v2982
          %v2984 = vmul.f32 %v2972, 3.8918573e-05
          %v2985 = vadd.f32 %v2984, 0.001143296
          %v2986 = vmul.f32 %v2972, %v2985
          %v2987 = vadd.f32 %v2986, 0.014752088
          %v2988 = vmul.f32 %v2972, %v2987
          %v2989 = vadd.f32 %v2988, 0.112945676
          %v2990 = vmul.f32 %v2972, %v2989
          %v2991 = vadd.f32 %v2990, 0.4994258
          %v2992 = vmul.f32 %v2972, %v2991
          %v2993 = vadd.f32 %v2992, 1.0
          %v2994 = vrcp.pop %v2993
          %v2995 = vmul.f32 %v2993, %v2994
          %v2996 = vsub.f32 1.0, %v2995
          %v2997 = vmul.f32 %v2994, %v2996
          %v2998 = vadd.f32 %v2994, %v2997
          %vm2999 = vweird.f32 %v2993
          %vm3000 = vweird.f32 %v2994
          %vm3001 = vmor %vm2999, %vm3000
          %v3002 = vsel %vm3001, %v2994, %v2998
          %v3003 = vand.u32 2147483647, %v2993
          %vm3004 = vcmp.eq.f32.partialorder %v3003, 8.507059e+37
          %v3005 = vand.u32 %v2993, 2147483648
          %v3006 = vor.u32 1.1754944e-38, %v3005
          %v3007 = vsel %vm3004, %v3006, %v3002
          %v3008 = vmul.f32 %v2983, %v3007
          %v3009 = vmin.f32 %v3008, 1.0
          %v3010 = vmax.f32 %v3009, -1.0
          %v3011 = vmul.f32 %v1465, %v1465
          %v3012 = vmin.f32 16.0, %v3011
          %v3013 = vmul.f32 %v3012, 2.1237322e-06
          %v3014 = vadd.f32 %v3013, 0.00028619796
          %v3015 = vmul.f32 %v3012, %v3014
          %v3016 = vadd.f32 %v3015, 0.0036580483
          %v3017 = vmul.f32 %v3012, %v3016
          %v3018 = vadd.f32 %v3017, 0.05243302
          %v3019 = vmul.f32 %v3012, %v3018
          %v3020 = vadd.f32 %v3019, 0.18741608
          %v3021 = vmul.f32 %v3012, %v3020
          %v3022 = vadd.f32 %v3021, 1.1283791
          %v3023 = vmul.f32 %v1465, %v3022
          %v3024 = vmul.f32 %v3012, 3.8918573e-05
          %v3025 = vadd.f32 %v3024, 0.001143296
          %v3026 = vmul.f32 %v3012, %v3025
          %v3027 = vadd.f32 %v3026, 0.014752088
          %v3028 = vmul.f32 %v3012, %v3027
          %v3029 = vadd.f32 %v3028, 0.112945676
          %v3030 = vmul.f32 %v3012, %v3029
          %v3031 = vadd.f32 %v3030, 0.4994258
          %v3032 = vmul.f32 %v3012, %v3031
          %v3033 = vadd.f32 %v3032, 1.0
          %v3034 = vrcp.pop %v3033
          %v3035 = vmul.f32 %v3033, %v3034
          %v3036 = vsub.f32 1.0, %v3035
          %v3037 = vmul.f32 %v3034, %v3036
          %v3038 = vadd.f32 %v3034, %v3037
          %vm3039 = vweird.f32 %v3033
          %vm3040 = vweird.f32 %v3034
          %vm3041 = vmor %vm3039, %vm3040
          %v3042 = vsel %vm3041, %v3034, %v3038
          %v3043 = vand.u32 2147483647, %v3033
          %vm3044 = vcmp.eq.f32.partialorder %v3043, 8.507059e+37
          %v3045 = vand.u32 %v3033, 2147483648
          %v3046 = vor.u32 1.1754944e-38, %v3045
          %v3047 = vsel %vm3044, %v3046, %v3042
          %v3048 = vmul.f32 %v3023, %v3047
          %v3049 = vmin.f32 %v3048, 1.0
          %v3050 = vmax.f32 %v3049, -1.0
          %v3051 = vmul.f32 %v1466, %v1466
          %v3052 = vmin.f32 16.0, %v3051
          %v3053 = vmul.f32 %v3052, 2.1237322e-06
          %v3054 = vadd.f32 %v3053, 0.00028619796
          %v3055 = vmul.f32 %v3052, %v3054
          %v3056 = vadd.f32 %v3055, 0.0036580483
          %v3057 = vmul.f32 %v3052, %v3056
          %v3058 = vadd.f32 %v3057, 0.05243302
          %v3059 = vmul.f32 %v3052, %v3058
          %v3060 = vadd.f32 %v3059, 0.18741608
          %v3061 = vmul.f32 %v3052, %v3060
          %v3062 = vadd.f32 %v3061, 1.1283791
          %v3063 = vmul.f32 %v1466, %v3062
          %v3064 = vmul.f32 %v3052, 3.8918573e-05
          %v3065 = vadd.f32 %v3064, 0.001143296
          %v3066 = vmul.f32 %v3052, %v3065
          %v3067 = vadd.f32 %v3066, 0.014752088
          %v3068 = vmul.f32 %v3052, %v3067
          %v3069 = vadd.f32 %v3068, 0.112945676
          %v3070 = vmul.f32 %v3052, %v3069
          %v3071 = vadd.f32 %v3070, 0.4994258
          %v3072 = vmul.f32 %v3052, %v3071
          %v3073 = vadd.f32 %v3072, 1.0
          %v3074 = vrcp.pop %v3073
          %v3075 = vmul.f32 %v3073, %v3074
          %v3076 = vsub.f32 1.0, %v3075
          %v3077 = vmul.f32 %v3074, %v3076
          %v3078 = vadd.f32 %v3074, %v3077
          %vm3079 = vweird.f32 %v3073
          %vm3080 = vweird.f32 %v3074
          %vm3081 = vmor %vm3079, %vm3080
          %v3082 = vsel %vm3081, %v3074, %v3078
          %v3083 = vand.u32 2147483647, %v3073
          %vm3084 = vcmp.eq.f32.partialorder %v3083, 8.507059e+37
          %v3085 = vand.u32 %v3073, 2147483648
          %v3086 = vor.u32 1.1754944e-38, %v3085
          %v3087 = vsel %vm3084, %v3086, %v3082
          %v3088 = vmul.f32 %v3063, %v3087
          %v3089 = vmin.f32 %v3088, 1.0
          %v3090 = vmax.f32 %v3089, -1.0
          %v3091 = vmul.f32 %v1467, %v1467
          %v3092 = vmin.f32 16.0, %v3091
          %v3093 = vmul.f32 %v3092, 2.1237322e-06
          %v3094 = vadd.f32 %v3093, 0.00028619796
          %v3095 = vmul.f32 %v3092, %v3094
          %v3096 = vadd.f32 %v3095, 0.0036580483
          %v3097 = vmul.f32 %v3092, %v3096
          %v3098 = vadd.f32 %v3097, 0.05243302
          %v3099 = vmul.f32 %v3092, %v3098
          %v3100 = vadd.f32 %v3099, 0.18741608
          %v3101 = vmul.f32 %v3092, %v3100
          %v3102 = vadd.f32 %v3101, 1.1283791
          %v3103 = vmul.f32 %v1467, %v3102
          %v3104 = vmul.f32 %v3092, 3.8918573e-05
          %v3105 = vadd.f32 %v3104, 0.001143296
          %v3106 = vmul.f32 %v3092, %v3105
          %v3107 = vadd.f32 %v3106, 0.014752088
          %v3108 = vmul.f32 %v3092, %v3107
          %v3109 = vadd.f32 %v3108, 0.112945676
          %v3110 = vmul.f32 %v3092, %v3109
          %v3111 = vadd.f32 %v3110, 0.4994258
          %v3112 = vmul.f32 %v3092, %v3111
          %v3113 = vadd.f32 %v3112, 1.0
          %v3114 = vrcp.pop %v3113
          %v3115 = vmul.f32 %v3113, %v3114
          %v3116 = vsub.f32 1.0, %v3115
          %v3117 = vmul.f32 %v3114, %v3116
          %v3118 = vadd.f32 %v3114, %v3117
          %vm3119 = vweird.f32 %v3113
          %vm3120 = vweird.f32 %v3114
          %vm3121 = vmor %vm3119, %vm3120
          %v3122 = vsel %vm3121, %v3114, %v3118
          %v3123 = vand.u32 2147483647, %v3113
          %vm3124 = vcmp.eq.f32.partialorder %v3123, 8.507059e+37
          %v3125 = vand.u32 %v3113, 2147483648
          %v3126 = vor.u32 1.1754944e-38, %v3125
          %v3127 = vsel %vm3124, %v3126, %v3122
          %v3128 = vmul.f32 %v3103, %v3127
          %v3129 = vmin.f32 %v3128, 1.0
          %v3130 = vmax.f32 %v3129, -1.0
          %v3131 = vmul.f32 %v1468, %v1468
          %v3132 = vmin.f32 16.0, %v3131
          %v3133 = vmul.f32 %v3132, 2.1237322e-06
          %v3134 = vadd.f32 %v3133, 0.00028619796
          %v3135 = vmul.f32 %v3132, %v3134
          %v3136 = vadd.f32 %v3135, 0.0036580483
          %v3137 = vmul.f32 %v3132, %v3136
          %v3138 = vadd.f32 %v3137, 0.05243302
          %v3139 = vmul.f32 %v3132, %v3138
          %v3140 = vadd.f32 %v3139, 0.18741608
          %v3141 = vmul.f32 %v3132, %v3140
          %v3142 = vadd.f32 %v3141, 1.1283791
          %v3143 = vmul.f32 %v1468, %v3142
          %v3144 = vmul.f32 %v3132, 3.8918573e-05
          %v3145 = vadd.f32 %v3144, 0.001143296
          %v3146 = vmul.f32 %v3132, %v3145
          %v3147 = vadd.f32 %v3146, 0.014752088
          %v3148 = vmul.f32 %v3132, %v3147
          %v3149 = vadd.f32 %v3148, 0.112945676
          %v3150 = vmul.f32 %v3132, %v3149
          %v3151 = vadd.f32 %v3150, 0.4994258
          %v3152 = vmul.f32 %v3132, %v3151
          %v3153 = vadd.f32 %v3152, 1.0
          %v3154 = vrcp.pop %v3153
          %v3155 = vmul.f32 %v3153, %v3154
          %v3156 = vsub.f32 1.0, %v3155
          %v3157 = vmul.f32 %v3154, %v3156
          %v3158 = vadd.f32 %v3154, %v3157
          %vm3159 = vweird.f32 %v3153
          %vm3160 = vweird.f32 %v3154
          %vm3161 = vmor %vm3159, %vm3160
          %v3162 = vsel %vm3161, %v3154, %v3158
          %v3163 = vand.u32 2147483647, %v3153
          %vm3164 = vcmp.eq.f32.partialorder %v3163, 8.507059e+37
          %v3165 = vand.u32 %v3153, 2147483648
          %v3166 = vor.u32 1.1754944e-38, %v3165
          %v3167 = vsel %vm3164, %v3166, %v3162
          %v3168 = vmul.f32 %v3143, %v3167
          %v3169 = vmin.f32 %v3168, 1.0
          %v3170 = vmax.f32 %v3169, -1.0
          %v3171 = vmul.f32 %v1469, %v1469
          %v3172 = vmin.f32 16.0, %v3171
          %v3173 = vmul.f32 %v3172, 2.1237322e-06
          %v3174 = vadd.f32 %v3173, 0.00028619796
          %v3175 = vmul.f32 %v3172, %v3174
          %v3176 = vadd.f32 %v3175, 0.0036580483
          %v3177 = vmul.f32 %v3172, %v3176
          %v3178 = vadd.f32 %v3177, 0.05243302
          %v3179 = vmul.f32 %v3172, %v3178
          %v3180 = vadd.f32 %v3179, 0.18741608
          %v3181 = vmul.f32 %v3172, %v3180
          %v3182 = vadd.f32 %v3181, 1.1283791
          %v3183 = vmul.f32 %v1469, %v3182
          %v3184 = vmul.f32 %v3172, 3.8918573e-05
          %v3185 = vadd.f32 %v3184, 0.001143296
          %v3186 = vmul.f32 %v3172, %v3185
          %v3187 = vadd.f32 %v3186, 0.014752088
          %v3188 = vmul.f32 %v3172, %v3187
          %v3189 = vadd.f32 %v3188, 0.112945676
          %v3190 = vmul.f32 %v3172, %v3189
          %v3191 = vadd.f32 %v3190, 0.4994258
          %v3192 = vmul.f32 %v3172, %v3191
          %v3193 = vadd.f32 %v3192, 1.0
          %v3194 = vrcp.pop %v3193
          %v3195 = vmul.f32 %v3193, %v3194
          %v3196 = vsub.f32 1.0, %v3195
          %v3197 = vmul.f32 %v3194, %v3196
          %v3198 = vadd.f32 %v3194, %v3197
          %vm3199 = vweird.f32 %v3193
          %vm3200 = vweird.f32 %v3194
          %vm3201 = vmor %vm3199, %vm3200
          %v3202 = vsel %vm3201, %v3194, %v3198
          %v3203 = vand.u32 2147483647, %v3193
          %vm3204 = vcmp.eq.f32.partialorder %v3203, 8.507059e+37
          %v3205 = vand.u32 %v3193, 2147483648
          %v3206 = vor.u32 1.1754944e-38, %v3205
          %v3207 = vsel %vm3204, %v3206, %v3202
          %v3208 = vmul.f32 %v3183, %v3207
          %v3209 = vmin.f32 %v3208, 1.0
          %v3210 = vmax.f32 %v3209, -1.0
          %v3211 = vmul.f32 %v1470, %v1470
          %v3212 = vmin.f32 16.0, %v3211
          %v3213 = vmul.f32 %v3212, 2.1237322e-06
          %v3214 = vadd.f32 %v3213, 0.00028619796
          %v3215 = vmul.f32 %v3212, %v3214
          %v3216 = vadd.f32 %v3215, 0.0036580483
          %v3217 = vmul.f32 %v3212, %v3216
          %v3218 = vadd.f32 %v3217, 0.05243302
          %v3219 = vmul.f32 %v3212, %v3218
          %v3220 = vadd.f32 %v3219, 0.18741608
          %v3221 = vmul.f32 %v3212, %v3220
          %v3222 = vadd.f32 %v3221, 1.1283791
          %v3223 = vmul.f32 %v1470, %v3222
          %v3224 = vmul.f32 %v3212, 3.8918573e-05
          %v3225 = vadd.f32 %v3224, 0.001143296
          %v3226 = vmul.f32 %v3212, %v3225
          %v3227 = vadd.f32 %v3226, 0.014752088
          %v3228 = vmul.f32 %v3212, %v3227
          %v3229 = vadd.f32 %v3228, 0.112945676
          %v3230 = vmul.f32 %v3212, %v3229
          %v3231 = vadd.f32 %v3230, 0.4994258
          %v3232 = vmul.f32 %v3212, %v3231
          %v3233 = vadd.f32 %v3232, 1.0
          %v3234 = vrcp.pop %v3233
          %v3235 = vmul.f32 %v3233, %v3234
          %v3236 = vsub.f32 1.0, %v3235
          %v3237 = vmul.f32 %v3234, %v3236
          %v3238 = vadd.f32 %v3234, %v3237
          %vm3239 = vweird.f32 %v3233
          %vm3240 = vweird.f32 %v3234
          %vm3241 = vmor %vm3239, %vm3240
          %v3242 = vsel %vm3241, %v3234, %v3238
          %v3243 = vand.u32 2147483647, %v3233
          %vm3244 = vcmp.eq.f32.partialorder %v3243, 8.507059e+37
          %v3245 = vand.u32 %v3233, 2147483648
          %v3246 = vor.u32 1.1754944e-38, %v3245
          %v3247 = vsel %vm3244, %v3246, %v3242
          %v3248 = vmul.f32 %v3223, %v3247
          %v3249 = vmin.f32 %v3248, 1.0
          %v3250 = vmax.f32 %v3249, -1.0
          %v3251 = vmul.f32 %v1471, %v1471
          %v3252 = vmin.f32 16.0, %v3251
          %v3253 = vmul.f32 %v3252, 2.1237322e-06
          %v3254 = vadd.f32 %v3253, 0.00028619796
          %v3255 = vmul.f32 %v3252, %v3254
          %v3256 = vadd.f32 %v3255, 0.0036580483
          %v3257 = vmul.f32 %v3252, %v3256
          %v3258 = vadd.f32 %v3257, 0.05243302
          %v3259 = vmul.f32 %v3252, %v3258
          %v3260 = vadd.f32 %v3259, 0.18741608
          %v3261 = vmul.f32 %v3252, %v3260
          %v3262 = vadd.f32 %v3261, 1.1283791
          %v3263 = vmul.f32 %v1471, %v3262
          %v3264 = vmul.f32 %v3252, 3.8918573e-05
          %v3265 = vadd.f32 %v3264, 0.001143296
          %v3266 = vmul.f32 %v3252, %v3265
          %v3267 = vadd.f32 %v3266, 0.014752088
          %v3268 = vmul.f32 %v3252, %v3267
          %v3269 = vadd.f32 %v3268, 0.112945676
          %v3270 = vmul.f32 %v3252, %v3269
          %v3271 = vadd.f32 %v3270, 0.4994258
          %v3272 = vmul.f32 %v3252, %v3271
          %v3273 = vadd.f32 %v3272, 1.0
          %v3274 = vrcp.pop %v3273
          %v3275 = vmul.f32 %v3273, %v3274
          %v3276 = vsub.f32 1.0, %v3275
          %v3277 = vmul.f32 %v3274, %v3276
          %v3278 = vadd.f32 %v3274, %v3277
          %vm3279 = vweird.f32 %v3273
          %vm3280 = vweird.f32 %v3274
          %vm3281 = vmor %vm3279, %vm3280
          %v3282 = vsel %vm3281, %v3274, %v3278
          %v3283 = vand.u32 2147483647, %v3273
          %vm3284 = vcmp.eq.f32.partialorder %v3283, 8.507059e+37
          %v3285 = vand.u32 %v3273, 2147483648
          %v3286 = vor.u32 1.1754944e-38, %v3285
          %v3287 = vsel %vm3284, %v3286, %v3282
          %v3288 = vmul.f32 %v3263, %v3287
          %v3289 = vmin.f32 %v3288, 1.0
          %v3290 = vmax.f32 %v3289, -1.0
          %v3291 = vmul.f32 %v1472, %v1472
          %v3292 = vmin.f32 16.0, %v3291
          %v3293 = vmul.f32 %v3292, 2.1237322e-06
          %v3294 = vadd.f32 %v3293, 0.00028619796
          %v3295 = vmul.f32 %v3292, %v3294
          %v3296 = vadd.f32 %v3295, 0.0036580483
          %v3297 = vmul.f32 %v3292, %v3296
          %v3298 = vadd.f32 %v3297, 0.05243302
          %v3299 = vmul.f32 %v3292, %v3298
          %v3300 = vadd.f32 %v3299, 0.18741608
          %v3301 = vmul.f32 %v3292, %v3300
          %v3302 = vadd.f32 %v3301, 1.1283791
          %v3303 = vmul.f32 %v1472, %v3302
          %v3304 = vmul.f32 %v3292, 3.8918573e-05
          %v3305 = vadd.f32 %v3304, 0.001143296
          %v3306 = vmul.f32 %v3292, %v3305
          %v3307 = vadd.f32 %v3306, 0.014752088
          %v3308 = vmul.f32 %v3292, %v3307
          %v3309 = vadd.f32 %v3308, 0.112945676
          %v3310 = vmul.f32 %v3292, %v3309
          %v3311 = vadd.f32 %v3310, 0.4994258
          %v3312 = vmul.f32 %v3292, %v3311
          %v3313 = vadd.f32 %v3312, 1.0
          %v3314 = vrcp.pop %v3313
          %v3315 = vmul.f32 %v3313, %v3314
          %v3316 = vsub.f32 1.0, %v3315
          %v3317 = vmul.f32 %v3314, %v3316
          %v3318 = vadd.f32 %v3314, %v3317
          %vm3319 = vweird.f32 %v3313
          %vm3320 = vweird.f32 %v3314
          %vm3321 = vmor %vm3319, %vm3320
          %v3322 = vsel %vm3321, %v3314, %v3318
          %v3323 = vand.u32 2147483647, %v3313
          %vm3324 = vcmp.eq.f32.partialorder %v3323, 8.507059e+37
          %v3325 = vand.u32 %v3313, 2147483648
          %v3326 = vor.u32 1.1754944e-38, %v3325
          %v3327 = vsel %vm3324, %v3326, %v3322
          %v3328 = vmul.f32 %v3303, %v3327
          %v3329 = vmin.f32 %v3328, 1.0
          %v3330 = vmax.f32 %v3329, -1.0
          %v3331 = vmul.f32 %v1473, %v1473
          %v3332 = vmin.f32 16.0, %v3331
          %v3333 = vmul.f32 %v3332, 2.1237322e-06
          %v3334 = vadd.f32 %v3333, 0.00028619796
          %v3335 = vmul.f32 %v3332, %v3334
          %v3336 = vadd.f32 %v3335, 0.0036580483
          %v3337 = vmul.f32 %v3332, %v3336
          %v3338 = vadd.f32 %v3337, 0.05243302
          %v3339 = vmul.f32 %v3332, %v3338
          %v3340 = vadd.f32 %v3339, 0.18741608
          %v3341 = vmul.f32 %v3332, %v3340
          %v3342 = vadd.f32 %v3341, 1.1283791
          %v3343 = vmul.f32 %v1473, %v3342
          %v3344 = vmul.f32 %v3332, 3.8918573e-05
          %v3345 = vadd.f32 %v3344, 0.001143296
          %v3346 = vmul.f32 %v3332, %v3345
          %v3347 = vadd.f32 %v3346, 0.014752088
          %v3348 = vmul.f32 %v3332, %v3347
          %v3349 = vadd.f32 %v3348, 0.112945676
          %v3350 = vmul.f32 %v3332, %v3349
          %v3351 = vadd.f32 %v3350, 0.4994258
          %v3352 = vmul.f32 %v3332, %v3351
          %v3353 = vadd.f32 %v3352, 1.0
          %v3354 = vrcp.pop %v3353
          %v3355 = vmul.f32 %v3353, %v3354
          %v3356 = vsub.f32 1.0, %v3355
          %v3357 = vmul.f32 %v3354, %v3356
          %v3358 = vadd.f32 %v3354, %v3357
          %vm3359 = vweird.f32 %v3353
          %vm3360 = vweird.f32 %v3354
          %vm3361 = vmor %vm3359, %vm3360
          %v3362 = vsel %vm3361, %v3354, %v3358
          %v3363 = vand.u32 2147483647, %v3353
          %vm3364 = vcmp.eq.f32.partialorder %v3363, 8.507059e+37
          %v3365 = vand.u32 %v3353, 2147483648
          %v3366 = vor.u32 1.1754944e-38, %v3365
          %v3367 = vsel %vm3364, %v3366, %v3362
          %v3368 = vmul.f32 %v3343, %v3367
          %v3369 = vmin.f32 %v3368, 1.0
          %v3370 = vmax.f32 %v3369, -1.0
          %v3371 = vmul.f32 %v1474, %v1474
          %v3372 = vmin.f32 16.0, %v3371
          %v3373 = vmul.f32 %v3372, 2.1237322e-06
          %v3374 = vadd.f32 %v3373, 0.00028619796
          %v3375 = vmul.f32 %v3372, %v3374
          %v3376 = vadd.f32 %v3375, 0.0036580483
          %v3377 = vmul.f32 %v3372, %v3376
          %v3378 = vadd.f32 %v3377, 0.05243302
          %v3379 = vmul.f32 %v3372, %v3378
          %v3380 = vadd.f32 %v3379, 0.18741608
          %v3381 = vmul.f32 %v3372, %v3380
          %v3382 = vadd.f32 %v3381, 1.1283791
          %v3383 = vmul.f32 %v1474, %v3382
          %v3384 = vmul.f32 %v3372, 3.8918573e-05
          %v3385 = vadd.f32 %v3384, 0.001143296
          %v3386 = vmul.f32 %v3372, %v3385
          %v3387 = vadd.f32 %v3386, 0.014752088
          %v3388 = vmul.f32 %v3372, %v3387
          %v3389 = vadd.f32 %v3388, 0.112945676
          %v3390 = vmul.f32 %v3372, %v3389
          %v3391 = vadd.f32 %v3390, 0.4994258
          %v3392 = vmul.f32 %v3372, %v3391
          %v3393 = vadd.f32 %v3392, 1.0
          %v3394 = vrcp.pop %v3393
          %v3395 = vmul.f32 %v3393, %v3394
          %v3396 = vsub.f32 1.0, %v3395
          %v3397 = vmul.f32 %v3394, %v3396
          %v3398 = vadd.f32 %v3394, %v3397
          %vm3399 = vweird.f32 %v3393
          %vm3400 = vweird.f32 %v3394
          %vm3401 = vmor %vm3399, %vm3400
          %v3402 = vsel %vm3401, %v3394, %v3398
          %v3403 = vand.u32 2147483647, %v3393
          %vm3404 = vcmp.eq.f32.partialorder %v3403, 8.507059e+37
          %v3405 = vand.u32 %v3393, 2147483648
          %v3406 = vor.u32 1.1754944e-38, %v3405
          %v3407 = vsel %vm3404, %v3406, %v3402
          %v3408 = vmul.f32 %v3383, %v3407
          %v3409 = vmin.f32 %v3408, 1.0
          %v3410 = vmax.f32 %v3409, -1.0
          %v3411 = vmul.f32 %v1475, %v1475
          %v3412 = vmin.f32 16.0, %v3411
          %v3413 = vmul.f32 %v3412, 2.1237322e-06
          %v3414 = vadd.f32 %v3413, 0.00028619796
          %v3415 = vmul.f32 %v3412, %v3414
          %v3416 = vadd.f32 %v3415, 0.0036580483
          %v3417 = vmul.f32 %v3412, %v3416
          %v3418 = vadd.f32 %v3417, 0.05243302
          %v3419 = vmul.f32 %v3412, %v3418
          %v3420 = vadd.f32 %v3419, 0.18741608
          %v3421 = vmul.f32 %v3412, %v3420
          %v3422 = vadd.f32 %v3421, 1.1283791
          %v3423 = vmul.f32 %v1475, %v3422
          %v3424 = vmul.f32 %v3412, 3.8918573e-05
          %v3425 = vadd.f32 %v3424, 0.001143296
          %v3426 = vmul.f32 %v3412, %v3425
          %v3427 = vadd.f32 %v3426, 0.014752088
          %v3428 = vmul.f32 %v3412, %v3427
          %v3429 = vadd.f32 %v3428, 0.112945676
          %v3430 = vmul.f32 %v3412, %v3429
          %v3431 = vadd.f32 %v3430, 0.4994258
          %v3432 = vmul.f32 %v3412, %v3431
          %v3433 = vadd.f32 %v3432, 1.0
          %v3434 = vrcp.pop %v3433
          %v3435 = vmul.f32 %v3433, %v3434
          %v3436 = vsub.f32 1.0, %v3435
          %v3437 = vmul.f32 %v3434, %v3436
          %v3438 = vadd.f32 %v3434, %v3437
          %vm3439 = vweird.f32 %v3433
          %vm3440 = vweird.f32 %v3434
          %vm3441 = vmor %vm3439, %vm3440
          %v3442 = vsel %vm3441, %v3434, %v3438
          %v3443 = vand.u32 2147483647, %v3433
          %vm3444 = vcmp.eq.f32.partialorder %v3443, 8.507059e+37
          %v3445 = vand.u32 %v3433, 2147483648
          %v3446 = vor.u32 1.1754944e-38, %v3445
          %v3447 = vsel %vm3444, %v3446, %v3442
          %v3448 = vmul.f32 %v3423, %v3447
          %v3449 = vmin.f32 %v3448, 1.0
          %v3450 = vmax.f32 %v3449, -1.0
          %v3451 = vmul.f32 %v1476, %v1476
          %v3452 = vmin.f32 16.0, %v3451
          %v3453 = vmul.f32 %v3452, 2.1237322e-06
          %v3454 = vadd.f32 %v3453, 0.00028619796
          %v3455 = vmul.f32 %v3452, %v3454
          %v3456 = vadd.f32 %v3455, 0.0036580483
          %v3457 = vmul.f32 %v3452, %v3456
          %v3458 = vadd.f32 %v3457, 0.05243302
          %v3459 = vmul.f32 %v3452, %v3458
          %v3460 = vadd.f32 %v3459, 0.18741608
          %v3461 = vmul.f32 %v3452, %v3460
          %v3462 = vadd.f32 %v3461, 1.1283791
          %v3463 = vmul.f32 %v1476, %v3462
          %v3464 = vmul.f32 %v3452, 3.8918573e-05
          %v3465 = vadd.f32 %v3464, 0.001143296
          %v3466 = vmul.f32 %v3452, %v3465
          %v3467 = vadd.f32 %v3466, 0.014752088
          %v3468 = vmul.f32 %v3452, %v3467
          %v3469 = vadd.f32 %v3468, 0.112945676
          %v3470 = vmul.f32 %v3452, %v3469
          %v3471 = vadd.f32 %v3470, 0.4994258
          %v3472 = vmul.f32 %v3452, %v3471
          %v3473 = vadd.f32 %v3472, 1.0
          %v3474 = vrcp.pop %v3473
          %v3475 = vmul.f32 %v3473, %v3474
          %v3476 = vsub.f32 1.0, %v3475
          %v3477 = vmul.f32 %v3474, %v3476
          %v3478 = vadd.f32 %v3474, %v3477
          %vm3479 = vweird.f32 %v3473
          %vm3480 = vweird.f32 %v3474
          %vm3481 = vmor %vm3479, %vm3480
          %v3482 = vsel %vm3481, %v3474, %v3478
          %v3483 = vand.u32 2147483647, %v3473
          %vm3484 = vcmp.eq.f32.partialorder %v3483, 8.507059e+37
          %v3485 = vand.u32 %v3473, 2147483648
          %v3486 = vor.u32 1.1754944e-38, %v3485
          %v3487 = vsel %vm3484, %v3486, %v3482
          %v3488 = vmul.f32 %v3463, %v3487
          %v3489 = vmin.f32 %v3488, 1.0
          %v3490 = vmax.f32 %v3489, -1.0
          %v3491 = vmul.f32 %v1477, %v1477
          %v3492 = vmin.f32 16.0, %v3491
          %v3493 = vmul.f32 %v3492, 2.1237322e-06
          %v3494 = vadd.f32 %v3493, 0.00028619796
          %v3495 = vmul.f32 %v3492, %v3494
          %v3496 = vadd.f32 %v3495, 0.0036580483
          %v3497 = vmul.f32 %v3492, %v3496
          %v3498 = vadd.f32 %v3497, 0.05243302
          %v3499 = vmul.f32 %v3492, %v3498
          %v3500 = vadd.f32 %v3499, 0.18741608
          %v3501 = vmul.f32 %v3492, %v3500
          %v3502 = vadd.f32 %v3501, 1.1283791
          %v3503 = vmul.f32 %v1477, %v3502
          %v3504 = vmul.f32 %v3492, 3.8918573e-05
          %v3505 = vadd.f32 %v3504, 0.001143296
          %v3506 = vmul.f32 %v3492, %v3505
          %v3507 = vadd.f32 %v3506, 0.014752088
          %v3508 = vmul.f32 %v3492, %v3507
          %v3509 = vadd.f32 %v3508, 0.112945676
          %v3510 = vmul.f32 %v3492, %v3509
          %v3511 = vadd.f32 %v3510, 0.4994258
          %v3512 = vmul.f32 %v3492, %v3511
          %v3513 = vadd.f32 %v3512, 1.0
          %v3514 = vrcp.pop %v3513
          %v3515 = vmul.f32 %v3513, %v3514
          %v3516 = vsub.f32 1.0, %v3515
          %v3517 = vmul.f32 %v3514, %v3516
          %v3518 = vadd.f32 %v3514, %v3517
          %vm3519 = vweird.f32 %v3513
          %vm3520 = vweird.f32 %v3514
          %vm3521 = vmor %vm3519, %vm3520
          %v3522 = vsel %vm3521, %v3514, %v3518
          %v3523 = vand.u32 2147483647, %v3513
          %vm3524 = vcmp.eq.f32.partialorder %v3523, 8.507059e+37
          %v3525 = vand.u32 %v3513, 2147483648
          %v3526 = vor.u32 1.1754944e-38, %v3525
          %v3527 = vsel %vm3524, %v3526, %v3522
          %v3528 = vmul.f32 %v3503, %v3527
          %v3529 = vmin.f32 %v3528, 1.0
          %v3530 = vmax.f32 %v3529, -1.0
          %v3531 = vmul.f32 %v1478, %v1478
          %v3532 = vmin.f32 16.0, %v3531
          %v3533 = vmul.f32 %v3532, 2.1237322e-06
          %v3534 = vadd.f32 %v3533, 0.00028619796
          %v3535 = vmul.f32 %v3532, %v3534
          %v3536 = vadd.f32 %v3535, 0.0036580483
          %v3537 = vmul.f32 %v3532, %v3536
          %v3538 = vadd.f32 %v3537, 0.05243302
          %v3539 = vmul.f32 %v3532, %v3538
          %v3540 = vadd.f32 %v3539, 0.18741608
          %v3541 = vmul.f32 %v3532, %v3540
          %v3542 = vadd.f32 %v3541, 1.1283791
          %v3543 = vmul.f32 %v1478, %v3542
          %v3544 = vmul.f32 %v3532, 3.8918573e-05
          %v3545 = vadd.f32 %v3544, 0.001143296
          %v3546 = vmul.f32 %v3532, %v3545
          %v3547 = vadd.f32 %v3546, 0.014752088
          %v3548 = vmul.f32 %v3532, %v3547
          %v3549 = vadd.f32 %v3548, 0.112945676
          %v3550 = vmul.f32 %v3532, %v3549
          %v3551 = vadd.f32 %v3550, 0.4994258
          %v3552 = vmul.f32 %v3532, %v3551
          %v3553 = vadd.f32 %v3552, 1.0
          %v3554 = vrcp.pop %v3553
          %v3555 = vmul.f32 %v3553, %v3554
          %v3556 = vsub.f32 1.0, %v3555
          %v3557 = vmul.f32 %v3554, %v3556
          %v3558 = vadd.f32 %v3554, %v3557
          %vm3559 = vweird.f32 %v3553
          %vm3560 = vweird.f32 %v3554
          %vm3561 = vmor %vm3559, %vm3560
          %v3562 = vsel %vm3561, %v3554, %v3558
          %v3563 = vand.u32 2147483647, %v3553
          %vm3564 = vcmp.eq.f32.partialorder %v3563, 8.507059e+37
          %v3565 = vand.u32 %v3553, 2147483648
          %v3566 = vor.u32 1.1754944e-38, %v3565
          %v3567 = vsel %vm3564, %v3566, %v3562
          %v3568 = vmul.f32 %v3543, %v3567
          %v3569 = vmin.f32 %v3568, 1.0
          %v3570 = vmax.f32 %v3569, -1.0
          %v3571 = vmul.f32 %v1479, %v1479
          %v3572 = vmin.f32 16.0, %v3571
          %v3573 = vmul.f32 %v3572, 2.1237322e-06
          %v3574 = vadd.f32 %v3573, 0.00028619796
          %v3575 = vmul.f32 %v3572, %v3574
          %v3576 = vadd.f32 %v3575, 0.0036580483
          %v3577 = vmul.f32 %v3572, %v3576
          %v3578 = vadd.f32 %v3577, 0.05243302
          %v3579 = vmul.f32 %v3572, %v3578
          %v3580 = vadd.f32 %v3579, 0.18741608
          %v3581 = vmul.f32 %v3572, %v3580
          %v3582 = vadd.f32 %v3581, 1.1283791
          %v3583 = vmul.f32 %v1479, %v3582
          %v3584 = vmul.f32 %v3572, 3.8918573e-05
          %v3585 = vadd.f32 %v3584, 0.001143296
          %v3586 = vmul.f32 %v3572, %v3585
          %v3587 = vadd.f32 %v3586, 0.014752088
          %v3588 = vmul.f32 %v3572, %v3587
          %v3589 = vadd.f32 %v3588, 0.112945676
          %v3590 = vmul.f32 %v3572, %v3589
          %v3591 = vadd.f32 %v3590, 0.4994258
          %v3592 = vmul.f32 %v3572, %v3591
          %v3593 = vadd.f32 %v3592, 1.0
          %v3594 = vrcp.pop %v3593
          %v3595 = vmul.f32 %v3593, %v3594
          %v3596 = vsub.f32 1.0, %v3595
          %v3597 = vmul.f32 %v3594, %v3596
          %v3598 = vadd.f32 %v3594, %v3597
          %vm3599 = vweird.f32 %v3593
          %vm3600 = vweird.f32 %v3594
          %vm3601 = vmor %vm3599, %vm3600
          %v3602 = vsel %vm3601, %v3594, %v3598
          %v3603 = vand.u32 2147483647, %v3593
          %vm3604 = vcmp.eq.f32.partialorder %v3603, 8.507059e+37
          %v3605 = vand.u32 %v3593, 2147483648
          %v3606 = vor.u32 1.1754944e-38, %v3605
          %v3607 = vsel %vm3604, %v3606, %v3602
          %v3608 = vmul.f32 %v3583, %v3607
          %v3609 = vmin.f32 %v3608, 1.0
          %v3610 = vmax.f32 %v3609, -1.0
          %v3611 = vmul.f32 %v1480, %v1480
          %v3612 = vmin.f32 16.0, %v3611
          %v3613 = vmul.f32 %v3612, 2.1237322e-06
          %v3614 = vadd.f32 %v3613, 0.00028619796
          %v3615 = vmul.f32 %v3612, %v3614
          %v3616 = vadd.f32 %v3615, 0.0036580483
          %v3617 = vmul.f32 %v3612, %v3616
          %v3618 = vadd.f32 %v3617, 0.05243302
          %v3619 = vmul.f32 %v3612, %v3618
          %v3620 = vadd.f32 %v3619, 0.18741608
          %v3621 = vmul.f32 %v3612, %v3620
          %v3622 = vadd.f32 %v3621, 1.1283791
          %v3623 = vmul.f32 %v1480, %v3622
          %v3624 = vmul.f32 %v3612, 3.8918573e-05
          %v3625 = vadd.f32 %v3624, 0.001143296
          %v3626 = vmul.f32 %v3612, %v3625
          %v3627 = vadd.f32 %v3626, 0.014752088
          %v3628 = vmul.f32 %v3612, %v3627
          %v3629 = vadd.f32 %v3628, 0.112945676
          %v3630 = vmul.f32 %v3612, %v3629
          %v3631 = vadd.f32 %v3630, 0.4994258
          %v3632 = vmul.f32 %v3612, %v3631
          %v3633 = vadd.f32 %v3632, 1.0
          %v3634 = vrcp.pop %v3633
          %v3635 = vmul.f32 %v3633, %v3634
          %v3636 = vsub.f32 1.0, %v3635
          %v3637 = vmul.f32 %v3634, %v3636
          %v3638 = vadd.f32 %v3634, %v3637
          %vm3639 = vweird.f32 %v3633
          %vm3640 = vweird.f32 %v3634
          %vm3641 = vmor %vm3639, %vm3640
          %v3642 = vsel %vm3641, %v3634, %v3638
          %v3643 = vand.u32 2147483647, %v3633
          %vm3644 = vcmp.eq.f32.partialorder %v3643, 8.507059e+37
          %v3645 = vand.u32 %v3633, 2147483648
          %v3646 = vor.u32 1.1754944e-38, %v3645
          %v3647 = vsel %vm3644, %v3646, %v3642
          %v3648 = vmul.f32 %v3623, %v3647
          %v3649 = vmin.f32 %v3648, 1.0
          %v3650 = vmax.f32 %v3649, -1.0
          %v3651 = vmul.f32 %v1481, %v1481
          %v3652 = vmin.f32 16.0, %v3651
          %v3653 = vmul.f32 %v3652, 2.1237322e-06
          %v3654 = vadd.f32 %v3653, 0.00028619796
          %v3655 = vmul.f32 %v3652, %v3654
          %v3656 = vadd.f32 %v3655, 0.0036580483
          %v3657 = vmul.f32 %v3652, %v3656
          %v3658 = vadd.f32 %v3657, 0.05243302
          %v3659 = vmul.f32 %v3652, %v3658
          %v3660 = vadd.f32 %v3659, 0.18741608
          %v3661 = vmul.f32 %v3652, %v3660
          %v3662 = vadd.f32 %v3661, 1.1283791
          %v3663 = vmul.f32 %v1481, %v3662
          %v3664 = vmul.f32 %v3652, 3.8918573e-05
          %v3665 = vadd.f32 %v3664, 0.001143296
          %v3666 = vmul.f32 %v3652, %v3665
          %v3667 = vadd.f32 %v3666, 0.014752088
          %v3668 = vmul.f32 %v3652, %v3667
          %v3669 = vadd.f32 %v3668, 0.112945676
          %v3670 = vmul.f32 %v3652, %v3669
          %v3671 = vadd.f32 %v3670, 0.4994258
          %v3672 = vmul.f32 %v3652, %v3671
          %v3673 = vadd.f32 %v3672, 1.0
          %v3674 = vrcp.pop %v3673
          %v3675 = vmul.f32 %v3673, %v3674
          %v3676 = vsub.f32 1.0, %v3675
          %v3677 = vmul.f32 %v3674, %v3676
          %v3678 = vadd.f32 %v3674, %v3677
          %vm3679 = vweird.f32 %v3673
          %vm3680 = vweird.f32 %v3674
          %vm3681 = vmor %vm3679, %vm3680
          %v3682 = vsel %vm3681, %v3674, %v3678
          %v3683 = vand.u32 2147483647, %v3673
          %vm3684 = vcmp.eq.f32.partialorder %v3683, 8.507059e+37
          %v3685 = vand.u32 %v3673, 2147483648
          %v3686 = vor.u32 1.1754944e-38, %v3685
          %v3687 = vsel %vm3684, %v3686, %v3682
          %v3688 = vmul.f32 %v3663, %v3687
          %v3689 = vmin.f32 %v3688, 1.0
          %v3690 = vmax.f32 %v3689, -1.0
          %v3691 = vmul.f32 %v1482, %v1482
          %v3692 = vmin.f32 16.0, %v3691
          %v3693 = vmul.f32 %v3692, 2.1237322e-06
          %v3694 = vadd.f32 %v3693, 0.00028619796
          %v3695 = vmul.f32 %v3692, %v3694
          %v3696 = vadd.f32 %v3695, 0.0036580483
          %v3697 = vmul.f32 %v3692, %v3696
          %v3698 = vadd.f32 %v3697, 0.05243302
          %v3699 = vmul.f32 %v3692, %v3698
          %v3700 = vadd.f32 %v3699, 0.18741608
          %v3701 = vmul.f32 %v3692, %v3700
          %v3702 = vadd.f32 %v3701, 1.1283791
          %v3703 = vmul.f32 %v1482, %v3702
          %v3704 = vmul.f32 %v3692, 3.8918573e-05
          %v3705 = vadd.f32 %v3704, 0.001143296
          %v3706 = vmul.f32 %v3692, %v3705
          %v3707 = vadd.f32 %v3706, 0.014752088
          %v3708 = vmul.f32 %v3692, %v3707
          %v3709 = vadd.f32 %v3708, 0.112945676
          %v3710 = vmul.f32 %v3692, %v3709
          %v3711 = vadd.f32 %v3710, 0.4994258
          %v3712 = vmul.f32 %v3692, %v3711
          %v3713 = vadd.f32 %v3712, 1.0
          %v3714 = vrcp.pop %v3713
          %v3715 = vmul.f32 %v3713, %v3714
          %v3716 = vsub.f32 1.0, %v3715
          %v3717 = vmul.f32 %v3714, %v3716
          %v3718 = vadd.f32 %v3714, %v3717
          %vm3719 = vweird.f32 %v3713
          %vm3720 = vweird.f32 %v3714
          %vm3721 = vmor %vm3719, %vm3720
          %v3722 = vsel %vm3721, %v3714, %v3718
          %v3723 = vand.u32 2147483647, %v3713
          %vm3724 = vcmp.eq.f32.partialorder %v3723, 8.507059e+37
          %v3725 = vand.u32 %v3713, 2147483648
          %v3726 = vor.u32 1.1754944e-38, %v3725
          %v3727 = vsel %vm3724, %v3726, %v3722
          %v3728 = vmul.f32 %v3703, %v3727
          %v3729 = vmin.f32 %v3728, 1.0
          %v3730 = vmax.f32 %v3729, -1.0
          %v3731 = vmul.f32 %v1483, %v1483
          %v3732 = vmin.f32 16.0, %v3731
          %v3733 = vmul.f32 %v3732, 2.1237322e-06
          %v3734 = vadd.f32 %v3733, 0.00028619796
          %v3735 = vmul.f32 %v3732, %v3734
          %v3736 = vadd.f32 %v3735, 0.0036580483
          %v3737 = vmul.f32 %v3732, %v3736
          %v3738 = vadd.f32 %v3737, 0.05243302
          %v3739 = vmul.f32 %v3732, %v3738
          %v3740 = vadd.f32 %v3739, 0.18741608
          %v3741 = vmul.f32 %v3732, %v3740
          %v3742 = vadd.f32 %v3741, 1.1283791
          %v3743 = vmul.f32 %v1483, %v3742
          %v3744 = vmul.f32 %v3732, 3.8918573e-05
          %v3745 = vadd.f32 %v3744, 0.001143296
          %v3746 = vmul.f32 %v3732, %v3745
          %v3747 = vadd.f32 %v3746, 0.014752088
          %v3748 = vmul.f32 %v3732, %v3747
          %v3749 = vadd.f32 %v3748, 0.112945676
          %v3750 = vmul.f32 %v3732, %v3749
          %v3751 = vadd.f32 %v3750, 0.4994258
          %v3752 = vmul.f32 %v3732, %v3751
          %v3753 = vadd.f32 %v3752, 1.0
          %v3754 = vrcp.pop %v3753
          %v3755 = vmul.f32 %v3753, %v3754
          %v3756 = vsub.f32 1.0, %v3755
          %v3757 = vmul.f32 %v3754, %v3756
          %v3758 = vadd.f32 %v3754, %v3757
          %vm3759 = vweird.f32 %v3753
          %vm3760 = vweird.f32 %v3754
          %vm3761 = vmor %vm3759, %vm3760
          %v3762 = vsel %vm3761, %v3754, %v3758
          %v3763 = vand.u32 2147483647, %v3753
          %vm3764 = vcmp.eq.f32.partialorder %v3763, 8.507059e+37
          %v3765 = vand.u32 %v3753, 2147483648
          %v3766 = vor.u32 1.1754944e-38, %v3765
          %v3767 = vsel %vm3764, %v3766, %v3762
          %v3768 = vmul.f32 %v3743, %v3767
          %v3769 = vmin.f32 %v3768, 1.0
          %v3770 = vmax.f32 %v3769, -1.0
          %v3771 = vmul.f32 %v1484, %v1484
          %v3772 = vmin.f32 16.0, %v3771
          %v3773 = vmul.f32 %v3772, 2.1237322e-06
          %v3774 = vadd.f32 %v3773, 0.00028619796
          %v3775 = vmul.f32 %v3772, %v3774
          %v3776 = vadd.f32 %v3775, 0.0036580483
          %v3777 = vmul.f32 %v3772, %v3776
          %v3778 = vadd.f32 %v3777, 0.05243302
          %v3779 = vmul.f32 %v3772, %v3778
          %v3780 = vadd.f32 %v3779, 0.18741608
          %v3781 = vmul.f32 %v3772, %v3780
          %v3782 = vadd.f32 %v3781, 1.1283791
          %v3783 = vmul.f32 %v1484, %v3782
          %v3784 = vmul.f32 %v3772, 3.8918573e-05
          %v3785 = vadd.f32 %v3784, 0.001143296
          %v3786 = vmul.f32 %v3772, %v3785
          %v3787 = vadd.f32 %v3786, 0.014752088
          %v3788 = vmul.f32 %v3772, %v3787
          %v3789 = vadd.f32 %v3788, 0.112945676
          %v3790 = vmul.f32 %v3772, %v3789
          %v3791 = vadd.f32 %v3790, 0.4994258
          %v3792 = vmul.f32 %v3772, %v3791
          %v3793 = vadd.f32 %v3792, 1.0
          %v3794 = vrcp.pop %v3793
          %v3795 = vmul.f32 %v3793, %v3794
          %v3796 = vsub.f32 1.0, %v3795
          %v3797 = vmul.f32 %v3794, %v3796
          %v3798 = vadd.f32 %v3794, %v3797
          %vm3799 = vweird.f32 %v3793
          %vm3800 = vweird.f32 %v3794
          %vm3801 = vmor %vm3799, %vm3800
          %v3802 = vsel %vm3801, %v3794, %v3798
          %v3803 = vand.u32 2147483647, %v3793
          %vm3804 = vcmp.eq.f32.partialorder %v3803, 8.507059e+37
          %v3805 = vand.u32 %v3793, 2147483648
          %v3806 = vor.u32 1.1754944e-38, %v3805
          %v3807 = vsel %vm3804, %v3806, %v3802
          %v3808 = vmul.f32 %v3783, %v3807
          %v3809 = vmin.f32 %v3808, 1.0
          %v3810 = vmax.f32 %v3809, -1.0
          %v3811 = vmul.f32 %v1485, %v1485
          %v3812 = vmin.f32 16.0, %v3811
          %v3813 = vmul.f32 %v3812, 2.1237322e-06
          %v3814 = vadd.f32 %v3813, 0.00028619796
          %v3815 = vmul.f32 %v3812, %v3814
          %v3816 = vadd.f32 %v3815, 0.0036580483
          %v3817 = vmul.f32 %v3812, %v3816
          %v3818 = vadd.f32 %v3817, 0.05243302
          %v3819 = vmul.f32 %v3812, %v3818
          %v3820 = vadd.f32 %v3819, 0.18741608
          %v3821 = vmul.f32 %v3812, %v3820
          %v3822 = vadd.f32 %v3821, 1.1283791
          %v3823 = vmul.f32 %v1485, %v3822
          %v3824 = vmul.f32 %v3812, 3.8918573e-05
          %v3825 = vadd.f32 %v3824, 0.001143296
          %v3826 = vmul.f32 %v3812, %v3825
          %v3827 = vadd.f32 %v3826, 0.014752088
          %v3828 = vmul.f32 %v3812, %v3827
          %v3829 = vadd.f32 %v3828, 0.112945676
          %v3830 = vmul.f32 %v3812, %v3829
          %v3831 = vadd.f32 %v3830, 0.4994258
          %v3832 = vmul.f32 %v3812, %v3831
          %v3833 = vadd.f32 %v3832, 1.0
          %v3834 = vrcp.pop %v3833
          %v3835 = vmul.f32 %v3833, %v3834
          %v3836 = vsub.f32 1.0, %v3835
          %v3837 = vmul.f32 %v3834, %v3836
          %v3838 = vadd.f32 %v3834, %v3837
          %vm3839 = vweird.f32 %v3833
          %vm3840 = vweird.f32 %v3834
          %vm3841 = vmor %vm3839, %vm3840
          %v3842 = vsel %vm3841, %v3834, %v3838
          %v3843 = vand.u32 2147483647, %v3833
          %vm3844 = vcmp.eq.f32.partialorder %v3843, 8.507059e+37
          %v3845 = vand.u32 %v3833, 2147483648
          %v3846 = vor.u32 1.1754944e-38, %v3845
          %v3847 = vsel %vm3844, %v3846, %v3842
          %v3848 = vmul.f32 %v3823, %v3847
          %v3849 = vmin.f32 %v3848, 1.0
          %v3850 = vmax.f32 %v3849, -1.0
          %v3851 = vmul.f32 %v1486, %v1486
          %v3852 = vmin.f32 16.0, %v3851
          %v3853 = vmul.f32 %v3852, 2.1237322e-06
          %v3854 = vadd.f32 %v3853, 0.00028619796
          %v3855 = vmul.f32 %v3852, %v3854
          %v3856 = vadd.f32 %v3855, 0.0036580483
          %v3857 = vmul.f32 %v3852, %v3856
          %v3858 = vadd.f32 %v3857, 0.05243302
          %v3859 = vmul.f32 %v3852, %v3858
          %v3860 = vadd.f32 %v3859, 0.18741608
          %v3861 = vmul.f32 %v3852, %v3860
          %v3862 = vadd.f32 %v3861, 1.1283791
          %v3863 = vmul.f32 %v1486, %v3862
          %v3864 = vmul.f32 %v3852, 3.8918573e-05
          %v3865 = vadd.f32 %v3864, 0.001143296
          %v3866 = vmul.f32 %v3852, %v3865
          %v3867 = vadd.f32 %v3866, 0.014752088
          %v3868 = vmul.f32 %v3852, %v3867
          %v3869 = vadd.f32 %v3868, 0.112945676
          %v3870 = vmul.f32 %v3852, %v3869
          %v3871 = vadd.f32 %v3870, 0.4994258
          %v3872 = vmul.f32 %v3852, %v3871
          %v3873 = vadd.f32 %v3872, 1.0
          %v3874 = vrcp.pop %v3873
          %v3875 = vmul.f32 %v3873, %v3874
          %v3876 = vsub.f32 1.0, %v3875
          %v3877 = vmul.f32 %v3874, %v3876
          %v3878 = vadd.f32 %v3874, %v3877
          %vm3879 = vweird.f32 %v3873
          %vm3880 = vweird.f32 %v3874
          %vm3881 = vmor %vm3879, %vm3880
          %v3882 = vsel %vm3881, %v3874, %v3878
          %v3883 = vand.u32 2147483647, %v3873
          %vm3884 = vcmp.eq.f32.partialorder %v3883, 8.507059e+37
          %v3885 = vand.u32 %v3873, 2147483648
          %v3886 = vor.u32 1.1754944e-38, %v3885
          %v3887 = vsel %vm3884, %v3886, %v3882
          %v3888 = vmul.f32 %v3863, %v3887
          %v3889 = vmin.f32 %v3888, 1.0
          %v3890 = vmax.f32 %v3889, -1.0
          %v3891 = vmul.f32 %v1487, %v1487
          %v3892 = vmin.f32 16.0, %v3891
          %v3893 = vmul.f32 %v3892, 2.1237322e-06
          %v3894 = vadd.f32 %v3893, 0.00028619796
          %v3895 = vmul.f32 %v3892, %v3894
          %v3896 = vadd.f32 %v3895, 0.0036580483
          %v3897 = vmul.f32 %v3892, %v3896
          %v3898 = vadd.f32 %v3897, 0.05243302
          %v3899 = vmul.f32 %v3892, %v3898
          %v3900 = vadd.f32 %v3899, 0.18741608
          %v3901 = vmul.f32 %v3892, %v3900
          %v3902 = vadd.f32 %v3901, 1.1283791
          %v3903 = vmul.f32 %v1487, %v3902
          %v3904 = vmul.f32 %v3892, 3.8918573e-05
          %v3905 = vadd.f32 %v3904, 0.001143296
          %v3906 = vmul.f32 %v3892, %v3905
          %v3907 = vadd.f32 %v3906, 0.014752088
          %v3908 = vmul.f32 %v3892, %v3907
          %v3909 = vadd.f32 %v3908, 0.112945676
          %v3910 = vmul.f32 %v3892, %v3909
          %v3911 = vadd.f32 %v3910, 0.4994258
          %v3912 = vmul.f32 %v3892, %v3911
          %v3913 = vadd.f32 %v3912, 1.0
          %v3914 = vrcp.pop %v3913
          %v3915 = vmul.f32 %v3913, %v3914
          %v3916 = vsub.f32 1.0, %v3915
          %v3917 = vmul.f32 %v3914, %v3916
          %v3918 = vadd.f32 %v3914, %v3917
          %vm3919 = vweird.f32 %v3913
          %vm3920 = vweird.f32 %v3914
          %vm3921 = vmor %vm3919, %vm3920
          %v3922 = vsel %vm3921, %v3914, %v3918
          %v3923 = vand.u32 2147483647, %v3913
          %vm3924 = vcmp.eq.f32.partialorder %v3923, 8.507059e+37
          %v3925 = vand.u32 %v3913, 2147483648
          %v3926 = vor.u32 1.1754944e-38, %v3925
          %v3927 = vsel %vm3924, %v3926, %v3922
          %v3928 = vmul.f32 %v3903, %v3927
          %v3929 = vmin.f32 %v3928, 1.0
          %v3930 = vmax.f32 %v3929, -1.0
          %v3931 = vmul.f32 %v1488, %v1488
          %v3932 = vmin.f32 16.0, %v3931
          %v3933 = vmul.f32 %v3932, 2.1237322e-06
          %v3934 = vadd.f32 %v3933, 0.00028619796
          %v3935 = vmul.f32 %v3932, %v3934
          %v3936 = vadd.f32 %v3935, 0.0036580483
          %v3937 = vmul.f32 %v3932, %v3936
          %v3938 = vadd.f32 %v3937, 0.05243302
          %v3939 = vmul.f32 %v3932, %v3938
          %v3940 = vadd.f32 %v3939, 0.18741608
          %v3941 = vmul.f32 %v3932, %v3940
          %v3942 = vadd.f32 %v3941, 1.1283791
          %v3943 = vmul.f32 %v1488, %v3942
          %v3944 = vmul.f32 %v3932, 3.8918573e-05
          %v3945 = vadd.f32 %v3944, 0.001143296
          %v3946 = vmul.f32 %v3932, %v3945
          %v3947 = vadd.f32 %v3946, 0.014752088
          %v3948 = vmul.f32 %v3932, %v3947
          %v3949 = vadd.f32 %v3948, 0.112945676
          %v3950 = vmul.f32 %v3932, %v3949
          %v3951 = vadd.f32 %v3950, 0.4994258
          %v3952 = vmul.f32 %v3932, %v3951
          %v3953 = vadd.f32 %v3952, 1.0
          %v3954 = vrcp.pop %v3953
          %v3955 = vmul.f32 %v3953, %v3954
          %v3956 = vsub.f32 1.0, %v3955
          %v3957 = vmul.f32 %v3954, %v3956
          %v3958 = vadd.f32 %v3954, %v3957
          %vm3959 = vweird.f32 %v3953
          %vm3960 = vweird.f32 %v3954
          %vm3961 = vmor %vm3959, %vm3960
          %v3962 = vsel %vm3961, %v3954, %v3958
          %v3963 = vand.u32 2147483647, %v3953
          %vm3964 = vcmp.eq.f32.partialorder %v3963, 8.507059e+37
          %v3965 = vand.u32 %v3953, 2147483648
          %v3966 = vor.u32 1.1754944e-38, %v3965
          %v3967 = vsel %vm3964, %v3966, %v3962
          %v3968 = vmul.f32 %v3943, %v3967
          %v3969 = vmin.f32 %v3968, 1.0
          %v3970 = vmax.f32 %v3969, -1.0
          %v3971 = vmul.f32 %v1489, %v1489
          %v3972 = vmin.f32 16.0, %v3971
          %v3973 = vmul.f32 %v3972, 2.1237322e-06
          %v3974 = vadd.f32 %v3973, 0.00028619796
          %v3975 = vmul.f32 %v3972, %v3974
          %v3976 = vadd.f32 %v3975, 0.0036580483
          %v3977 = vmul.f32 %v3972, %v3976
          %v3978 = vadd.f32 %v3977, 0.05243302
          %v3979 = vmul.f32 %v3972, %v3978
          %v3980 = vadd.f32 %v3979, 0.18741608
          %v3981 = vmul.f32 %v3972, %v3980
          %v3982 = vadd.f32 %v3981, 1.1283791
          %v3983 = vmul.f32 %v1489, %v3982
          %v3984 = vmul.f32 %v3972, 3.8918573e-05
          %v3985 = vadd.f32 %v3984, 0.001143296
          %v3986 = vmul.f32 %v3972, %v3985
          %v3987 = vadd.f32 %v3986, 0.014752088
          %v3988 = vmul.f32 %v3972, %v3987
          %v3989 = vadd.f32 %v3988, 0.112945676
          %v3990 = vmul.f32 %v3972, %v3989
          %v3991 = vadd.f32 %v3990, 0.4994258
          %v3992 = vmul.f32 %v3972, %v3991
          %v3993 = vadd.f32 %v3992, 1.0
          %v3994 = vrcp.pop %v3993
          %v3995 = vmul.f32 %v3993, %v3994
          %v3996 = vsub.f32 1.0, %v3995
          %v3997 = vmul.f32 %v3994, %v3996
          %v3998 = vadd.f32 %v3994, %v3997
          %vm3999 = vweird.f32 %v3993
          %vm4000 = vweird.f32 %v3994
          %vm4001 = vmor %vm3999, %vm4000
          %v4002 = vsel %vm4001, %v3994, %v3998
          %v4003 = vand.u32 2147483647, %v3993
          %vm4004 = vcmp.eq.f32.partialorder %v4003, 8.507059e+37
          %v4005 = vand.u32 %v3993, 2147483648
          %v4006 = vor.u32 1.1754944e-38, %v4005
          %v4007 = vsel %vm4004, %v4006, %v4002
          %v4008 = vmul.f32 %v3983, %v4007
          %v4009 = vmin.f32 %v4008, 1.0
          %v4010 = vmax.f32 %v4009, -1.0
          %v4011 = vmul.f32 %v1490, %v1490
          %v4012 = vmin.f32 16.0, %v4011
          %v4013 = vmul.f32 %v4012, 2.1237322e-06
          %v4014 = vadd.f32 %v4013, 0.00028619796
          %v4015 = vmul.f32 %v4012, %v4014
          %v4016 = vadd.f32 %v4015, 0.0036580483
          %v4017 = vmul.f32 %v4012, %v4016
          %v4018 = vadd.f32 %v4017, 0.05243302
          %v4019 = vmul.f32 %v4012, %v4018
          %v4020 = vadd.f32 %v4019, 0.18741608
          %v4021 = vmul.f32 %v4012, %v4020
          %v4022 = vadd.f32 %v4021, 1.1283791
          %v4023 = vmul.f32 %v1490, %v4022
          %v4024 = vmul.f32 %v4012, 3.8918573e-05
          %v4025 = vadd.f32 %v4024, 0.001143296
          %v4026 = vmul.f32 %v4012, %v4025
          %v4027 = vadd.f32 %v4026, 0.014752088
          %v4028 = vmul.f32 %v4012, %v4027
          %v4029 = vadd.f32 %v4028, 0.112945676
          %v4030 = vmul.f32 %v4012, %v4029
          %v4031 = vadd.f32 %v4030, 0.4994258
          %v4032 = vmul.f32 %v4012, %v4031
          %v4033 = vadd.f32 %v4032, 1.0
          %v4034 = vrcp.pop %v4033
          %v4035 = vmul.f32 %v4033, %v4034
          %v4036 = vsub.f32 1.0, %v4035
          %v4037 = vmul.f32 %v4034, %v4036
          %v4038 = vadd.f32 %v4034, %v4037
          %vm4039 = vweird.f32 %v4033
          %vm4040 = vweird.f32 %v4034
          %vm4041 = vmor %vm4039, %vm4040
          %v4042 = vsel %vm4041, %v4034, %v4038
          %v4043 = vand.u32 2147483647, %v4033
          %vm4044 = vcmp.eq.f32.partialorder %v4043, 8.507059e+37
          %v4045 = vand.u32 %v4033, 2147483648
          %v4046 = vor.u32 1.1754944e-38, %v4045
          %v4047 = vsel %vm4044, %v4046, %v4042
          %v4048 = vmul.f32 %v4023, %v4047
          %v4049 = vmin.f32 %v4048, 1.0
          %v4050 = vmax.f32 %v4049, -1.0
          %v4051 = vadd.f32 %v1530, 1.0
          %v4052 = vadd.f32 %v1570, 1.0
          %v4053 = vadd.f32 %v1610, 1.0
          %v4054 = vadd.f32 %v1650, 1.0
          %v4055 = vadd.f32 %v1690, 1.0
          %v4056 = vadd.f32 %v1730, 1.0
          %v4057 = vadd.f32 %v1770, 1.0
          %v4058 = vadd.f32 %v1810, 1.0
          %v4059 = vadd.f32 %v1850, 1.0
          %v4060 = vadd.f32 %v1890, 1.0
          %v4061 = vadd.f32 %v1930, 1.0
          %v4062 = vadd.f32 %v1970, 1.0
          %v4063 = vadd.f32 %v2010, 1.0
          %v4064 = vadd.f32 %v2050, 1.0
          %v4065 = vadd.f32 %v2090, 1.0
          %v4066 = vadd.f32 %v2130, 1.0
          %v4067 = vadd.f32 %v2170, 1.0
          %v4068 = vadd.f32 %v2210, 1.0
          %v4069 = vadd.f32 %v2250, 1.0
          %v4070 = vadd.f32 %v2290, 1.0
          %v4071 = vadd.f32 %v2330, 1.0
          %v4072 = vadd.f32 %v2370, 1.0
          %v4073 = vadd.f32 %v2410, 1.0
          %v4074 = vadd.f32 %v2450, 1.0
          %v4075 = vadd.f32 %v2490, 1.0
          %v4076 = vadd.f32 %v2530, 1.0
          %v4077 = vadd.f32 %v2570, 1.0
          %v4078 = vadd.f32 %v2610, 1.0
          %v4079 = vadd.f32 %v2650, 1.0
          %v4080 = vadd.f32 %v2690, 1.0
          %v4081 = vadd.f32 %v2730, 1.0
          %v4082 = vadd.f32 %v2770, 1.0
          %v4083 = vadd.f32 %v2810, 1.0
          %v4084 = vadd.f32 %v2850, 1.0
          %v4085 = vadd.f32 %v2890, 1.0
          %v4086 = vadd.f32 %v2930, 1.0
          %v4087 = vadd.f32 %v2970, 1.0
          %v4088 = vadd.f32 %v3010, 1.0
          %v4089 = vadd.f32 %v3050, 1.0
          %v4090 = vadd.f32 %v3090, 1.0
          %v4091 = vadd.f32 %v3130, 1.0
          %v4092 = vadd.f32 %v3170, 1.0
          %v4093 = vadd.f32 %v3210, 1.0
          %v4094 = vadd.f32 %v3250, 1.0
          %v4095 = vadd.f32 %v3290, 1.0
          %v4096 = vadd.f32 %v3330, 1.0
          %v4097 = vadd.f32 %v3370, 1.0
          %v4098 = vadd.f32 %v3410, 1.0
          %v4099 = vadd.f32 %v3450, 1.0
          %v4100 = vadd.f32 %v3490, 1.0
          %v4101 = vadd.f32 %v3530, 1.0
          %v4102 = vadd.f32 %v3570, 1.0
          %v4103 = vadd.f32 %v3610, 1.0
          %v4104 = vadd.f32 %v3650, 1.0
          %v4105 = vadd.f32 %v3690, 1.0
          %v4106 = vadd.f32 %v3730, 1.0
          %v4107 = vadd.f32 %v3770, 1.0
          %v4108 = vadd.f32 %v3810, 1.0
          %v4109 = vadd.f32 %v3850, 1.0
          %v4110 = vadd.f32 %v3890, 1.0
          %v4111 = vadd.f32 %v3930, 1.0
          %v4112 = vadd.f32 %v3970, 1.0
          %v4113 = vadd.f32 %v4010, 1.0
          %v4114 = vadd.f32 %v4050, 1.0
          %v4115 = vmul.f32 %v1363, %v4051
          %v4116 = vmul.f32 %v1364, %v4052
          %v4117 = vmul.f32 %v1365, %v4053
          %v4118 = vmul.f32 %v1366, %v4054
          %v4119 = vmul.f32 %v1367, %v4055
          %v4120 = vmul.f32 %v1368, %v4056
          %v4121 = vmul.f32 %v1369, %v4057
          %v4122 = vmul.f32 %v1370, %v4058
          %v4123 = vmul.f32 %v1371, %v4059
          %v4124 = vmul.f32 %v1372, %v4060
          %v4125 = vmul.f32 %v1373, %v4061
          %v4126 = vmul.f32 %v1374, %v4062
          %v4127 = vmul.f32 %v1375, %v4063
          %v4128 = vmul.f32 %v1376, %v4064
          %v4129 = vmul.f32 %v1377, %v4065
          %v4130 = vmul.f32 %v1378, %v4066
          %v4131 = vmul.f32 %v1379, %v4067
          %v4132 = vmul.f32 %v1380, %v4068
          %v4133 = vmul.f32 %v1381, %v4069
          %v4134 = vmul.f32 %v1382, %v4070
          %v4135 = vmul.f32 %v1383, %v4071
          %v4136 = vmul.f32 %v1384, %v4072
          %v4137 = vmul.f32 %v1385, %v4073
          %v4138 = vmul.f32 %v1386, %v4074
          %v4139 = vmul.f32 %v1387, %v4075
          %v4140 = vmul.f32 %v1388, %v4076
          %v4141 = vmul.f32 %v1389, %v4077
          %v4142 = vmul.f32 %v1390, %v4078
          %v4143 = vmul.f32 %v1391, %v4079
          %v4144 = vmul.f32 %v1392, %v4080
          %v4145 = vmul.f32 %v1393, %v4081
          %v4146 = vmul.f32 %v1394, %v4082
          %v4147 = vmul.f32 %v1395, %v4083
          %v4148 = vmul.f32 %v1396, %v4084
          %v4149 = vmul.f32 %v1397, %v4085
          %v4150 = vmul.f32 %v1398, %v4086
          %v4151 = vmul.f32 %v1399, %v4087
          %v4152 = vmul.f32 %v1400, %v4088
          %v4153 = vmul.f32 %v1401, %v4089
          %v4154 = vmul.f32 %v1402, %v4090
          %v4155 = vmul.f32 %v1403, %v4091
          %v4156 = vmul.f32 %v1404, %v4092
          %v4157 = vmul.f32 %v1405, %v4093
          %v4158 = vmul.f32 %v1406, %v4094
          %v4159 = vmul.f32 %v1407, %v4095
          %v4160 = vmul.f32 %v1408, %v4096
          %v4161 = vmul.f32 %v1409, %v4097
          %v4162 = vmul.f32 %v1410, %v4098
          %v4163 = vmul.f32 %v1411, %v4099
          %v4164 = vmul.f32 %v1412, %v4100
          %v4165 = vmul.f32 %v1413, %v4101
          %v4166 = vmul.f32 %v1414, %v4102
          %v4167 = vmul.f32 %v1415, %v4103
          %v4168 = vmul.f32 %v1416, %v4104
          %v4169 = vmul.f32 %v1417, %v4105
          %v4170 = vmul.f32 %v1418, %v4106
          %v4171 = vmul.f32 %v1419, %v4107
          %v4172 = vmul.f32 %v1420, %v4108
          %v4173 = vmul.f32 %v1421, %v4109
          %v4174 = vmul.f32 %v1422, %v4110
          %v4175 = vmul.f32 %v1423, %v4111
          %v4176 = vmul.f32 %v1424, %v4112
          %v4177 = vmul.f32 %v1425, %v4113
          %v4178 = vmul.f32 %v1426, %v4114
          %4179 = vst [vmem:[%s282] sm:$0xff] %v4115
          %4180 = vst [vmem:[%s282 + $0x8] sm:$0xff] %v4116
          %4181 = vst [vmem:[%s282 + $0x10] sm:$0xff] %v4117
          %4182 = vst [vmem:[%s282 + $0x18] sm:$0xff] %v4118
          %4183 = vst [vmem:[%s282 + $0x20] sm:$0xff] %v4119
          %4184 = vst [vmem:[%s282 + $0x28] sm:$0xff] %v4120
          %4185 = vst [vmem:[%s282 + $0x30] sm:$0xff] %v4121
          %4186 = vst [vmem:[%s282 + $0x38] sm:$0xff] %v4122
          %4187 = vst [vmem:[%s282 + $0x40] sm:$0xff] %v4123
          %4188 = vst [vmem:[%s282 + $0x48] sm:$0xff] %v4124
          %4189 = vst [vmem:[%s282 + $0x50] sm:$0xff] %v4125
          %4190 = vst [vmem:[%s282 + $0x58] sm:$0xff] %v4126
          %4191 = vst [vmem:[%s282 + $0x60] sm:$0xff] %v4127
          %4192 = vst [vmem:[%s282 + $0x68] sm:$0xff] %v4128
          %4193 = vst [vmem:[%s282 + $0x70] sm:$0xff] %v4129
          %4194 = vst [vmem:[%s282 + $0x78] sm:$0xff] %v4130
          %4195 = vst [vmem:[%s282 + $0x80] sm:$0xff] %v4131
          %4196 = vst [vmem:[%s282 + $0x88] sm:$0xff] %v4132
          %4197 = vst [vmem:[%s282 + $0x90] sm:$0xff] %v4133
          %4198 = vst [vmem:[%s282 + $0x98] sm:$0xff] %v4134
          %4199 = vst [vmem:[%s282 + $0xa0] sm:$0xff] %v4135
          %4200 = vst [vmem:[%s282 + $0xa8] sm:$0xff] %v4136
          %4201 = vst [vmem:[%s282 + $0xb0] sm:$0xff] %v4137
          %4202 = vst [vmem:[%s282 + $0xb8] sm:$0xff] %v4138
          %4203 = vst [vmem:[%s282 + $0xc0] sm:$0xff] %v4139
          %4204 = vst [vmem:[%s282 + $0xc8] sm:$0xff] %v4140
          %4205 = vst [vmem:[%s282 + $0xd0] sm:$0xff] %v4141
          %4206 = vst [vmem:[%s282 + $0xd8] sm:$0xff] %v4142
          %4207 = vst [vmem:[%s282 + $0xe0] sm:$0xff] %v4143
          %4208 = vst [vmem:[%s282 + $0xe8] sm:$0xff] %v4144
          %4209 = vst [vmem:[%s282 + $0xf0] sm:$0xff] %v4145
          %4210 = vst [vmem:[%s282 + $0xf8] sm:$0xff] %v4146
          %4211 = vst [vmem:[%s282 + $0x100] sm:$0xff] %v4147
          %4212 = vst [vmem:[%s282 + $0x108] sm:$0xff] %v4148
          %4213 = vst [vmem:[%s282 + $0x110] sm:$0xff] %v4149
          %4214 = vst [vmem:[%s282 + $0x118] sm:$0xff] %v4150
          %4215 = vst [vmem:[%s282 + $0x120] sm:$0xff] %v4151
          %4216 = vst [vmem:[%s282 + $0x128] sm:$0xff] %v4152
          %4217 = vst [vmem:[%s282 + $0x130] sm:$0xff] %v4153
          %4218 = vst [vmem:[%s282 + $0x138] sm:$0xff] %v4154
          %4219 = vst [vmem:[%s282 + $0x140] sm:$0xff] %v4155
          %4220 = vst [vmem:[%s282 + $0x148] sm:$0xff] %v4156
          %4221 = vst [vmem:[%s282 + $0x150] sm:$0xff] %v4157
          %4222 = vst [vmem:[%s282 + $0x158] sm:$0xff] %v4158
          %4223 = vst [vmem:[%s282 + $0x160] sm:$0xff] %v4159
          %4224 = vst [vmem:[%s282 + $0x168] sm:$0xff] %v4160
          %4225 = vst [vmem:[%s282 + $0x170] sm:$0xff] %v4161
          %4226 = vst [vmem:[%s282 + $0x178] sm:$0xff] %v4162
          %4227 = vst [vmem:[%s282 + $0x180] sm:$0xff] %v4163
          %4228 = vst [vmem:[%s282 + $0x188] sm:$0xff] %v4164
          %4229 = vst [vmem:[%s282 + $0x190] sm:$0xff] %v4165
          %4230 = vst [vmem:[%s282 + $0x198] sm:$0xff] %v4166
          %4231 = vst [vmem:[%s282 + $0x1a0] sm:$0xff] %v4167
          %4232 = vst [vmem:[%s282 + $0x1a8] sm:$0xff] %v4168
          %4233 = vst [vmem:[%s282 + $0x1b0] sm:$0xff] %v4169
          %4234 = vst [vmem:[%s282 + $0x1b8] sm:$0xff] %v4170
          %4235 = vst [vmem:[%s282 + $0x1c0] sm:$0xff] %v4171
          %4236 = vst [vmem:[%s282 + $0x1c8] sm:$0xff] %v4172
          %4237 = vst [vmem:[%s282 + $0x1d0] sm:$0xff] %v4173
          %4238 = vst [vmem:[%s282 + $0x1d8] sm:$0xff] %v4174
          %4239 = vst [vmem:[%s282 + $0x1e0] sm:$0xff] %v4175
          %4240 = vst [vmem:[%s282 + $0x1e8] sm:$0xff] %v4176
          %4241 = vst [vmem:[%s282 + $0x1f0] sm:$0xff] %v4177
          %4242 = vst [vmem:[%s282 + $0x1f8] sm:$0xff] %v4178
        $region52: #{tpu_custom_call.1} parent=31 // pred_fallthru
          _
        %s4243 = sand.u32 %s132, 1
        %s4244 = scalar_lea.sflag [#allocation5], %s4243
        %s4245 = sand.u32 %s132, 1
        %s4246 = smul.addr %s4245, 512
        %s4247 = scalar_lea.vmem [#allocation9], %s4246
        // Predicated region
        $region53: #{tpu_custom_call.1} parent=31 // pred_check
          %p4248 = pneg %p142
        $region54: #{tpu_custom_call.1} parent=31 // pred_check_branch
          %4250 = sbr.rel (%p4248) target = $region56
        $region55: #{tpu_custom_call.1} parent=31 // pred_region
          %s4251 = smul.u32 32, %s26
          %s4252 = smul.u32 2, %s27
          %4254 = vsyncadd %s4244, 0
          %s4255 = smul.addr %s4251, 4
          %s4256 = sadd.s32 %s4252, %s4255
          %s4257 = smul.addr %s4256, 8
          %s4258 = scalar_lea.hbm %s3, %s4257
          %s4259 = sshll.u32 %s4247, 4
          %s4260 = int_to_ptr.vmem [resolvable:$true] %s4259
          %s4261 = sshll.u32 %s4258, 4
          %s4262 = int_to_ptr.hbm [resolvable:$true] %s4261
          %4267 = dma.vmem_to_hbm [thread:$0]  %s4260, 8192, %s4262, %s4244, 256, 512, 16
        $region56: #{tpu_custom_call.1} parent=31 // pred_fallthru
          _
      $region32: #{tpu_custom_call.1} parent=5 // pred_fallthru
        _
      %p4268 = scmp.le.s32.totalorder 2, %s16
      // Predicated region
      $region57: #{tpu_custom_call.1} parent=5 // pred_check
        %p4269 = pneg %p4268
      $region58: #{tpu_custom_call.1} parent=5 // pred_check_branch
        %4271 = sbr.rel (%p4269) target = $region60
      $region59: #{tpu_custom_call.1} parent=5 // pred_region
        %s4272 = ssub.s32 %s16, 2
        // Predicated region
        $region61: #{tpu_custom_call.1} parent=59 // pred_check
          %p4273 = pneg %p148
        $region62: #{tpu_custom_call.1} parent=59 // pred_check_branch
          %4275 = sbr.rel (%p4273) target = $region64
        $region63: #{tpu_custom_call.1} parent=59 // pred_region
          %s4276 = sand.u32 %s133, 1
          %s4277 = scalar_lea.sflag [#allocation5], %s4276
          %s4278 = sand.u32 %s133, 1
          %s4279 = smul.addr %s4278, 512
          %s4280 = scalar_lea.vmem [#allocation9], %s4279
          %4282 = dma.done %s4277, 8192
        $region64: #{tpu_custom_call.1} parent=59 // pred_fallthru
          _
      $region60: #{tpu_custom_call.1} parent=5 // pred_fallthru
        _
    $region6: #{tpu_custom_call.1} parent=1 // loop_footer
      %s20 = sadd.s32 1, %s16
    $region7: #{tpu_custom_call.1} parent=1 // loop_footer_branch
      %15 = sbr.rel target = $region3
    $region8: #{tpu_custom_call.1} parent=1 // loop_exit
      _
    %4283 = vsyncpa [#allocation4], 1
    %s4284 = scalar_lea.sflag [#allocation4], 1
    %4285 = vsyncpa %s4284, 1
    %4286 = vsyncpa [#allocation7], 1
    %s4287 = scalar_lea.sflag [#allocation7], 1
    %4288 = vsyncpa %s4287, 1
    %4289 = vsyncpa [#allocation5], 1
    %s4290 = scalar_lea.sflag [#allocation5], 1
    %4291 = vsyncpa %s4290, 1

</llo_original>
